<compile_context>
chip_gen: v6e
topology: v6e:2x2x1
jax: 0.10.0
libtpu: 0.0.40
codegen_flags: <defaults>
</compile_context>

<pallas_src>
import functools

import jax
import jax.numpy as jnp
from jax import lax
from jax.experimental import pallas as pl
from jax.experimental.pallas import tpu as pltpu

EPS = 1e-5  # nn.BatchNorm2d default eps


def _round_up(v, m):
    return (v + m - 1) // m * m


# ----------------------------------------------------------------------------
# Fused Pallas kernel
# ----------------------------------------------------------------------------
def _residual_fused_kernel(x_ref, mask_ref, w1_ref, g1_ref, be1_ref,
                           w2_ref, g2_ref, be2_ref, *rest,
                           wp, padf, mh_pad, inv_m, c_col, use_1x1conv):
    """Fused residual block (per-image halo layout).

    x_ref:    (Cin_p, PADF + Mh_pad + PADF)  channel-major flat input, each
              image carries its own (H+2)x(W+2) zero halo; PADF flat halo keeps
              all 9 shifted tap slices in-bounds.
    mask_ref: (1, Mh_pad) f32 0/1  interior-position mask (true conv outputs).
    w1_ref:   (9, Cout_p, Cin_p)   per-tap conv1 weights.
    w2_ref:   (9, Cout_p, Cout_p)  per-tap conv2 weights.
    g/be:     (Cout_p, 1) f32      BN gamma / beta.
    rest: (w13c (2*Cout_p,Cin_p), b3 (Cout_p,1), out (Cout_p,Mh_pad), ypad scratch)
          or (out, ypad scratch) when use_1x1conv=False (identity shortcut).
    """
    if use_1x1conv:
        w13c_ref, b3_ref, out_ref, ypad_ref = rest
    else:
        w13c_ref = b3_ref = None
        out_ref, ypad_ref = rest

    couts = g1_ref.shape[0]
    mask = mask_ref[...]                                   # (1, Mh_pad)
    deltas = tuple(dy * wp + dx for dy in (-1, 0, 1) for dx in (-1, 0, 1))

    def taps_from(ref):
        # Plain shifted slices -- no per-tap masking (per-image halo is zero).
        return [ref[:, pl.ds(padf + d, mh_pad)] for d in deltas]

    def bn_fold(acc, gamma, beta):
        # Training-mode batch stats over interior positions, shifted single
        # sweep (shift = a genuine interior activation column), folded into a
        # single per-channel scale/shift applied to d = acc - c.
        c = acc[:, c_col:c_col + 1]
        d = acc - c
        dm = d * mask                                       # interior-only terms
        s1 = jnp.sum(dm, axis=-1, keepdims=True)
        s2 = jnp.sum(dm * dm, axis=-1, keepdims=True)
        mean_sh = s1 * inv_m
        var = jnp.maximum(s2 * inv_m - mean_sh * mean_sh, 0.0)
        scale = gamma * lax.rsqrt(var + EPS)
        shift = beta - mean_sh * scale
        return d * scale + shift

    # --- stage 1: Y = relu(bn1(conv1(X))), 1x1 shortcut folded into center tap
    x_taps = taps_from(x_ref)
    acc1 = None
    shortcut = None
    for t, xt in enumerate(x_taps):
        if t == 4 and use_1x1conv:
            r = jnp.dot(w13c_ref[...], xt, preferred_element_type=jnp.float32)
            contrib = r[:couts]
            shortcut = r[couts:] + b3_ref[...]
        else:
            contrib = jnp.dot(w1_ref[t], xt, preferred_element_type=jnp.float32)
        acc1 = contrib if acc1 is None else acc1 + contrib
    if not use_1x1conv:
        shortcut = x_taps[4]                                # identity (Cin_p==Cout_p)

    y = jnp.maximum(bn_fold(acc1, g1_ref[...], be1_ref[...]), 0.0) * mask

    # Stash Y in the VMEM scratch: clear only the two flat halo strips, write
    # the interior exactly once (no full zero-fill of the scratch).
    ypad_ref[:, pl.ds(0, padf)] = jnp.zeros((couts, padf), ypad_ref.dtype)
    ypad_ref[:, pl.ds(padf + mh_pad, padf)] = jnp.zeros((couts, padf), ypad_ref.dtype)
    ypad_ref[:, pl.ds(padf, mh_pad)] = y.astype(ypad_ref.dtype)

    # --- stage 2: bn2(conv2(Y)) ----------------------------------------------
    acc2 = None
    for t, yt in enumerate(taps_from(ypad_ref)):
        contrib = jnp.dot(w2_ref[t], yt, preferred_element_type=jnp.float32)
        acc2 = contrib if acc2 is None else acc2 + contrib
    y2 = bn_fold(acc2, g2_ref[...], be2_ref[...])

    # --- residual add + relu ---------------------------------------------------
    out_ref[...] = jnp.maximum(y2 + shortcut, 0.0).astype(out_ref.dtype)


# ----------------------------------------------------------------------------
# Wrapper (NCHW in / NCHW out)
# ----------------------------------------------------------------------------
def residual_forward_nchw(x_nchw, params, *, use_1x1conv=True,
                          compute_dtype=jnp.bfloat16):
    """Forward pass of the Residual block. Input/output in NCHW (PyTorch layout)."""
    w1, b1, g1, be1, w2, b2, g2, be2, w3, b3 = params
    del b1, b2  # conv bias before training-mode BN is cancelled by the mean subtraction
    N, Cin, H, W = x_nchw.shape
    Cout = w1.shape[-1]
    if not use_1x1conv and Cin != Cout:
        raise ValueError("identity shortcut requires input_channels == num_channels")

    Hp, Wp = H + 2, W + 2
    Sp = Hp * Wp
    Mh = N * Sp                       # flat length incl. per-image halos
    Mh_pad = _round_up(Mh, 128)       # lane-dense output width
    M = N * H * W                     # true interior element count (BN stats)
    PADF = _round_up(Wp + 1, 128)     # flat halo so all tap slices stay in-bounds
    XW = PADF + Mh_pad + PADF
    Cin_p = _round_up(Cin, 8)
    Cout_p = _round_up(Cout, 8)

    # Activations: NCHW -> (C, N, H+2, W+2) with per-image zero halo -> flat.
    x_cm = jnp.transpose(x_nchw, (1, 0, 2, 3)).astype(jnp.float32)
    x_hal = jnp.pad(x_cm, ((0, Cin_p - Cin), (0, 0), (1, 1), (1, 1)))
    x_flat = x_hal.reshape(Cin_p, Mh)
    x_buf = jnp.pad(x_flat, ((0, 0), (PADF, (Mh_pad - Mh) + PADF))).astype(compute_dtype)

    # Interior mask over the padded flat domain (1 = genuine conv output pos).
    idx = jnp.arange(Mh_pad, dtype=jnp.int32)
    rem = idx % Sp
    yy = rem // Wp
    xx = rem % Wp
    interior = (idx < Mh) & (yy >= 1) & (yy <= H) & (xx >= 1) & (xx <= W)
    mask = interior.astype(jnp.float32).reshape(1, Mh_pad)

    def pack_taps(w_hwio, cin, cin_p):
        # (3,3,cin,Cout) -> (9, Cout_p, cin_p), tap order = (dy major, dx minor).
        t = jnp.transpose(w_hwio.reshape(9, cin, Cout), (0, 2, 1))
        return jnp.zeros((9, Cout_p, cin_p), jnp.float32).at[:, :Cout, :cin].set(t)

    def pack_vec(v):
        return jnp.zeros((Cout_p, 1), jnp.float32).at[:Cout, 0].set(v)

    w1_taps = pack_taps(w1, Cin, Cin_p)
    w2_taps = pack_taps(w2, Cout, Cout_p)

    args = [x_buf, mask,
            w1_taps.astype(compute_dtype), pack_vec(g1), pack_vec(be1),
            w2_taps.astype(compute_dtype), pack_vec(g2), pack_vec(be2)]
    if use_1x1conv:
        w3p = jnp.zeros((Cout_p, Cin_p), jnp.float32).at[:Cout, :Cin].set(w3.T)
        w13c = jnp.concatenate([w1_taps[4], w3p], axis=0)        # (2*Cout_p, Cin_p)
        args += [w13c.astype(compute_dtype), pack_vec(b3)]

    isz = 2 if compute_dtype == jnp.bfloat16 else 4
    footprint = (Cin_p * XW * isz + Cout_p * XW * isz            # x buf + ypad scratch
                 + Cout_p * Mh_pad * 4                           # output
                 + 8 * Cout_p * Mh_pad * 4                       # f32 temporaries
                 + Mh_pad * 4)                                   # mask
    vmem_limit = int(min(100 * 1024 * 1024, max(32 * 1024 * 1024, 4 * footprint)))

    kernel = functools.partial(
        _residual_fused_kernel, wp=Wp, padf=PADF, mh_pad=Mh_pad,
        inv_m=1.0 / M, c_col=Wp + 1, use_1x1conv=use_1x1conv)

    out_flat = pl.pallas_call(
        kernel,
        out_shape=jax.ShapeDtypeStruct((Cout_p, Mh_pad), jnp.float32),
        in_specs=[pl.BlockSpec(memory_space=pltpu.MemorySpace.VMEM)] * len(args),
        out_specs=pl.BlockSpec(memory_space=pltpu.MemorySpace.VMEM),
        scratch_shapes=[pltpu.VMEM((Cout_p, XW), compute_dtype)],
        compiler_params=pltpu.CompilerParams(vmem_limit_bytes=vmem_limit),
    )(*args)

    out = out_flat[:Cout, :Mh].reshape(Cout, N, Hp, Wp)[:, :, 1:H + 1, 1:W + 1]
    return jnp.transpose(out, (1, 0, 2, 3))                      # -> NCHW


# ----------------------------------------------------------------------------
# Pure-JAX reference (validation only)
# ----------------------------------------------------------------------------
def _conv_ref(x_nhwc, w_hwio, b):
    y = lax.conv_general_dilated(
        x_nhwc, w_hwio, window_strides=(1, 1), padding="SAME",
        dimension_numbers=("NHWC", "HWIO", "NHWC"),
        precision=lax.Precision.HIGHEST)
    return y + b


def _bn_ref(y, g, beta):
    mean = jnp.mean(y, axis=(0, 1, 2))
    var = jnp.mean((y - mean) ** 2, axis=(0, 1, 2))
    return (y - mean) * lax.rsqrt(var + EPS) * g + beta


def residual_reference_nchw(x_nchw, params, *, use_1x1conv=True):
    w1, b1, g1, be1, w2, b2, g2, be2, w3, b3 = params
    x = jnp.transpose(x_nchw, (0, 2, 3, 1))
    y = jax.nn.relu(_bn_ref(_conv_ref(x, w1, b1), g1, be1))
    y = _bn_ref(_conv_ref(y, w2, b2), g2, be2)
    sc = (jnp.einsum("nhwc,cd->nhwd", x, w3, precision=lax.Precision.HIGHEST) + b3
          if use_1x1conv else x)
    out = jax.nn.relu(y + sc)
    return jnp.transpose(out, (0, 3, 1, 2))


# ----------------------------------------------------------------------------
if __name__ == "__main__":
    key = jax.random.PRNGKey(0)
    keys = jax.random.split(key, 12)

    # -- config 1: projection shortcut (use_1x1conv=True), Cin != Cout --------
    N, Cin, H, W = 2, 4, 16, 16
    Cout = 8
    w1 = 0.1 * jax.random.normal(keys[0], (3, 3, Cin, Cout), jnp.float32)
    b1 = 0.1 * jax.random.normal(keys[1], (Cout,), jnp.float32)
    g1 = 1.0 + 0.1 * jax.random.normal(keys[2], (Cout,), jnp.float32)
    be1 = 0.1 * jax.random.normal(keys[3], (Cout,), jnp.float32)
    w2 = 0.1 * jax.random.normal(keys[4], (3, 3, Cout, Cout), jnp.float32)
    b2 = 0.1 * jax.random.normal(keys[5], (Cout,), jnp.float32)
    g2 = 1.0 + 0.1 * jax.random.normal(keys[6], (Cout,), jnp.float32)
    be2 = 0.1 * jax.random.normal(keys[7], (Cout,), jnp.float32)
    w3 = 0.1 * jax.random.normal(keys[8], (Cin, Cout), jnp.float32)   # 1x1 conv
    b3 = 0.1 * jax.random.normal(keys[9], (Cout,), jnp.float32)
    params = (w1, b1, g1, be1, w2, b2, g2, be2, w3, b3)
    x = jax.random.normal(keys[10], (N, Cin, H, W), jnp.float32)      # NCHW input

    ref = residual_reference_nchw(x, params, use_1x1conv=True)

    # f32 MXU path (tight check)
    out_f32 = jax.block_until_ready(
        residual_forward_nchw(x, params, use_1x1conv=True, compute_dtype=jnp.float32))
    assert out_f32.shape == (N, Cout, H, W), out_f32.shape
    err = float(jnp.max(jnp.abs(out_f32 - ref)))
    assert jnp.allclose(out_f32, ref, rtol=1e-2, atol=1e-2), err

    # bf16 MXU path (performance default; BN batch stats absorb the loss)
    out_bf16 = jax.block_until_ready(
        residual_forward_nchw(x, params, use_1x1conv=True, compute_dtype=jnp.bfloat16))
    err_bf = float(jnp.max(jnp.abs(out_bf16 - ref)))
    assert jnp.allclose(out_bf16, ref, rtol=5e-2, atol=5e-2), err_bf

    # -- config 2: identity shortcut (use_1x1conv=False, Cin == Cout) ---------
    C2 = 8
    kk = jax.random.split(keys[11], 10)
    w1b = 0.1 * jax.random.normal(kk[0], (3, 3, C2, C2), jnp.float32)
    b1b = 0.1 * jax.random.normal(kk[1], (C2,), jnp.float32)
    g1b = 1.0 + 0.1 * jax.random.normal(kk[2], (C2,), jnp.float32)
    be1b = 0.1 * jax.random.normal(kk[3], (C2,), jnp.float32)
    w2b = 0.1 * jax.random.normal(kk[4], (3, 3, C2, C2), jnp.float32)
    b2b = 0.1 * jax.random.normal(kk[5], (C2,), jnp.float32)
    g2b = 1.0 + 0.1 * jax.random.normal(kk[6], (C2,), jnp.float32)
    be2b = 0.1 * jax.random.normal(kk[7], (C2,), jnp.float32)
    params2 = (w1b, b1b, g1b, be1b, w2b, b2b, g2b, be2b,
               jnp.zeros((C2, C2), jnp.float32), jnp.zeros((C2,), jnp.float32))
    x2 = jax.random.normal(kk[8], (N, C2, H, W), jnp.float32)

    ref2 = residual_reference_nchw(x2, params2, use_1x1conv=False)

    out2_f32 = jax.block_until_ready(
        residual_forward_nchw(x2, params2, use_1x1conv=False, compute_dtype=jnp.float32))
    assert out2_f32.shape == (N, C2, H, W), out2_f32.shape
    err2 = float(jnp.max(jnp.abs(out2_f32 - ref2)))
    assert jnp.allclose(out2_f32, ref2, rtol=1e-2, atol=1e-2), err2

    out2_bf16 = jax.block_until_ready(
        residual_forward_nchw(x2, params2, use_1x1conv=False, compute_dtype=jnp.bfloat16))
    err2_bf = float(jnp.max(jnp.abs(out2_bf16 - ref2)))
    assert jnp.allclose(out2_bf16, ref2, rtol=5e-2, atol=5e-2), err2_bf

    print("KERNEL_OK")
</pallas_src>

<mosaic_0001>
module attributes {stable_mosaic.version = 11 : i64} {
  func.func @_residual_fused_kernel(%arg0: memref<8x1024xf32, #tpu.memory_space<vmem>>, %arg1: memref<1x768xf32, #tpu.memory_space<vmem>>, %arg2: memref<9x8x8xf32, #tpu.memory_space<vmem>>, %arg3: memref<8x1xf32, #tpu.memory_space<vmem>>, %arg4: memref<8x1xf32, #tpu.memory_space<vmem>>, %arg5: memref<9x8x8xf32, #tpu.memory_space<vmem>>, %arg6: memref<8x1xf32, #tpu.memory_space<vmem>>, %arg7: memref<8x1xf32, #tpu.memory_space<vmem>>, %arg8: memref<16x8xf32, #tpu.memory_space<vmem>>, %arg9: memref<8x1xf32, #tpu.memory_space<vmem>>, %arg10: memref<8x768xf32, #tpu.memory_space<vmem>>, %arg11: memref<8x1024xf32, #tpu.memory_space<vmem>>) attributes {dimension_semantics = [], scalar_prefetch = 0 : i64, scratch_operands = 1 : i64, tpu.core_type = #tpu.core_type<tc>} {
    %c0 = arith.constant 0 : index
    %c0_0 = arith.constant 0 : index
    %0 = vector.load %arg1[%c0, %c0_0] : memref<1x768xf32, #tpu.memory_space<vmem>>, vector<1x768xf32>
    %c0_1 = arith.constant 0 : index
    %c109 = arith.constant 109 : index
    %1 = vector.load %arg0[%c0_1, %c109] : memref<8x1024xf32, #tpu.memory_space<vmem>>, vector<8x768xf32>
    %c0_2 = arith.constant 0 : index
    %c110 = arith.constant 110 : index
    %2 = vector.load %arg0[%c0_2, %c110] : memref<8x1024xf32, #tpu.memory_space<vmem>>, vector<8x768xf32>
    %c0_3 = arith.constant 0 : index
    %c111 = arith.constant 111 : index
    %3 = vector.load %arg0[%c0_3, %c111] : memref<8x1024xf32, #tpu.memory_space<vmem>>, vector<8x768xf32>
    %c0_4 = arith.constant 0 : index
    %c127 = arith.constant 127 : index
    %4 = vector.load %arg0[%c0_4, %c127] : memref<8x1024xf32, #tpu.memory_space<vmem>>, vector<8x768xf32>
    %c0_5 = arith.constant 0 : index
    %c128 = arith.constant 128 : index
    %5 = vector.load %arg0[%c0_5, %c128] : memref<8x1024xf32, #tpu.memory_space<vmem>>, vector<8x768xf32>
    %c0_6 = arith.constant 0 : index
    %c129 = arith.constant 129 : index
    %6 = vector.load %arg0[%c0_6, %c129] : memref<8x1024xf32, #tpu.memory_space<vmem>>, vector<8x768xf32>
    %c0_7 = arith.constant 0 : index
    %c145 = arith.constant 145 : index
    %7 = vector.load %arg0[%c0_7, %c145] : memref<8x1024xf32, #tpu.memory_space<vmem>>, vector<8x768xf32>
    %c0_8 = arith.constant 0 : index
    %c146 = arith.constant 146 : index
    %8 = vector.load %arg0[%c0_8, %c146] : memref<8x1024xf32, #tpu.memory_space<vmem>>, vector<8x768xf32>
    %c0_9 = arith.constant 0 : index
    %c147 = arith.constant 147 : index
    %9 = vector.load %arg0[%c0_9, %c147] : memref<8x1024xf32, #tpu.memory_space<vmem>>, vector<8x768xf32>
    %c0_10 = arith.constant 0 : index
    %c0_11 = arith.constant 0 : index
    %c0_12 = arith.constant 0 : index
    %10 = vector.load %arg2[%c0_10, %c0_11, %c0_12] : memref<9x8x8xf32, #tpu.memory_space<vmem>>, vector<1x8x8xf32>
    %11 = vector.shape_cast %10 : vector<1x8x8xf32> to vector<8x8xf32>
    %cst = arith.constant dense<0.000000e+00> : vector<8x768xf32>
    %12 = tpu.matmul %11, %1, %cst {dimension_numbers = #tpu.dot_dimension_numbers<[1], [0], [0], [1], [0, 0, 1, 1], [], []>} : vector<8x8xf32>, vector<8x768xf32>, vector<8x768xf32> -> vector<8x768xf32>
    %c1 = arith.constant 1 : index
    %c0_13 = arith.constant 0 : index
    %c0_14 = arith.constant 0 : index
    %13 = vector.load %arg2[%c1, %c0_13, %c0_14] : memref<9x8x8xf32, #tpu.memory_space<vmem>>, vector<1x8x8xf32>
    %14 = vector.shape_cast %13 : vector<1x8x8xf32> to vector<8x8xf32>
    %cst_15 = arith.constant dense<0.000000e+00> : vector<8x768xf32>
    %15 = tpu.matmul %14, %2, %cst_15 {dimension_numbers = #tpu.dot_dimension_numbers<[1], [0], [0], [1], [0, 0, 1, 1], [], []>} : vector<8x8xf32>, vector<8x768xf32>, vector<8x768xf32> -> vector<8x768xf32>
    %16 = arith.addf %12, %15 : vector<8x768xf32>
    %c2 = arith.constant 2 : index
    %c0_16 = arith.constant 0 : index
    %c0_17 = arith.constant 0 : index
    %17 = vector.load %arg2[%c2, %c0_16, %c0_17] : memref<9x8x8xf32, #tpu.memory_space<vmem>>, vector<1x8x8xf32>
    %18 = vector.shape_cast %17 : vector<1x8x8xf32> to vector<8x8xf32>
    %cst_18 = arith.constant dense<0.000000e+00> : vector<8x768xf32>
    %19 = tpu.matmul %18, %3, %cst_18 {dimension_numbers = #tpu.dot_dimension_numbers<[1], [0], [0], [1], [0, 0, 1, 1], [], []>} : vector<8x8xf32>, vector<8x768xf32>, vector<8x768xf32> -> vector<8x768xf32>
    %20 = arith.addf %16, %19 : vector<8x768xf32>
    %c3 = arith.constant 3 : index
    %c0_19 = arith.constant 0 : index
    %c0_20 = arith.constant 0 : index
    %21 = vector.load %arg2[%c3, %c0_19, %c0_20] : memref<9x8x8xf32, #tpu.memory_space<vmem>>, vector<1x8x8xf32>
    %22 = vector.shape_cast %21 : vector<1x8x8xf32> to vector<8x8xf32>
    %cst_21 = arith.constant dense<0.000000e+00> : vector<8x768xf32>
    %23 = tpu.matmul %22, %4, %cst_21 {dimension_numbers = #tpu.dot_dimension_numbers<[1], [0], [0], [1], [0, 0, 1, 1], [], []>} : vector<8x8xf32>, vector<8x768xf32>, vector<8x768xf32> -> vector<8x768xf32>
    %24 = arith.addf %20, %23 : vector<8x768xf32>
    %c0_22 = arith.constant 0 : index
    %c0_23 = arith.constant 0 : index
    %25 = vector.load %arg8[%c0_22, %c0_23] : memref<16x8xf32, #tpu.memory_space<vmem>>, vector<16x8xf32>
    %cst_24 = arith.constant dense<0.000000e+00> : vector<16x768xf32>
    %26 = tpu.matmul %25, %5, %cst_24 {dimension_numbers = #tpu.dot_dimension_numbers<[1], [0], [0], [1], [0, 0, 1, 1], [], []>} : vector<16x8xf32>, vector<8x768xf32>, vector<16x768xf32> -> vector<16x768xf32>
    %27 = vector.extract_strided_slice %26 {offsets = [0, 0], sizes = [8, 768], strides = [1, 1]} : vector<16x768xf32> to vector<8x768xf32>
    %28 = vector.extract_strided_slice %26 {offsets = [8, 0], sizes = [8, 768], strides = [1, 1]} : vector<16x768xf32> to vector<8x768xf32>
    %c0_25 = arith.constant 0 : index
    %c0_26 = arith.constant 0 : index
    %29 = vector.load %arg9[%c0_25, %c0_26] : memref<8x1xf32, #tpu.memory_space<vmem>>, vector<8x1xf32>
    %30 = vector.broadcast %29 : vector<8x1xf32> to vector<8x768xf32>
    %31 = arith.addf %28, %30 : vector<8x768xf32>
    %32 = arith.addf %24, %27 : vector<8x768xf32>
    %c5 = arith.constant 5 : index
    %c0_27 = arith.constant 0 : index
    %c0_28 = arith.constant 0 : index
    %33 = vector.load %arg2[%c5, %c0_27, %c0_28] : memref<9x8x8xf32, #tpu.memory_space<vmem>>, vector<1x8x8xf32>
    %34 = vector.shape_cast %33 : vector<1x8x8xf32> to vector<8x8xf32>
    %cst_29 = arith.constant dense<0.000000e+00> : vector<8x768xf32>
    %35 = tpu.matmul %34, %6, %cst_29 {dimension_numbers = #tpu.dot_dimension_numbers<[1], [0], [0], [1], [0, 0, 1, 1], [], []>} : vector<8x8xf32>, vector<8x768xf32>, vector<8x768xf32> -> vector<8x768xf32>
    %36 = arith.addf %32, %35 : vector<8x768xf32>
    %c6 = arith.constant 6 : index
    %c0_30 = arith.constant 0 : index
    %c0_31 = arith.constant 0 : index
    %37 = vector.load %arg2[%c6, %c0_30, %c0_31] : memref<9x8x8xf32, #tpu.memory_space<vmem>>, vector<1x8x8xf32>
    %38 = vector.shape_cast %37 : vector<1x8x8xf32> to vector<8x8xf32>
    %cst_32 = arith.constant dense<0.000000e+00> : vector<8x768xf32>
    %39 = tpu.matmul %38, %7, %cst_32 {dimension_numbers = #tpu.dot_dimension_numbers<[1], [0], [0], [1], [0, 0, 1, 1], [], []>} : vector<8x8xf32>, vector<8x768xf32>, vector<8x768xf32> -> vector<8x768xf32>
    %40 = arith.addf %36, %39 : vector<8x768xf32>
    %c7 = arith.constant 7 : index
    %c0_33 = arith.constant 0 : index
    %c0_34 = arith.constant 0 : index
    %41 = vector.load %arg2[%c7, %c0_33, %c0_34] : memref<9x8x8xf32, #tpu.memory_space<vmem>>, vector<1x8x8xf32>
    %42 = vector.shape_cast %41 : vector<1x8x8xf32> to vector<8x8xf32>
    %cst_35 = arith.constant dense<0.000000e+00> : vector<8x768xf32>
    %43 = tpu.matmul %42, %8, %cst_35 {dimension_numbers = #tpu.dot_dimension_numbers<[1], [0], [0], [1], [0, 0, 1, 1], [], []>} : vector<8x8xf32>, vector<8x768xf32>, vector<8x768xf32> -> vector<8x768xf32>
    %44 = arith.addf %40, %43 : vector<8x768xf32>
    %c8 = arith.constant 8 : index
    %c0_36 = arith.constant 0 : index
    %c0_37 = arith.constant 0 : index
    %45 = vector.load %arg2[%c8, %c0_36, %c0_37] : memref<9x8x8xf32, #tpu.memory_space<vmem>>, vector<1x8x8xf32>
    %46 = vector.shape_cast %45 : vector<1x8x8xf32> to vector<8x8xf32>
    %cst_38 = arith.constant dense<0.000000e+00> : vector<8x768xf32>
    %47 = tpu.matmul %46, %9, %cst_38 {dimension_numbers = #tpu.dot_dimension_numbers<[1], [0], [0], [1], [0, 0, 1, 1], [], []>} : vector<8x8xf32>, vector<8x768xf32>, vector<8x768xf32> -> vector<8x768xf32>
    %48 = arith.addf %44, %47 : vector<8x768xf32>
    %c0_39 = arith.constant 0 : index
    %c0_40 = arith.constant 0 : index
    %49 = vector.load %arg3[%c0_39, %c0_40] : memref<8x1xf32, #tpu.memory_space<vmem>>, vector<8x1xf32>
    %c0_41 = arith.constant 0 : index
    %c0_42 = arith.constant 0 : index
    %50 = vector.load %arg4[%c0_41, %c0_42] : memref<8x1xf32, #tpu.memory_space<vmem>>, vector<8x1xf32>
    %51 = vector.extract_strided_slice %48 {offsets = [0, 19], sizes = [8, 1], strides = [1, 1]} : vector<8x768xf32> to vector<8x1xf32>
    %52 = vector.broadcast %51 : vector<8x1xf32> to vector<8x768xf32>
    %53 = arith.subf %48, %52 : vector<8x768xf32>
    %54 = vector.broadcast %0 : vector<1x768xf32> to vector<8x768xf32>
    %55 = arith.mulf %53, %54 : vector<8x768xf32>
    %cst_43 = arith.constant dense<0.000000e+00> : vector<8xf32>
    %56 = vector.multi_reduction <add>, %55, %cst_43 [1] : vector<8x768xf32> to vector<8xf32>
    %57 = vector.shape_cast %56 : vector<8xf32> to vector<8x1xf32>
    %58 = arith.mulf %55, %55 : vector<8x768xf32>
    %cst_44 = arith.constant dense<0.000000e+00> : vector<8xf32>
    %59 = vector.multi_reduction <add>, %58, %cst_44 [1] : vector<8x768xf32> to vector<8xf32>
    %60 = vector.shape_cast %59 : vector<8xf32> to vector<8x1xf32>
    %cst_45 = arith.constant 0.001953125 : f32
    %61 = vector.broadcast %cst_45 : f32 to vector<8x1xf32>
    %62 = arith.mulf %57, %61 : vector<8x1xf32>
    %cst_46 = arith.constant 0.001953125 : f32
    %63 = vector.broadcast %cst_46 : f32 to vector<8x1xf32>
    %64 = arith.mulf %60, %63 : vector<8x1xf32>
    %65 = arith.mulf %62, %62 : vector<8x1xf32>
    %66 = arith.subf %64, %65 : vector<8x1xf32>
    %cst_47 = arith.constant 0.000000e+00 : f32
    %67 = vector.broadcast %cst_47 : f32 to vector<8x1xf32>
    %68 = arith.maximumf %66, %67 : vector<8x1xf32>
    %cst_48 = arith.constant 9.99999974E-6 : f32
    %69 = vector.broadcast %cst_48 : f32 to vector<8x1xf32>
    %70 = arith.addf %68, %69 : vector<8x1xf32>
    %71 = math.rsqrt %70 : vector<8x1xf32>
    %72 = arith.mulf %49, %71 : vector<8x1xf32>
    %73 = arith.mulf %62, %72 : vector<8x1xf32>
    %74 = arith.subf %50, %73 : vector<8x1xf32>
    %75 = vector.broadcast %72 : vector<8x1xf32> to vector<8x768xf32>
    %76 = arith.mulf %53, %75 : vector<8x768xf32>
    %77 = vector.broadcast %74 : vector<8x1xf32> to vector<8x768xf32>
    %78 = arith.addf %76, %77 : vector<8x768xf32>
    %cst_49 = arith.constant 0.000000e+00 : f32
    %79 = vector.broadcast %cst_49 : f32 to vector<8x768xf32>
    %80 = arith.maximumf %78, %79 : vector<8x768xf32>
    %81 = vector.broadcast %0 : vector<1x768xf32> to vector<8x768xf32>
    %82 = arith.mulf %80, %81 : vector<8x768xf32>
    %cst_50 = arith.constant 0.000000e+00 : f32
    %83 = vector.broadcast %cst_50 : f32 to vector<8x128xf32>
    %c0_51 = arith.constant 0 : index
    %c0_52 = arith.constant 0 : index
    %84 = vector.load %arg11[%c0_51, %c0_52] : memref<8x1024xf32, #tpu.memory_space<vmem>>, vector<8x128xf32>
    tpu.vector_store %arg11[%c0_51, %c0_52], %83 {strides = array<i32>} : memref<8x1024xf32, #tpu.memory_space<vmem>>, vector<8x128xf32>,
    %cst_53 = arith.constant 0.000000e+00 : f32
    %85 = vector.broadcast %cst_53 : f32 to vector<8x128xf32>
    %c0_54 = arith.constant 0 : index
    %c896 = arith.constant 896 : index
    %86 = vector.load %arg11[%c0_54, %c896] : memref<8x1024xf32, #tpu.memory_space<vmem>>, vector<8x128xf32>
    tpu.vector_store %arg11[%c0_54, %c896], %85 {strides = array<i32>} : memref<8x1024xf32, #tpu.memory_space<vmem>>, vector<8x128xf32>,
    %c0_55 = arith.constant 0 : index
    %c128_56 = arith.constant 128 : index
    %87 = vector.load %arg11[%c0_55, %c128_56] : memref<8x1024xf32, #tpu.memory_space<vmem>>, vector<8x768xf32>
    tpu.vector_store %arg11[%c0_55, %c128_56], %82 {strides = array<i32>} : memref<8x1024xf32, #tpu.memory_space<vmem>>, vector<8x768xf32>,
    %c0_57 = arith.constant 0 : index
    %c109_58 = arith.constant 109 : index
    %88 = vector.load %arg11[%c0_57, %c109_58] : memref<8x1024xf32, #tpu.memory_space<vmem>>, vector<8x768xf32>
    %c0_59 = arith.constant 0 : index
    %c110_60 = arith.constant 110 : index
    %89 = vector.load %arg11[%c0_59, %c110_60] : memref<8x1024xf32, #tpu.memory_space<vmem>>, vector<8x768xf32>
    %c0_61 = arith.constant 0 : index
    %c111_62 = arith.constant 111 : index
    %90 = vector.load %arg11[%c0_61, %c111_62] : memref<8x1024xf32, #tpu.memory_space<vmem>>, vector<8x768xf32>
    %c0_63 = arith.constant 0 : index
    %c127_64 = arith.constant 127 : index
    %91 = vector.load %arg11[%c0_63, %c127_64] : memref<8x1024xf32, #tpu.memory_space<vmem>>, vector<8x768xf32>
    %c0_65 = arith.constant 0 : index
    %c128_66 = arith.constant 128 : index
    %92 = vector.load %arg11[%c0_65, %c128_66] : memref<8x1024xf32, #tpu.memory_space<vmem>>, vector<8x768xf32>
    %c0_67 = arith.constant 0 : index
    %c129_68 = arith.constant 129 : index
    %93 = vector.load %arg11[%c0_67, %c129_68] : memref<8x1024xf32, #tpu.memory_space<vmem>>, vector<8x768xf32>
    %c0_69 = arith.constant 0 : index
    %c145_70 = arith.constant 145 : index
    %94 = vector.load %arg11[%c0_69, %c145_70] : memref<8x1024xf32, #tpu.memory_space<vmem>>, vector<8x768xf32>
    %c0_71 = arith.constant 0 : index
    %c146_72 = arith.constant 146 : index
    %95 = vector.load %arg11[%c0_71, %c146_72] : memref<8x1024xf32, #tpu.memory_space<vmem>>, vector<8x768xf32>
    %c0_73 = arith.constant 0 : index
    %c147_74 = arith.constant 147 : index
    %96 = vector.load %arg11[%c0_73, %c147_74] : memref<8x1024xf32, #tpu.memory_space<vmem>>, vector<8x768xf32>
    %c0_75 = arith.constant 0 : index
    %c0_76 = arith.constant 0 : index
    %c0_77 = arith.constant 0 : index
    %97 = vector.load %arg5[%c0_75, %c0_76, %c0_77] : memref<9x8x8xf32, #tpu.memory_space<vmem>>, vector<1x8x8xf32>
    %98 = vector.shape_cast %97 : vector<1x8x8xf32> to vector<8x8xf32>
    %cst_78 = arith.constant dense<0.000000e+00> : vector<8x768xf32>
    %99 = tpu.matmul %98, %88, %cst_78 {dimension_numbers = #tpu.dot_dimension_numbers<[1], [0], [0], [1], [0, 0, 1, 1], [], []>} : vector<8x8xf32>, vector<8x768xf32>, vector<8x768xf32> -> vector<8x768xf32>
    %c1_79 = arith.constant 1 : index
    %c0_80 = arith.constant 0 : index
    %c0_81 = arith.constant 0 : index
    %100 = vector.load %arg5[%c1_79, %c0_80, %c0_81] : memref<9x8x8xf32, #tpu.memory_space<vmem>>, vector<1x8x8xf32>
    %101 = vector.shape_cast %100 : vector<1x8x8xf32> to vector<8x8xf32>
    %cst_82 = arith.constant dense<0.000000e+00> : vector<8x768xf32>
    %102 = tpu.matmul %101, %89, %cst_82 {dimension_numbers = #tpu.dot_dimension_numbers<[1], [0], [0], [1], [0, 0, 1, 1], [], []>} : vector<8x8xf32>, vector<8x768xf32>, vector<8x768xf32> -> vector<8x768xf32>
    %103 = arith.addf %99, %102 : vector<8x768xf32>
    %c2_83 = arith.constant 2 : index
    %c0_84 = arith.constant 0 : index
    %c0_85 = arith.constant 0 : index
    %104 = vector.load %arg5[%c2_83, %c0_84, %c0_85] : memref<9x8x8xf32, #tpu.memory_space<vmem>>, vector<1x8x8xf32>
    %105 = vector.shape_cast %104 : vector<1x8x8xf32> to vector<8x8xf32>
    %cst_86 = arith.constant dense<0.000000e+00> : vector<8x768xf32>
    %106 = tpu.matmul %105, %90, %cst_86 {dimension_numbers = #tpu.dot_dimension_numbers<[1], [0], [0], [1], [0, 0, 1, 1], [], []>} : vector<8x8xf32>, vector<8x768xf32>, vector<8x768xf32> -> vector<8x768xf32>
    %107 = arith.addf %103, %106 : vector<8x768xf32>
    %c3_87 = arith.constant 3 : index
    %c0_88 = arith.constant 0 : index
    %c0_89 = arith.constant 0 : index
    %108 = vector.load %arg5[%c3_87, %c0_88, %c0_89] : memref<9x8x8xf32, #tpu.memory_space<vmem>>, vector<1x8x8xf32>
    %109 = vector.shape_cast %108 : vector<1x8x8xf32> to vector<8x8xf32>
    %cst_90 = arith.constant dense<0.000000e+00> : vector<8x768xf32>
    %110 = tpu.matmul %109, %91, %cst_90 {dimension_numbers = #tpu.dot_dimension_numbers<[1], [0], [0], [1], [0, 0, 1, 1], [], []>} : vector<8x8xf32>, vector<8x768xf32>, vector<8x768xf32> -> vector<8x768xf32>
    %111 = arith.addf %107, %110 : vector<8x768xf32>
    %c4 = arith.constant 4 : index
    %c0_91 = arith.constant 0 : index
    %c0_92 = arith.constant 0 : index
    %112 = vector.load %arg5[%c4, %c0_91, %c0_92] : memref<9x8x8xf32, #tpu.memory_space<vmem>>, vector<1x8x8xf32>
    %113 = vector.shape_cast %112 : vector<1x8x8xf32> to vector<8x8xf32>
    %cst_93 = arith.constant dense<0.000000e+00> : vector<8x768xf32>
    %114 = tpu.matmul %113, %92, %cst_93 {dimension_numbers = #tpu.dot_dimension_numbers<[1], [0], [0], [1], [0, 0, 1, 1], [], []>} : vector<8x8xf32>, vector<8x768xf32>, vector<8x768xf32> -> vector<8x768xf32>
    %115 = arith.addf %111, %114 : vector<8x768xf32>
    %c5_94 = arith.constant 5 : index
    %c0_95 = arith.constant 0 : index
    %c0_96 = arith.constant 0 : index
    %116 = vector.load %arg5[%c5_94, %c0_95, %c0_96] : memref<9x8x8xf32, #tpu.memory_space<vmem>>, vector<1x8x8xf32>
    %117 = vector.shape_cast %116 : vector<1x8x8xf32> to vector<8x8xf32>
    %cst_97 = arith.constant dense<0.000000e+00> : vector<8x768xf32>
    %118 = tpu.matmul %117, %93, %cst_97 {dimension_numbers = #tpu.dot_dimension_numbers<[1], [0], [0], [1], [0, 0, 1, 1], [], []>} : vector<8x8xf32>, vector<8x768xf32>, vector<8x768xf32> -> vector<8x768xf32>
    %119 = arith.addf %115, %118 : vector<8x768xf32>
    %c6_98 = arith.constant 6 : index
    %c0_99 = arith.constant 0 : index
    %c0_100 = arith.constant 0 : index
    %120 = vector.load %arg5[%c6_98, %c0_99, %c0_100] : memref<9x8x8xf32, #tpu.memory_space<vmem>>, vector<1x8x8xf32>
    %121 = vector.shape_cast %120 : vector<1x8x8xf32> to vector<8x8xf32>
    %cst_101 = arith.constant dense<0.000000e+00> : vector<8x768xf32>
    %122 = tpu.matmul %121, %94, %cst_101 {dimension_numbers = #tpu.dot_dimension_numbers<[1], [0], [0], [1], [0, 0, 1, 1], [], []>} : vector<8x8xf32>, vector<8x768xf32>, vector<8x768xf32> -> vector<8x768xf32>
    %123 = arith.addf %119, %122 : vector<8x768xf32>
    %c7_102 = arith.constant 7 : index
    %c0_103 = arith.constant 0 : index
    %c0_104 = arith.constant 0 : index
    %124 = vector.load %arg5[%c7_102, %c0_103, %c0_104] : memref<9x8x8xf32, #tpu.memory_space<vmem>>, vector<1x8x8xf32>
    %125 = vector.shape_cast %124 : vector<1x8x8xf32> to vector<8x8xf32>
    %cst_105 = arith.constant dense<0.000000e+00> : vector<8x768xf32>
    %126 = tpu.matmul %125, %95, %cst_105 {dimension_numbers = #tpu.dot_dimension_numbers<[1], [0], [0], [1], [0, 0, 1, 1], [], []>} : vector<8x8xf32>, vector<8x768xf32>, vector<8x768xf32> -> vector<8x768xf32>
    %127 = arith.addf %123, %126 : vector<8x768xf32>
    %c8_106 = arith.constant 8 : index
    %c0_107 = arith.constant 0 : index
    %c0_108 = arith.constant 0 : index
    %128 = vector.load %arg5[%c8_106, %c0_107, %c0_108] : memref<9x8x8xf32, #tpu.memory_space<vmem>>, vector<1x8x8xf32>
    %129 = vector.shape_cast %128 : vector<1x8x8xf32> to vector<8x8xf32>
    %cst_109 = arith.constant dense<0.000000e+00> : vector<8x768xf32>
    %130 = tpu.matmul %129, %96, %cst_109 {dimension_numbers = #tpu.dot_dimension_numbers<[1], [0], [0], [1], [0, 0, 1, 1], [], []>} : vector<8x8xf32>, vector<8x768xf32>, vector<8x768xf32> -> vector<8x768xf32>
    %131 = arith.addf %127, %130 : vector<8x768xf32>
    %c0_110 = arith.constant 0 : index
    %c0_111 = arith.constant 0 : index
    %132 = vector.load %arg6[%c0_110, %c0_111] : memref<8x1xf32, #tpu.memory_space<vmem>>, vector<8x1xf32>
    %c0_112 = arith.constant 0 : index
    %c0_113 = arith.constant 0 : index
    %133 = vector.load %arg7[%c0_112, %c0_113] : memref<8x1xf32, #tpu.memory_space<vmem>>, vector<8x1xf32>
    %134 = vector.extract_strided_slice %131 {offsets = [0, 19], sizes = [8, 1], strides = [1, 1]} : vector<8x768xf32> to vector<8x1xf32>
    %135 = vector.broadcast %134 : vector<8x1xf32> to vector<8x768xf32>
    %136 = arith.subf %131, %135 : vector<8x768xf32>
    %137 = vector.broadcast %0 : vector<1x768xf32> to vector<8x768xf32>
    %138 = arith.mulf %136, %137 : vector<8x768xf32>
    %cst_114 = arith.constant dense<0.000000e+00> : vector<8xf32>
    %139 = vector.multi_reduction <add>, %138, %cst_114 [1] : vector<8x768xf32> to vector<8xf32>
    %140 = vector.shape_cast %139 : vector<8xf32> to vector<8x1xf32>
    %141 = arith.mulf %138, %138 : vector<8x768xf32>
    %cst_115 = arith.constant dense<0.000000e+00> : vector<8xf32>
    %142 = vector.multi_reduction <add>, %141, %cst_115 [1] : vector<8x768xf32> to vector<8xf32>
    %143 = vector.shape_cast %142 : vector<8xf32> to vector<8x1xf32>
    %cst_116 = arith.constant 0.001953125 : f32
    %144 = vector.broadcast %cst_116 : f32 to vector<8x1xf32>
    %145 = arith.mulf %140, %144 : vector<8x1xf32>
    %cst_117 = arith.constant 0.001953125 : f32
    %146 = vector.broadcast %cst_117 : f32 to vector<8x1xf32>
    %147 = arith.mulf %143, %146 : vector<8x1xf32>
    %148 = arith.mulf %145, %145 : vector<8x1xf32>
    %149 = arith.subf %147, %148 : vector<8x1xf32>
    %cst_118 = arith.constant 0.000000e+00 : f32
    %150 = vector.broadcast %cst_118 : f32 to vector<8x1xf32>
    %151 = arith.maximumf %149, %150 : vector<8x1xf32>
    %cst_119 = arith.constant 9.99999974E-6 : f32
    %152 = vector.broadcast %cst_119 : f32 to vector<8x1xf32>
    %153 = arith.addf %151, %152 : vector<8x1xf32>
    %154 = math.rsqrt %153 : vector<8x1xf32>
    %155 = arith.mulf %132, %154 : vector<8x1xf32>
    %156 = arith.mulf %145, %155 : vector<8x1xf32>
    %157 = arith.subf %133, %156 : vector<8x1xf32>
    %158 = vector.broadcast %155 : vector<8x1xf32> to vector<8x768xf32>
    %159 = arith.mulf %136, %158 : vector<8x768xf32>
    %160 = vector.broadcast %157 : vector<8x1xf32> to vector<8x768xf32>
    %161 = arith.addf %159, %160 : vector<8x768xf32>
    %162 = arith.addf %161, %31 : vector<8x768xf32>
    %cst_120 = arith.constant 0.000000e+00 : f32
    %163 = vector.broadcast %cst_120 : f32 to vector<8x768xf32>
    %164 = arith.maximumf %162, %163 : vector<8x768xf32>
    %c0_121 = arith.constant 0 : index
    %c0_122 = arith.constant 0 : index
    %165 = vector.load %arg10[%c0_121, %c0_122] : memref<8x768xf32, #tpu.memory_space<vmem>>, vector<8x768xf32>
    tpu.vector_store %arg10[%c0_121, %c0_122], %164 {strides = array<i32>} : memref<8x768xf32, #tpu.memory_space<vmem>>, vector<8x768xf32>,
    return
  }
}

</mosaic_0001>

<llo_original>
// kernel: tpu_custom_call.1
$region0: #{tpu_custom_call.1}
  #allocation0 [shape = 'u32[]', space=smem, size = 0x4, offset = 0x4, fixed_abs, tag = 'smem constant byte address 0x4 - core index']
  #allocation1 [shape = 'u32[144,128]{1,0:T(1,128)}', space=vmem, size = 0x12000, scoped, tag = 'internal scratch']
  #allocation2 [shape = 'f32[8,1024]{1,0:T(8,128)}', space=vmem, size = 0x8000, scoped, tag = 'scratch operand']
  %s0 = inlined_call_operand.vmem [shape: f32[8,1024], index: 0, kind: input, shape index: {}]
  %s1 = inlined_call_operand.vmem [shape: f32[1,768], index: 1, kind: input, shape index: {}]
  %s2 = inlined_call_operand.vmem [shape: f32[9,8,8], index: 2, kind: input, shape index: {}]
  %s3 = inlined_call_operand.vmem [shape: f32[8,1], index: 3, kind: input, shape index: {}]
  %s4 = inlined_call_operand.vmem [shape: f32[8,1], index: 4, kind: input, shape index: {}]
  %s5 = inlined_call_operand.vmem [shape: f32[9,8,8], index: 5, kind: input, shape index: {}]
  %s6 = inlined_call_operand.vmem [shape: f32[8,1], index: 6, kind: input, shape index: {}]
  %s7 = inlined_call_operand.vmem [shape: f32[8,1], index: 7, kind: input, shape index: {}]
  %s8 = inlined_call_operand.vmem [shape: f32[16,8], index: 8, kind: input, shape index: {}]
  %s9 = inlined_call_operand.vmem [shape: f32[8,1], index: 9, kind: input, shape index: {}]
  %s10 = inlined_call_operand.hbm [shape: f32[8,768], index: 10, kind: output, shape index: {}]
  %s11 = sld [smem:[#allocation0]]
  $region50: #{tpu_custom_call.1} parent=0
    _
  %s13 = ssub.s32 1, %s11
  %s14 = scalar_select 0, %s13, %s11
  $region1: #{tpu_custom_call.1} parent=0
    #allocation3 [shape = 'u8[24576]{0}', space=vmem, size = 0x6000, scoped, tag = 'output window, operand 0, single buffered']
    #allocation4 [shape = 's32[1]{0}', space=sflag, size = 0x4, scoped, tag = 'scoped memory for tpu_custom_call.1']
    %15 = vsyncpa [#allocation4], 0
    // Predicated region
    $region2: #{tpu_custom_call.1} parent=1 // pred_check
      _
    $region3: #{tpu_custom_call.1} parent=1 // pred_check_branch
      %17 = sbr.rel (0) target = $region5
    $region4: #{tpu_custom_call.1} parent=1 // pred_region
      _
    $region5: #{tpu_custom_call.1} parent=1 // pred_fallthru
      _
    // Predicated region
    $region6: #{tpu_custom_call.1} parent=1 // pred_check
      _
    $region7: #{tpu_custom_call.1} parent=1 // pred_check_branch
      %19 = sbr.rel (0) target = $region9
    $region8: #{tpu_custom_call.1} parent=1 // pred_region
      _
    $region9: #{tpu_custom_call.1} parent=1 // pred_fallthru
      _
    // Predicated region
    $region10: #{tpu_custom_call.1} parent=1 // pred_check
      _
    $region11: #{tpu_custom_call.1} parent=1 // pred_check_branch
      %21 = sbr.rel (0) target = $region13
    $region12: #{tpu_custom_call.1} parent=1 // pred_region
      _
    $region13: #{tpu_custom_call.1} parent=1 // pred_fallthru
      _
    // Predicated region
    $region14: #{tpu_custom_call.1} parent=1 // pred_check
      _
    $region15: #{tpu_custom_call.1} parent=1 // pred_check_branch
      %23 = sbr.rel (0) target = $region17
    $region16: #{tpu_custom_call.1} parent=1 // pred_region
      _
    $region17: #{tpu_custom_call.1} parent=1 // pred_fallthru
      _
    // Predicated region
    $region18: #{tpu_custom_call.1} parent=1 // pred_check
      _
    $region19: #{tpu_custom_call.1} parent=1 // pred_check_branch
      %25 = sbr.rel (0) target = $region21
    $region20: #{tpu_custom_call.1} parent=1 // pred_region
      _
    $region21: #{tpu_custom_call.1} parent=1 // pred_fallthru
      _
    // Predicated region
    $region22: #{tpu_custom_call.1} parent=1 // pred_check
      _
    $region23: #{tpu_custom_call.1} parent=1 // pred_check_branch
      %27 = sbr.rel (0) target = $region25
    $region24: #{tpu_custom_call.1} parent=1 // pred_region
      _
    $region25: #{tpu_custom_call.1} parent=1 // pred_fallthru
      _
    // Predicated region
    $region26: #{tpu_custom_call.1} parent=1 // pred_check
      _
    $region27: #{tpu_custom_call.1} parent=1 // pred_check_branch
      %29 = sbr.rel (0) target = $region29
    $region28: #{tpu_custom_call.1} parent=1 // pred_region
      _
    $region29: #{tpu_custom_call.1} parent=1 // pred_fallthru
      _
    // Predicated region
    $region30: #{tpu_custom_call.1} parent=1 // pred_check
      _
    $region31: #{tpu_custom_call.1} parent=1 // pred_check_branch
      %31 = sbr.rel (0) target = $region33
    $region32: #{tpu_custom_call.1} parent=1 // pred_region
      _
    $region33: #{tpu_custom_call.1} parent=1 // pred_fallthru
      _
    // Predicated region
    $region34: #{tpu_custom_call.1} parent=1 // pred_check
      _
    $region35: #{tpu_custom_call.1} parent=1 // pred_check_branch
      %33 = sbr.rel (0) target = $region37
    $region36: #{tpu_custom_call.1} parent=1 // pred_region
      _
    $region37: #{tpu_custom_call.1} parent=1 // pred_fallthru
      _
    // Predicated region
    $region38: #{tpu_custom_call.1} parent=1 // pred_check
      _
    $region39: #{tpu_custom_call.1} parent=1 // pred_check_branch
      %35 = sbr.rel (0) target = $region41
    $region40: #{tpu_custom_call.1} parent=1 // pred_region
      _
    $region41: #{tpu_custom_call.1} parent=1 // pred_fallthru
      _
    %v36 = vld [vmem:[%s1] sm:$0x3f]
    %v37 = vld [vmem:[%s0] sm:$0xff]
    %v38 = vld [vmem:[%s0 + $0x8] sm:$0xff]
    %v39 = vld [vmem:[%s0 + $0x10] sm:$0xff]
    %v40 = vld [vmem:[%s0 + $0x18] sm:$0xff]
    %v41 = vld [vmem:[%s0 + $0x20] sm:$0xff]
    %v42 = vld [vmem:[%s0 + $0x28] sm:$0xff]
    %v43 = vld [vmem:[%s0 + $0x30] sm:$0xff]
    %v44 = vld [vmem:[%s0 + $0x8] sm:$0xff]
    %v45 = vld [vmem:[%s0 + $0x10] sm:$0xff]
    %v46 = vld [vmem:[%s0 + $0x18] sm:$0xff]
    %v47 = vld [vmem:[%s0 + $0x20] sm:$0xff]
    %v48 = vld [vmem:[%s0 + $0x28] sm:$0xff]
    %v49 = vld [vmem:[%s0 + $0x30] sm:$0xff]
    %v50 = vld [vmem:[%s0 + $0x38] sm:$0xff]
    %v51 = vld [vmem:[%s2] sm:$0xff]
    %s52 = scalar_lea.vmem %s2, 8
    %v53 = vld [vmem:[%s52] sm:$0xff]
    %61 = vrot.lane.b32.xlu0 %v37, 18
    %v62 = vpop.permute.xlu0 %61
    %63 = vrot.lane.b32.xlu0 %v38, 18
    %v64 = vpop.permute.xlu0 %63
    %65 = vrot.lane.b32.xlu0 %v39, 18
    %v66 = vpop.permute.xlu0 %65
    %67 = vrot.lane.b32.xlu0 %v40, 18
    %v68 = vpop.permute.xlu0 %67
    %69 = vrot.lane.b32.xlu0 %v41, 18
    %v70 = vpop.permute.xlu0 %69
    %71 = vrot.lane.b32.xlu0 %v42, 18
    %v72 = vpop.permute.xlu0 %71
    %73 = vrot.lane.b32.xlu0 %v43, 18
    %v74 = vpop.permute.xlu0 %73
    %vm75 = vcmask 146432
    %v76 = vsel %vm75, %v62, %v64
    %v77 = vsel %vm75, %v64, %v66
    %v78 = vsel %vm75, %v66, %v68
    %v79 = vsel %vm75, %v68, %v70
    %v80 = vsel %vm75, %v70, %v72
    %v81 = vsel %vm75, %v72, %v74
    %vm88 = vcmask 64512
    %v90 = vsel %vm88, %v53, 0
    %92 = vmatprep.subr.mxu0 0.0
    %93 = vmatpush1.msra.mxu0 0.0
    %94 = vmatprep.subr.mxu0 0.0
    %95 = vmatpush1.msra.mxu0 0.0
    %96 = vmatprep.subr.mxu0 0.0
    %97 = vmatpush1.msra.mxu0 0.0
    %98 = vmatprep.subr.mxu0 0.0
    %99 = vmatpush1.msra.mxu0 0.0
    %100 = vmatprep.subr.mxu0 0.0
    %101 = vmatpush1.msra.mxu0 0.0
    %102 = vmatprep.subr.mxu0 0.0
    %103 = vmatpush1.msra.mxu0 0.0
    %104 = vmatprep.subr.mxu0 0.0
    %105 = vmatpush1.msra.mxu0 0.0
    %106 = vmatprep.subr.mxu0 0.0
    %107 = vmatpush1.msra.mxu0 0.0
    %108 = vmatprep.subr.mxu0 0.0
    %109 = vmatpush1.msra.mxu0 0.0
    %110 = vmatprep.subr.mxu0 0.0
    %111 = vmatpush1.msra.mxu0 0.0
    %112 = vmatprep.subr.mxu0 0.0
    %113 = vmatpush1.msra.mxu0 0.0
    %114 = vmatprep.subr.mxu0 0.0
    %115 = vmatpush1.msra.mxu0 0.0
    %116 = vmatprep.subr.mxu0 0.0
    %117 = vmatpush1.msra.mxu0 0.0
    %118 = vmatprep.subr.mxu0 0.0
    %119 = vmatpush1.msra.mxu0 0.0
    %120 = vmatprep.subr.mxu0 0.0
    %121 = vmatpush1.msra.mxu0 0.0
    %122 = vmatprep.subr.mxu0 %v77
    %123 = vmatpush1.msra.mxu0 %v76
    %124 = vmatprep.subr.mxu0 0.0
    %125 = vmatpush2.msra.mxu0 0.0
    %126 = vmatprep.subr.mxu0 0.0
    %127 = vmatpush2.msra.mxu0 0.0
    %128 = vmatprep.subr.mxu0 0.0
    %129 = vmatpush2.msra.mxu0 0.0
    %130 = vmatprep.subr.mxu0 0.0
    %131 = vmatpush2.msra.mxu0 0.0
    %132 = vmatprep.subr.mxu0 0.0
    %133 = vmatpush2.msra.mxu0 0.0
    %134 = vmatprep.subr.mxu0 0.0
    %135 = vmatpush2.msra.mxu0 0.0
    %136 = vmatprep.subr.mxu0 0.0
    %137 = vmatpush2.msra.mxu0 0.0
    %138 = vmatprep.subr.mxu0 0.0
    %139 = vmatpush2.msra.mxu0 0.0
    %140 = vmatprep.subr.mxu0 0.0
    %141 = vmatpush2.msra.mxu0 0.0
    %142 = vmatprep.subr.mxu0 0.0
    %143 = vmatpush2.msra.mxu0 0.0
    %144 = vmatprep.subr.mxu0 0.0
    %145 = vmatpush2.msra.mxu0 0.0
    %146 = vmatprep.subr.mxu0 0.0
    %147 = vmatpush2.msra.mxu0 0.0
    %148 = vmatprep.subr.mxu0 0.0
    %149 = vmatpush2.msra.mxu0 0.0
    %150 = vmatprep.subr.mxu0 0.0
    %151 = vmatpush2.msra.mxu0 0.0
    %152 = vmatprep.subr.mxu0 0.0
    %153 = vmatpush2.msra.mxu0 0.0
    %154 = vmatprep.subr.mxu0 0.0
    %155 = vmatpush2.msra.mxu0 0.0
    %156 = vmatprep.mubr.f32.mxu0 0.0
    %157 = vmatmul.mubr.f32.gmra.mxu0 %v90
    %v158 = vpop.f32.mrf.mxu0
    %v159 = vadd.f32 0.0, %v158
    %v160 = vpop.f32.mrf.mxu0
    %v161 = vadd.f32 0.0, %v160
    %162 = vdwg.mxu0
    %163 = vmatprep.subr.mxu0 0.0
    %164 = vmatpush1.msra.mxu0 0.0
    %165 = vmatprep.subr.mxu0 0.0
    %166 = vmatpush1.msra.mxu0 0.0
    %167 = vmatprep.subr.mxu0 0.0
    %168 = vmatpush1.msra.mxu0 0.0
    %169 = vmatprep.subr.mxu0 0.0
    %170 = vmatpush1.msra.mxu0 0.0
    %171 = vmatprep.subr.mxu0 0.0
    %172 = vmatpush1.msra.mxu0 0.0
    %173 = vmatprep.subr.mxu0 0.0
    %174 = vmatpush1.msra.mxu0 0.0
    %175 = vmatprep.subr.mxu0 0.0
    %176 = vmatpush1.msra.mxu0 0.0
    %177 = vmatprep.subr.mxu0 0.0
    %178 = vmatpush1.msra.mxu0 0.0
    %179 = vmatprep.subr.mxu0 0.0
    %180 = vmatpush1.msra.mxu0 0.0
    %181 = vmatprep.subr.mxu0 0.0
    %182 = vmatpush1.msra.mxu0 0.0
    %183 = vmatprep.subr.mxu0 0.0
    %184 = vmatpush1.msra.mxu0 0.0
    %185 = vmatprep.subr.mxu0 0.0
    %186 = vmatpush1.msra.mxu0 0.0
    %187 = vmatprep.subr.mxu0 0.0
    %188 = vmatpush1.msra.mxu0 0.0
    %189 = vmatprep.subr.mxu0 0.0
    %190 = vmatpush1.msra.mxu0 0.0
    %191 = vmatprep.subr.mxu0 0.0
    %192 = vmatpush1.msra.mxu0 0.0
    %193 = vmatprep.subr.mxu0 %v79
    %194 = vmatpush1.msra.mxu0 %v78
    %195 = vmatprep.subr.mxu0 0.0
    %196 = vmatpush2.msra.mxu0 0.0
    %197 = vmatprep.subr.mxu0 0.0
    %198 = vmatpush2.msra.mxu0 0.0
    %199 = vmatprep.subr.mxu0 0.0
    %200 = vmatpush2.msra.mxu0 0.0
    %201 = vmatprep.subr.mxu0 0.0
    %202 = vmatpush2.msra.mxu0 0.0
    %203 = vmatprep.subr.mxu0 0.0
    %204 = vmatpush2.msra.mxu0 0.0
    %205 = vmatprep.subr.mxu0 0.0
    %206 = vmatpush2.msra.mxu0 0.0
    %207 = vmatprep.subr.mxu0 0.0
    %208 = vmatpush2.msra.mxu0 0.0
    %209 = vmatprep.subr.mxu0 0.0
    %210 = vmatpush2.msra.mxu0 0.0
    %211 = vmatprep.subr.mxu0 0.0
    %212 = vmatpush2.msra.mxu0 0.0
    %213 = vmatprep.subr.mxu0 0.0
    %214 = vmatpush2.msra.mxu0 0.0
    %215 = vmatprep.subr.mxu0 0.0
    %216 = vmatpush2.msra.mxu0 0.0
    %217 = vmatprep.subr.mxu0 0.0
    %218 = vmatpush2.msra.mxu0 0.0
    %219 = vmatprep.subr.mxu0 0.0
    %220 = vmatpush2.msra.mxu0 0.0
    %221 = vmatprep.subr.mxu0 0.0
    %222 = vmatpush2.msra.mxu0 0.0
    %223 = vmatprep.subr.mxu0 0.0
    %224 = vmatpush2.msra.mxu0 0.0
    %225 = vmatprep.subr.mxu0 0.0
    %226 = vmatpush2.msra.mxu0 0.0
    %227 = vmatprep.mubr.f32.mxu0 0.0
    %228 = vmatmul.mubr.f32.gmra.mxu0 %v90
    %v229 = vpop.f32.mrf.mxu0
    %v230 = vadd.f32 0.0, %v229
    %v231 = vpop.f32.mrf.mxu0
    %v232 = vadd.f32 0.0, %v231
    %233 = vdwg.mxu0
    %234 = vmatprep.subr.mxu0 0.0
    %235 = vmatpush1.msra.mxu0 0.0
    %236 = vmatprep.subr.mxu0 0.0
    %237 = vmatpush1.msra.mxu0 0.0
    %238 = vmatprep.subr.mxu0 0.0
    %239 = vmatpush1.msra.mxu0 0.0
    %240 = vmatprep.subr.mxu0 0.0
    %241 = vmatpush1.msra.mxu0 0.0
    %242 = vmatprep.subr.mxu0 0.0
    %243 = vmatpush1.msra.mxu0 0.0
    %244 = vmatprep.subr.mxu0 0.0
    %245 = vmatpush1.msra.mxu0 0.0
    %246 = vmatprep.subr.mxu0 0.0
    %247 = vmatpush1.msra.mxu0 0.0
    %248 = vmatprep.subr.mxu0 0.0
    %249 = vmatpush1.msra.mxu0 0.0
    %250 = vmatprep.subr.mxu0 0.0
    %251 = vmatpush1.msra.mxu0 0.0
    %252 = vmatprep.subr.mxu0 0.0
    %253 = vmatpush1.msra.mxu0 0.0
    %254 = vmatprep.subr.mxu0 0.0
    %255 = vmatpush1.msra.mxu0 0.0
    %256 = vmatprep.subr.mxu0 0.0
    %257 = vmatpush1.msra.mxu0 0.0
    %258 = vmatprep.subr.mxu0 0.0
    %259 = vmatpush1.msra.mxu0 0.0
    %260 = vmatprep.subr.mxu0 0.0
    %261 = vmatpush1.msra.mxu0 0.0
    %262 = vmatprep.subr.mxu0 0.0
    %263 = vmatpush1.msra.mxu0 0.0
    %264 = vmatprep.subr.mxu0 %v81
    %265 = vmatpush1.msra.mxu0 %v80
    %266 = vmatprep.subr.mxu0 0.0
    %267 = vmatpush2.msra.mxu0 0.0
    %268 = vmatprep.subr.mxu0 0.0
    %269 = vmatpush2.msra.mxu0 0.0
    %270 = vmatprep.subr.mxu0 0.0
    %271 = vmatpush2.msra.mxu0 0.0
    %272 = vmatprep.subr.mxu0 0.0
    %273 = vmatpush2.msra.mxu0 0.0
    %274 = vmatprep.subr.mxu0 0.0
    %275 = vmatpush2.msra.mxu0 0.0
    %276 = vmatprep.subr.mxu0 0.0
    %277 = vmatpush2.msra.mxu0 0.0
    %278 = vmatprep.subr.mxu0 0.0
    %279 = vmatpush2.msra.mxu0 0.0
    %280 = vmatprep.subr.mxu0 0.0
    %281 = vmatpush2.msra.mxu0 0.0
    %282 = vmatprep.subr.mxu0 0.0
    %283 = vmatpush2.msra.mxu0 0.0
    %284 = vmatprep.subr.mxu0 0.0
    %285 = vmatpush2.msra.mxu0 0.0
    %286 = vmatprep.subr.mxu0 0.0
    %287 = vmatpush2.msra.mxu0 0.0
    %288 = vmatprep.subr.mxu0 0.0
    %289 = vmatpush2.msra.mxu0 0.0
    %290 = vmatprep.subr.mxu0 0.0
    %291 = vmatpush2.msra.mxu0 0.0
    %292 = vmatprep.subr.mxu0 0.0
    %293 = vmatpush2.msra.mxu0 0.0
    %294 = vmatprep.subr.mxu0 0.0
    %295 = vmatpush2.msra.mxu0 0.0
    %296 = vmatprep.subr.mxu0 0.0
    %297 = vmatpush2.msra.mxu0 0.0
    %298 = vmatprep.mubr.f32.mxu0 0.0
    %299 = vmatmul.mubr.f32.gmra.mxu0 %v90
    %v300 = vpop.f32.mrf.mxu0
    %v301 = vadd.f32 0.0, %v300
    %v302 = vpop.f32.mrf.mxu0
    %v303 = vadd.f32 0.0, %v302
    %304 = vdwg.mxu0
    %305 = vrot.lane.b32.xlu0 %v37, 19
    %v306 = vpop.permute.xlu0 %305
    %307 = vrot.lane.b32.xlu0 %v38, 19
    %v308 = vpop.permute.xlu0 %307
    %309 = vrot.lane.b32.xlu0 %v39, 19
    %v310 = vpop.permute.xlu0 %309
    %311 = vrot.lane.b32.xlu0 %v40, 19
    %v312 = vpop.permute.xlu0 %311
    %313 = vrot.lane.b32.xlu0 %v41, 19
    %v314 = vpop.permute.xlu0 %313
    %315 = vrot.lane.b32.xlu0 %v42, 19
    %v316 = vpop.permute.xlu0 %315
    %317 = vrot.lane.b32.xlu0 %v43, 19
    %v318 = vpop.permute.xlu0 %317
    %vm319 = vcmask 154624
    %v320 = vsel %vm319, %v306, %v308
    %v321 = vsel %vm319, %v308, %v310
    %v322 = vsel %vm319, %v310, %v312
    %v323 = vsel %vm319, %v312, %v314
    %v324 = vsel %vm319, %v314, %v316
    %v325 = vsel %vm319, %v316, %v318
    %v333 = vsel %vm88, %v51, 0
    %335 = vmatprep.subr.mxu0 0.0
    %336 = vmatpush1.msra.mxu0 0.0
    %337 = vmatprep.subr.mxu0 0.0
    %338 = vmatpush1.msra.mxu0 0.0
    %339 = vmatprep.subr.mxu0 0.0
    %340 = vmatpush1.msra.mxu0 0.0
    %341 = vmatprep.subr.mxu0 0.0
    %342 = vmatpush1.msra.mxu0 0.0
    %343 = vmatprep.subr.mxu0 0.0
    %344 = vmatpush1.msra.mxu0 0.0
    %345 = vmatprep.subr.mxu0 0.0
    %346 = vmatpush1.msra.mxu0 0.0
    %347 = vmatprep.subr.mxu0 0.0
    %348 = vmatpush1.msra.mxu0 0.0
    %349 = vmatprep.subr.mxu0 0.0
    %350 = vmatpush1.msra.mxu0 0.0
    %351 = vmatprep.subr.mxu0 0.0
    %352 = vmatpush1.msra.mxu0 0.0
    %353 = vmatprep.subr.mxu0 0.0
    %354 = vmatpush1.msra.mxu0 0.0
    %355 = vmatprep.subr.mxu0 0.0
    %356 = vmatpush1.msra.mxu0 0.0
    %357 = vmatprep.subr.mxu0 0.0
    %358 = vmatpush1.msra.mxu0 0.0
    %359 = vmatprep.subr.mxu0 0.0
    %360 = vmatpush1.msra.mxu0 0.0
    %361 = vmatprep.subr.mxu0 0.0
    %362 = vmatpush1.msra.mxu0 0.0
    %363 = vmatprep.subr.mxu0 0.0
    %364 = vmatpush1.msra.mxu0 0.0
    %365 = vmatprep.subr.mxu0 %v321
    %366 = vmatpush1.msra.mxu0 %v320
    %367 = vmatprep.subr.mxu0 0.0
    %368 = vmatpush2.msra.mxu0 0.0
    %369 = vmatprep.subr.mxu0 0.0
    %370 = vmatpush2.msra.mxu0 0.0
    %371 = vmatprep.subr.mxu0 0.0
    %372 = vmatpush2.msra.mxu0 0.0
    %373 = vmatprep.subr.mxu0 0.0
    %374 = vmatpush2.msra.mxu0 0.0
    %375 = vmatprep.subr.mxu0 0.0
    %376 = vmatpush2.msra.mxu0 0.0
    %377 = vmatprep.subr.mxu0 0.0
    %378 = vmatpush2.msra.mxu0 0.0
    %379 = vmatprep.subr.mxu0 0.0
    %380 = vmatpush2.msra.mxu0 0.0
    %381 = vmatprep.subr.mxu0 0.0
    %382 = vmatpush2.msra.mxu0 0.0
    %383 = vmatprep.subr.mxu0 0.0
    %384 = vmatpush2.msra.mxu0 0.0
    %385 = vmatprep.subr.mxu0 0.0
    %386 = vmatpush2.msra.mxu0 0.0
    %387 = vmatprep.subr.mxu0 0.0
    %388 = vmatpush2.msra.mxu0 0.0
    %389 = vmatprep.subr.mxu0 0.0
    %390 = vmatpush2.msra.mxu0 0.0
    %391 = vmatprep.subr.mxu0 0.0
    %392 = vmatpush2.msra.mxu0 0.0
    %393 = vmatprep.subr.mxu0 0.0
    %394 = vmatpush2.msra.mxu0 0.0
    %395 = vmatprep.subr.mxu0 0.0
    %396 = vmatpush2.msra.mxu0 0.0
    %397 = vmatprep.subr.mxu0 0.0
    %398 = vmatpush2.msra.mxu0 0.0
    %399 = vmatprep.mubr.f32.mxu0 0.0
    %400 = vmatmul.mubr.f32.gmra.mxu0 %v333
    %v401 = vpop.f32.mrf.mxu0
    %v402 = vadd.f32 %v159, %v401
    %v403 = vpop.f32.mrf.mxu0
    %v404 = vadd.f32 %v161, %v403
    %405 = vdwg.mxu0
    %406 = vmatprep.subr.mxu0 0.0
    %407 = vmatpush1.msra.mxu0 0.0
    %408 = vmatprep.subr.mxu0 0.0
    %409 = vmatpush1.msra.mxu0 0.0
    %410 = vmatprep.subr.mxu0 0.0
    %411 = vmatpush1.msra.mxu0 0.0
    %412 = vmatprep.subr.mxu0 0.0
    %413 = vmatpush1.msra.mxu0 0.0
    %414 = vmatprep.subr.mxu0 0.0
    %415 = vmatpush1.msra.mxu0 0.0
    %416 = vmatprep.subr.mxu0 0.0
    %417 = vmatpush1.msra.mxu0 0.0
    %418 = vmatprep.subr.mxu0 0.0
    %419 = vmatpush1.msra.mxu0 0.0
    %420 = vmatprep.subr.mxu0 0.0
    %421 = vmatpush1.msra.mxu0 0.0
    %422 = vmatprep.subr.mxu0 0.0
    %423 = vmatpush1.msra.mxu0 0.0
    %424 = vmatprep.subr.mxu0 0.0
    %425 = vmatpush1.msra.mxu0 0.0
    %426 = vmatprep.subr.mxu0 0.0
    %427 = vmatpush1.msra.mxu0 0.0
    %428 = vmatprep.subr.mxu0 0.0
    %429 = vmatpush1.msra.mxu0 0.0
    %430 = vmatprep.subr.mxu0 0.0
    %431 = vmatpush1.msra.mxu0 0.0
    %432 = vmatprep.subr.mxu0 0.0
    %433 = vmatpush1.msra.mxu0 0.0
    %434 = vmatprep.subr.mxu0 0.0
    %435 = vmatpush1.msra.mxu0 0.0
    %436 = vmatprep.subr.mxu0 %v323
    %437 = vmatpush1.msra.mxu0 %v322
    %438 = vmatprep.subr.mxu0 0.0
    %439 = vmatpush2.msra.mxu0 0.0
    %440 = vmatprep.subr.mxu0 0.0
    %441 = vmatpush2.msra.mxu0 0.0
    %442 = vmatprep.subr.mxu0 0.0
    %443 = vmatpush2.msra.mxu0 0.0
    %444 = vmatprep.subr.mxu0 0.0
    %445 = vmatpush2.msra.mxu0 0.0
    %446 = vmatprep.subr.mxu0 0.0
    %447 = vmatpush2.msra.mxu0 0.0
    %448 = vmatprep.subr.mxu0 0.0
    %449 = vmatpush2.msra.mxu0 0.0
    %450 = vmatprep.subr.mxu0 0.0
    %451 = vmatpush2.msra.mxu0 0.0
    %452 = vmatprep.subr.mxu0 0.0
    %453 = vmatpush2.msra.mxu0 0.0
    %454 = vmatprep.subr.mxu0 0.0
    %455 = vmatpush2.msra.mxu0 0.0
    %456 = vmatprep.subr.mxu0 0.0
    %457 = vmatpush2.msra.mxu0 0.0
    %458 = vmatprep.subr.mxu0 0.0
    %459 = vmatpush2.msra.mxu0 0.0
    %460 = vmatprep.subr.mxu0 0.0
    %461 = vmatpush2.msra.mxu0 0.0
    %462 = vmatprep.subr.mxu0 0.0
    %463 = vmatpush2.msra.mxu0 0.0
    %464 = vmatprep.subr.mxu0 0.0
    %465 = vmatpush2.msra.mxu0 0.0
    %466 = vmatprep.subr.mxu0 0.0
    %467 = vmatpush2.msra.mxu0 0.0
    %468 = vmatprep.subr.mxu0 0.0
    %469 = vmatpush2.msra.mxu0 0.0
    %470 = vmatprep.mubr.f32.mxu0 0.0
    %471 = vmatmul.mubr.f32.gmra.mxu0 %v333
    %v472 = vpop.f32.mrf.mxu0
    %v473 = vadd.f32 %v230, %v472
    %v474 = vpop.f32.mrf.mxu0
    %v475 = vadd.f32 %v232, %v474
    %476 = vdwg.mxu0
    %477 = vmatprep.subr.mxu0 0.0
    %478 = vmatpush1.msra.mxu0 0.0
    %479 = vmatprep.subr.mxu0 0.0
    %480 = vmatpush1.msra.mxu0 0.0
    %481 = vmatprep.subr.mxu0 0.0
    %482 = vmatpush1.msra.mxu0 0.0
    %483 = vmatprep.subr.mxu0 0.0
    %484 = vmatpush1.msra.mxu0 0.0
    %485 = vmatprep.subr.mxu0 0.0
    %486 = vmatpush1.msra.mxu0 0.0
    %487 = vmatprep.subr.mxu0 0.0
    %488 = vmatpush1.msra.mxu0 0.0
    %489 = vmatprep.subr.mxu0 0.0
    %490 = vmatpush1.msra.mxu0 0.0
    %491 = vmatprep.subr.mxu0 0.0
    %492 = vmatpush1.msra.mxu0 0.0
    %493 = vmatprep.subr.mxu0 0.0
    %494 = vmatpush1.msra.mxu0 0.0
    %495 = vmatprep.subr.mxu0 0.0
    %496 = vmatpush1.msra.mxu0 0.0
    %497 = vmatprep.subr.mxu0 0.0
    %498 = vmatpush1.msra.mxu0 0.0
    %499 = vmatprep.subr.mxu0 0.0
    %500 = vmatpush1.msra.mxu0 0.0
    %501 = vmatprep.subr.mxu0 0.0
    %502 = vmatpush1.msra.mxu0 0.0
    %503 = vmatprep.subr.mxu0 0.0
    %504 = vmatpush1.msra.mxu0 0.0
    %505 = vmatprep.subr.mxu0 0.0
    %506 = vmatpush1.msra.mxu0 0.0
    %507 = vmatprep.subr.mxu0 %v325
    %508 = vmatpush1.msra.mxu0 %v324
    %509 = vmatprep.subr.mxu0 0.0
    %510 = vmatpush2.msra.mxu0 0.0
    %511 = vmatprep.subr.mxu0 0.0
    %512 = vmatpush2.msra.mxu0 0.0
    %513 = vmatprep.subr.mxu0 0.0
    %514 = vmatpush2.msra.mxu0 0.0
    %515 = vmatprep.subr.mxu0 0.0
    %516 = vmatpush2.msra.mxu0 0.0
    %517 = vmatprep.subr.mxu0 0.0
    %518 = vmatpush2.msra.mxu0 0.0
    %519 = vmatprep.subr.mxu0 0.0
    %520 = vmatpush2.msra.mxu0 0.0
    %521 = vmatprep.subr.mxu0 0.0
    %522 = vmatpush2.msra.mxu0 0.0
    %523 = vmatprep.subr.mxu0 0.0
    %524 = vmatpush2.msra.mxu0 0.0
    %525 = vmatprep.subr.mxu0 0.0
    %526 = vmatpush2.msra.mxu0 0.0
    %527 = vmatprep.subr.mxu0 0.0
    %528 = vmatpush2.msra.mxu0 0.0
    %529 = vmatprep.subr.mxu0 0.0
    %530 = vmatpush2.msra.mxu0 0.0
    %531 = vmatprep.subr.mxu0 0.0
    %532 = vmatpush2.msra.mxu0 0.0
    %533 = vmatprep.subr.mxu0 0.0
    %534 = vmatpush2.msra.mxu0 0.0
    %535 = vmatprep.subr.mxu0 0.0
    %536 = vmatpush2.msra.mxu0 0.0
    %537 = vmatprep.subr.mxu0 0.0
    %538 = vmatpush2.msra.mxu0 0.0
    %539 = vmatprep.subr.mxu0 0.0
    %540 = vmatpush2.msra.mxu0 0.0
    %541 = vmatprep.mubr.f32.mxu0 0.0
    %542 = vmatmul.mubr.f32.gmra.mxu0 %v333
    %v543 = vpop.f32.mrf.mxu0
    %v544 = vadd.f32 %v301, %v543
    %v545 = vpop.f32.mrf.mxu0
    %v546 = vadd.f32 %v303, %v545
    %547 = vdwg.mxu0
    %s548 = scalar_lea.vmem %s2, 16
    %v549 = vld [vmem:[%s548] sm:$0xff]
    %550 = vrot.lane.b32.xlu0 %v37, 17
    %v551 = vpop.permute.xlu0 %550
    %552 = vrot.lane.b32.xlu0 %v38, 17
    %v553 = vpop.permute.xlu0 %552
    %554 = vrot.lane.b32.xlu0 %v39, 17
    %v555 = vpop.permute.xlu0 %554
    %556 = vrot.lane.b32.xlu0 %v40, 17
    %v557 = vpop.permute.xlu0 %556
    %558 = vrot.lane.b32.xlu0 %v41, 17
    %v559 = vpop.permute.xlu0 %558
    %560 = vrot.lane.b32.xlu0 %v42, 17
    %v561 = vpop.permute.xlu0 %560
    %562 = vrot.lane.b32.xlu0 %v43, 17
    %v563 = vpop.permute.xlu0 %562
    %vm564 = vcmask 138240
    %v565 = vsel %vm564, %v551, %v553
    %v566 = vsel %vm564, %v553, %v555
    %v567 = vsel %vm564, %v555, %v557
    %v568 = vsel %vm564, %v557, %v559
    %v569 = vsel %vm564, %v559, %v561
    %v570 = vsel %vm564, %v561, %v563
    %v578 = vsel %vm88, %v549, 0
    %580 = vmatprep.subr.mxu0 0.0
    %581 = vmatpush1.msra.mxu0 0.0
    %582 = vmatprep.subr.mxu0 0.0
    %583 = vmatpush1.msra.mxu0 0.0
    %584 = vmatprep.subr.mxu0 0.0
    %585 = vmatpush1.msra.mxu0 0.0
    %586 = vmatprep.subr.mxu0 0.0
    %587 = vmatpush1.msra.mxu0 0.0
    %588 = vmatprep.subr.mxu0 0.0
    %589 = vmatpush1.msra.mxu0 0.0
    %590 = vmatprep.subr.mxu0 0.0
    %591 = vmatpush1.msra.mxu0 0.0
    %592 = vmatprep.subr.mxu0 0.0
    %593 = vmatpush1.msra.mxu0 0.0
    %594 = vmatprep.subr.mxu0 0.0
    %595 = vmatpush1.msra.mxu0 0.0
    %596 = vmatprep.subr.mxu0 0.0
    %597 = vmatpush1.msra.mxu0 0.0
    %598 = vmatprep.subr.mxu0 0.0
    %599 = vmatpush1.msra.mxu0 0.0
    %600 = vmatprep.subr.mxu0 0.0
    %601 = vmatpush1.msra.mxu0 0.0
    %602 = vmatprep.subr.mxu0 0.0
    %603 = vmatpush1.msra.mxu0 0.0
    %604 = vmatprep.subr.mxu0 0.0
    %605 = vmatpush1.msra.mxu0 0.0
    %606 = vmatprep.subr.mxu0 0.0
    %607 = vmatpush1.msra.mxu0 0.0
    %608 = vmatprep.subr.mxu0 0.0
    %609 = vmatpush1.msra.mxu0 0.0
    %610 = vmatprep.subr.mxu0 %v566
    %611 = vmatpush1.msra.mxu0 %v565
    %612 = vmatprep.subr.mxu0 0.0
    %613 = vmatpush2.msra.mxu0 0.0
    %614 = vmatprep.subr.mxu0 0.0
    %615 = vmatpush2.msra.mxu0 0.0
    %616 = vmatprep.subr.mxu0 0.0
    %617 = vmatpush2.msra.mxu0 0.0
    %618 = vmatprep.subr.mxu0 0.0
    %619 = vmatpush2.msra.mxu0 0.0
    %620 = vmatprep.subr.mxu0 0.0
    %621 = vmatpush2.msra.mxu0 0.0
    %622 = vmatprep.subr.mxu0 0.0
    %623 = vmatpush2.msra.mxu0 0.0
    %624 = vmatprep.subr.mxu0 0.0
    %625 = vmatpush2.msra.mxu0 0.0
    %626 = vmatprep.subr.mxu0 0.0
    %627 = vmatpush2.msra.mxu0 0.0
    %628 = vmatprep.subr.mxu0 0.0
    %629 = vmatpush2.msra.mxu0 0.0
    %630 = vmatprep.subr.mxu0 0.0
    %631 = vmatpush2.msra.mxu0 0.0
    %632 = vmatprep.subr.mxu0 0.0
    %633 = vmatpush2.msra.mxu0 0.0
    %634 = vmatprep.subr.mxu0 0.0
    %635 = vmatpush2.msra.mxu0 0.0
    %636 = vmatprep.subr.mxu0 0.0
    %637 = vmatpush2.msra.mxu0 0.0
    %638 = vmatprep.subr.mxu0 0.0
    %639 = vmatpush2.msra.mxu0 0.0
    %640 = vmatprep.subr.mxu0 0.0
    %641 = vmatpush2.msra.mxu0 0.0
    %642 = vmatprep.subr.mxu0 0.0
    %643 = vmatpush2.msra.mxu0 0.0
    %644 = vmatprep.mubr.f32.mxu0 0.0
    %645 = vmatmul.mubr.f32.gmra.mxu0 %v578
    %v646 = vpop.f32.mrf.mxu0
    %v647 = vadd.f32 0.0, %v646
    %v648 = vpop.f32.mrf.mxu0
    %v649 = vadd.f32 0.0, %v648
    %650 = vdwg.mxu0
    %651 = vmatprep.subr.mxu0 0.0
    %652 = vmatpush1.msra.mxu0 0.0
    %653 = vmatprep.subr.mxu0 0.0
    %654 = vmatpush1.msra.mxu0 0.0
    %655 = vmatprep.subr.mxu0 0.0
    %656 = vmatpush1.msra.mxu0 0.0
    %657 = vmatprep.subr.mxu0 0.0
    %658 = vmatpush1.msra.mxu0 0.0
    %659 = vmatprep.subr.mxu0 0.0
    %660 = vmatpush1.msra.mxu0 0.0
    %661 = vmatprep.subr.mxu0 0.0
    %662 = vmatpush1.msra.mxu0 0.0
    %663 = vmatprep.subr.mxu0 0.0
    %664 = vmatpush1.msra.mxu0 0.0
    %665 = vmatprep.subr.mxu0 0.0
    %666 = vmatpush1.msra.mxu0 0.0
    %667 = vmatprep.subr.mxu0 0.0
    %668 = vmatpush1.msra.mxu0 0.0
    %669 = vmatprep.subr.mxu0 0.0
    %670 = vmatpush1.msra.mxu0 0.0
    %671 = vmatprep.subr.mxu0 0.0
    %672 = vmatpush1.msra.mxu0 0.0
    %673 = vmatprep.subr.mxu0 0.0
    %674 = vmatpush1.msra.mxu0 0.0
    %675 = vmatprep.subr.mxu0 0.0
    %676 = vmatpush1.msra.mxu0 0.0
    %677 = vmatprep.subr.mxu0 0.0
    %678 = vmatpush1.msra.mxu0 0.0
    %679 = vmatprep.subr.mxu0 0.0
    %680 = vmatpush1.msra.mxu0 0.0
    %681 = vmatprep.subr.mxu0 %v568
    %682 = vmatpush1.msra.mxu0 %v567
    %683 = vmatprep.subr.mxu0 0.0
    %684 = vmatpush2.msra.mxu0 0.0
    %685 = vmatprep.subr.mxu0 0.0
    %686 = vmatpush2.msra.mxu0 0.0
    %687 = vmatprep.subr.mxu0 0.0
    %688 = vmatpush2.msra.mxu0 0.0
    %689 = vmatprep.subr.mxu0 0.0
    %690 = vmatpush2.msra.mxu0 0.0
    %691 = vmatprep.subr.mxu0 0.0
    %692 = vmatpush2.msra.mxu0 0.0
    %693 = vmatprep.subr.mxu0 0.0
    %694 = vmatpush2.msra.mxu0 0.0
    %695 = vmatprep.subr.mxu0 0.0
    %696 = vmatpush2.msra.mxu0 0.0
    %697 = vmatprep.subr.mxu0 0.0
    %698 = vmatpush2.msra.mxu0 0.0
    %699 = vmatprep.subr.mxu0 0.0
    %700 = vmatpush2.msra.mxu0 0.0
    %701 = vmatprep.subr.mxu0 0.0
    %702 = vmatpush2.msra.mxu0 0.0
    %703 = vmatprep.subr.mxu0 0.0
    %704 = vmatpush2.msra.mxu0 0.0
    %705 = vmatprep.subr.mxu0 0.0
    %706 = vmatpush2.msra.mxu0 0.0
    %707 = vmatprep.subr.mxu0 0.0
    %708 = vmatpush2.msra.mxu0 0.0
    %709 = vmatprep.subr.mxu0 0.0
    %710 = vmatpush2.msra.mxu0 0.0
    %711 = vmatprep.subr.mxu0 0.0
    %712 = vmatpush2.msra.mxu0 0.0
    %713 = vmatprep.subr.mxu0 0.0
    %714 = vmatpush2.msra.mxu0 0.0
    %715 = vmatprep.mubr.f32.mxu0 0.0
    %716 = vmatmul.mubr.f32.gmra.mxu0 %v578
    %v717 = vpop.f32.mrf.mxu0
    %v718 = vadd.f32 0.0, %v717
    %v719 = vpop.f32.mrf.mxu0
    %v720 = vadd.f32 0.0, %v719
    %721 = vdwg.mxu0
    %722 = vmatprep.subr.mxu0 0.0
    %723 = vmatpush1.msra.mxu0 0.0
    %724 = vmatprep.subr.mxu0 0.0
    %725 = vmatpush1.msra.mxu0 0.0
    %726 = vmatprep.subr.mxu0 0.0
    %727 = vmatpush1.msra.mxu0 0.0
    %728 = vmatprep.subr.mxu0 0.0
    %729 = vmatpush1.msra.mxu0 0.0
    %730 = vmatprep.subr.mxu0 0.0
    %731 = vmatpush1.msra.mxu0 0.0
    %732 = vmatprep.subr.mxu0 0.0
    %733 = vmatpush1.msra.mxu0 0.0
    %734 = vmatprep.subr.mxu0 0.0
    %735 = vmatpush1.msra.mxu0 0.0
    %736 = vmatprep.subr.mxu0 0.0
    %737 = vmatpush1.msra.mxu0 0.0
    %738 = vmatprep.subr.mxu0 0.0
    %739 = vmatpush1.msra.mxu0 0.0
    %740 = vmatprep.subr.mxu0 0.0
    %741 = vmatpush1.msra.mxu0 0.0
    %742 = vmatprep.subr.mxu0 0.0
    %743 = vmatpush1.msra.mxu0 0.0
    %744 = vmatprep.subr.mxu0 0.0
    %745 = vmatpush1.msra.mxu0 0.0
    %746 = vmatprep.subr.mxu0 0.0
    %747 = vmatpush1.msra.mxu0 0.0
    %748 = vmatprep.subr.mxu0 0.0
    %749 = vmatpush1.msra.mxu0 0.0
    %750 = vmatprep.subr.mxu0 0.0
    %751 = vmatpush1.msra.mxu0 0.0
    %752 = vmatprep.subr.mxu0 %v570
    %753 = vmatpush1.msra.mxu0 %v569
    %754 = vmatprep.subr.mxu0 0.0
    %755 = vmatpush2.msra.mxu0 0.0
    %756 = vmatprep.subr.mxu0 0.0
    %757 = vmatpush2.msra.mxu0 0.0
    %758 = vmatprep.subr.mxu0 0.0
    %759 = vmatpush2.msra.mxu0 0.0
    %760 = vmatprep.subr.mxu0 0.0
    %761 = vmatpush2.msra.mxu0 0.0
    %762 = vmatprep.subr.mxu0 0.0
    %763 = vmatpush2.msra.mxu0 0.0
    %764 = vmatprep.subr.mxu0 0.0
    %765 = vmatpush2.msra.mxu0 0.0
    %766 = vmatprep.subr.mxu0 0.0
    %767 = vmatpush2.msra.mxu0 0.0
    %768 = vmatprep.subr.mxu0 0.0
    %769 = vmatpush2.msra.mxu0 0.0
    %770 = vmatprep.subr.mxu0 0.0
    %771 = vmatpush2.msra.mxu0 0.0
    %772 = vmatprep.subr.mxu0 0.0
    %773 = vmatpush2.msra.mxu0 0.0
    %774 = vmatprep.subr.mxu0 0.0
    %775 = vmatpush2.msra.mxu0 0.0
    %776 = vmatprep.subr.mxu0 0.0
    %777 = vmatpush2.msra.mxu0 0.0
    %778 = vmatprep.subr.mxu0 0.0
    %779 = vmatpush2.msra.mxu0 0.0
    %780 = vmatprep.subr.mxu0 0.0
    %781 = vmatpush2.msra.mxu0 0.0
    %782 = vmatprep.subr.mxu0 0.0
    %783 = vmatpush2.msra.mxu0 0.0
    %784 = vmatprep.subr.mxu0 0.0
    %785 = vmatpush2.msra.mxu0 0.0
    %786 = vmatprep.mubr.f32.mxu0 0.0
    %787 = vmatmul.mubr.f32.gmra.mxu0 %v578
    %v788 = vpop.f32.mrf.mxu0
    %v789 = vadd.f32 0.0, %v788
    %v790 = vpop.f32.mrf.mxu0
    %v791 = vadd.f32 0.0, %v790
    %792 = vdwg.mxu0
    %v793 = vadd.f32 %v402, %v647
    %v794 = vadd.f32 %v404, %v649
    %v795 = vadd.f32 %v473, %v718
    %v796 = vadd.f32 %v475, %v720
    %v797 = vadd.f32 %v544, %v789
    %v798 = vadd.f32 %v546, %v791
    %s799 = scalar_lea.vmem %s2, 24
    %v800 = vld [vmem:[%s799] sm:$0xff]
    %801 = vrot.lane.b32.xlu0 %v37, 1
    %v802 = vpop.permute.xlu0 %801
    %803 = vrot.lane.b32.xlu0 %v38, 1
    %v804 = vpop.permute.xlu0 %803
    %805 = vrot.lane.b32.xlu0 %v39, 1
    %v806 = vpop.permute.xlu0 %805
    %807 = vrot.lane.b32.xlu0 %v40, 1
    %v808 = vpop.permute.xlu0 %807
    %809 = vrot.lane.b32.xlu0 %v41, 1
    %v810 = vpop.permute.xlu0 %809
    %811 = vrot.lane.b32.xlu0 %v42, 1
    %v812 = vpop.permute.xlu0 %811
    %813 = vrot.lane.b32.xlu0 %v43, 1
    %v814 = vpop.permute.xlu0 %813
    %vm815 = vcmask 7168
    %v816 = vsel %vm815, %v802, %v804
    %v817 = vsel %vm815, %v804, %v806
    %v818 = vsel %vm815, %v806, %v808
    %v819 = vsel %vm815, %v808, %v810
    %v820 = vsel %vm815, %v810, %v812
    %v821 = vsel %vm815, %v812, %v814
    %v829 = vsel %vm88, %v800, 0
    %831 = vmatprep.subr.mxu0 0.0
    %832 = vmatpush1.msra.mxu0 0.0
    %833 = vmatprep.subr.mxu0 0.0
    %834 = vmatpush1.msra.mxu0 0.0
    %835 = vmatprep.subr.mxu0 0.0
    %836 = vmatpush1.msra.mxu0 0.0
    %837 = vmatprep.subr.mxu0 0.0
    %838 = vmatpush1.msra.mxu0 0.0
    %839 = vmatprep.subr.mxu0 0.0
    %840 = vmatpush1.msra.mxu0 0.0
    %841 = vmatprep.subr.mxu0 0.0
    %842 = vmatpush1.msra.mxu0 0.0
    %843 = vmatprep.subr.mxu0 0.0
    %844 = vmatpush1.msra.mxu0 0.0
    %845 = vmatprep.subr.mxu0 0.0
    %846 = vmatpush1.msra.mxu0 0.0
    %847 = vmatprep.subr.mxu0 0.0
    %848 = vmatpush1.msra.mxu0 0.0
    %849 = vmatprep.subr.mxu0 0.0
    %850 = vmatpush1.msra.mxu0 0.0
    %851 = vmatprep.subr.mxu0 0.0
    %852 = vmatpush1.msra.mxu0 0.0
    %853 = vmatprep.subr.mxu0 0.0
    %854 = vmatpush1.msra.mxu0 0.0
    %855 = vmatprep.subr.mxu0 0.0
    %856 = vmatpush1.msra.mxu0 0.0
    %857 = vmatprep.subr.mxu0 0.0
    %858 = vmatpush1.msra.mxu0 0.0
    %859 = vmatprep.subr.mxu0 0.0
    %860 = vmatpush1.msra.mxu0 0.0
    %861 = vmatprep.subr.mxu0 %v817
    %862 = vmatpush1.msra.mxu0 %v816
    %863 = vmatprep.subr.mxu0 0.0
    %864 = vmatpush2.msra.mxu0 0.0
    %865 = vmatprep.subr.mxu0 0.0
    %866 = vmatpush2.msra.mxu0 0.0
    %867 = vmatprep.subr.mxu0 0.0
    %868 = vmatpush2.msra.mxu0 0.0
    %869 = vmatprep.subr.mxu0 0.0
    %870 = vmatpush2.msra.mxu0 0.0
    %871 = vmatprep.subr.mxu0 0.0
    %872 = vmatpush2.msra.mxu0 0.0
    %873 = vmatprep.subr.mxu0 0.0
    %874 = vmatpush2.msra.mxu0 0.0
    %875 = vmatprep.subr.mxu0 0.0
    %876 = vmatpush2.msra.mxu0 0.0
    %877 = vmatprep.subr.mxu0 0.0
    %878 = vmatpush2.msra.mxu0 0.0
    %879 = vmatprep.subr.mxu0 0.0
    %880 = vmatpush2.msra.mxu0 0.0
    %881 = vmatprep.subr.mxu0 0.0
    %882 = vmatpush2.msra.mxu0 0.0
    %883 = vmatprep.subr.mxu0 0.0
    %884 = vmatpush2.msra.mxu0 0.0
    %885 = vmatprep.subr.mxu0 0.0
    %886 = vmatpush2.msra.mxu0 0.0
    %887 = vmatprep.subr.mxu0 0.0
    %888 = vmatpush2.msra.mxu0 0.0
    %889 = vmatprep.subr.mxu0 0.0
    %890 = vmatpush2.msra.mxu0 0.0
    %891 = vmatprep.subr.mxu0 0.0
    %892 = vmatpush2.msra.mxu0 0.0
    %893 = vmatprep.subr.mxu0 0.0
    %894 = vmatpush2.msra.mxu0 0.0
    %895 = vmatprep.mubr.f32.mxu0 0.0
    %896 = vmatmul.mubr.f32.gmra.mxu0 %v829
    %v897 = vpop.f32.mrf.mxu0
    %v898 = vadd.f32 0.0, %v897
    %v899 = vpop.f32.mrf.mxu0
    %v900 = vadd.f32 0.0, %v899
    %901 = vdwg.mxu0
    %902 = vmatprep.subr.mxu0 0.0
    %903 = vmatpush1.msra.mxu0 0.0
    %904 = vmatprep.subr.mxu0 0.0
    %905 = vmatpush1.msra.mxu0 0.0
    %906 = vmatprep.subr.mxu0 0.0
    %907 = vmatpush1.msra.mxu0 0.0
    %908 = vmatprep.subr.mxu0 0.0
    %909 = vmatpush1.msra.mxu0 0.0
    %910 = vmatprep.subr.mxu0 0.0
    %911 = vmatpush1.msra.mxu0 0.0
    %912 = vmatprep.subr.mxu0 0.0
    %913 = vmatpush1.msra.mxu0 0.0
    %914 = vmatprep.subr.mxu0 0.0
    %915 = vmatpush1.msra.mxu0 0.0
    %916 = vmatprep.subr.mxu0 0.0
    %917 = vmatpush1.msra.mxu0 0.0
    %918 = vmatprep.subr.mxu0 0.0
    %919 = vmatpush1.msra.mxu0 0.0
    %920 = vmatprep.subr.mxu0 0.0
    %921 = vmatpush1.msra.mxu0 0.0
    %922 = vmatprep.subr.mxu0 0.0
    %923 = vmatpush1.msra.mxu0 0.0
    %924 = vmatprep.subr.mxu0 0.0
    %925 = vmatpush1.msra.mxu0 0.0
    %926 = vmatprep.subr.mxu0 0.0
    %927 = vmatpush1.msra.mxu0 0.0
    %928 = vmatprep.subr.mxu0 0.0
    %929 = vmatpush1.msra.mxu0 0.0
    %930 = vmatprep.subr.mxu0 0.0
    %931 = vmatpush1.msra.mxu0 0.0
    %932 = vmatprep.subr.mxu0 %v819
    %933 = vmatpush1.msra.mxu0 %v818
    %934 = vmatprep.subr.mxu0 0.0
    %935 = vmatpush2.msra.mxu0 0.0
    %936 = vmatprep.subr.mxu0 0.0
    %937 = vmatpush2.msra.mxu0 0.0
    %938 = vmatprep.subr.mxu0 0.0
    %939 = vmatpush2.msra.mxu0 0.0
    %940 = vmatprep.subr.mxu0 0.0
    %941 = vmatpush2.msra.mxu0 0.0
    %942 = vmatprep.subr.mxu0 0.0
    %943 = vmatpush2.msra.mxu0 0.0
    %944 = vmatprep.subr.mxu0 0.0
    %945 = vmatpush2.msra.mxu0 0.0
    %946 = vmatprep.subr.mxu0 0.0
    %947 = vmatpush2.msra.mxu0 0.0
    %948 = vmatprep.subr.mxu0 0.0
    %949 = vmatpush2.msra.mxu0 0.0
    %950 = vmatprep.subr.mxu0 0.0
    %951 = vmatpush2.msra.mxu0 0.0
    %952 = vmatprep.subr.mxu0 0.0
    %953 = vmatpush2.msra.mxu0 0.0
    %954 = vmatprep.subr.mxu0 0.0
    %955 = vmatpush2.msra.mxu0 0.0
    %956 = vmatprep.subr.mxu0 0.0
    %957 = vmatpush2.msra.mxu0 0.0
    %958 = vmatprep.subr.mxu0 0.0
    %959 = vmatpush2.msra.mxu0 0.0
    %960 = vmatprep.subr.mxu0 0.0
    %961 = vmatpush2.msra.mxu0 0.0
    %962 = vmatprep.subr.mxu0 0.0
    %963 = vmatpush2.msra.mxu0 0.0
    %964 = vmatprep.subr.mxu0 0.0
    %965 = vmatpush2.msra.mxu0 0.0
    %966 = vmatprep.mubr.f32.mxu0 0.0
    %967 = vmatmul.mubr.f32.gmra.mxu0 %v829
    %v968 = vpop.f32.mrf.mxu0
    %v969 = vadd.f32 0.0, %v968
    %v970 = vpop.f32.mrf.mxu0
    %v971 = vadd.f32 0.0, %v970
    %972 = vdwg.mxu0
    %973 = vmatprep.subr.mxu0 0.0
    %974 = vmatpush1.msra.mxu0 0.0
    %975 = vmatprep.subr.mxu0 0.0
    %976 = vmatpush1.msra.mxu0 0.0
    %977 = vmatprep.subr.mxu0 0.0
    %978 = vmatpush1.msra.mxu0 0.0
    %979 = vmatprep.subr.mxu0 0.0
    %980 = vmatpush1.msra.mxu0 0.0
    %981 = vmatprep.subr.mxu0 0.0
    %982 = vmatpush1.msra.mxu0 0.0
    %983 = vmatprep.subr.mxu0 0.0
    %984 = vmatpush1.msra.mxu0 0.0
    %985 = vmatprep.subr.mxu0 0.0
    %986 = vmatpush1.msra.mxu0 0.0
    %987 = vmatprep.subr.mxu0 0.0
    %988 = vmatpush1.msra.mxu0 0.0
    %989 = vmatprep.subr.mxu0 0.0
    %990 = vmatpush1.msra.mxu0 0.0
    %991 = vmatprep.subr.mxu0 0.0
    %992 = vmatpush1.msra.mxu0 0.0
    %993 = vmatprep.subr.mxu0 0.0
    %994 = vmatpush1.msra.mxu0 0.0
    %995 = vmatprep.subr.mxu0 0.0
    %996 = vmatpush1.msra.mxu0 0.0
    %997 = vmatprep.subr.mxu0 0.0
    %998 = vmatpush1.msra.mxu0 0.0
    %999 = vmatprep.subr.mxu0 0.0
    %1000 = vmatpush1.msra.mxu0 0.0
    %1001 = vmatprep.subr.mxu0 0.0
    %1002 = vmatpush1.msra.mxu0 0.0
    %1003 = vmatprep.subr.mxu0 %v821
    %1004 = vmatpush1.msra.mxu0 %v820
    %1005 = vmatprep.subr.mxu0 0.0
    %1006 = vmatpush2.msra.mxu0 0.0
    %1007 = vmatprep.subr.mxu0 0.0
    %1008 = vmatpush2.msra.mxu0 0.0
    %1009 = vmatprep.subr.mxu0 0.0
    %1010 = vmatpush2.msra.mxu0 0.0
    %1011 = vmatprep.subr.mxu0 0.0
    %1012 = vmatpush2.msra.mxu0 0.0
    %1013 = vmatprep.subr.mxu0 0.0
    %1014 = vmatpush2.msra.mxu0 0.0
    %1015 = vmatprep.subr.mxu0 0.0
    %1016 = vmatpush2.msra.mxu0 0.0
    %1017 = vmatprep.subr.mxu0 0.0
    %1018 = vmatpush2.msra.mxu0 0.0
    %1019 = vmatprep.subr.mxu0 0.0
    %1020 = vmatpush2.msra.mxu0 0.0
    %1021 = vmatprep.subr.mxu0 0.0
    %1022 = vmatpush2.msra.mxu0 0.0
    %1023 = vmatprep.subr.mxu0 0.0
    %1024 = vmatpush2.msra.mxu0 0.0
    %1025 = vmatprep.subr.mxu0 0.0
    %1026 = vmatpush2.msra.mxu0 0.0
    %1027 = vmatprep.subr.mxu0 0.0
    %1028 = vmatpush2.msra.mxu0 0.0
    %1029 = vmatprep.subr.mxu0 0.0
    %1030 = vmatpush2.msra.mxu0 0.0
    %1031 = vmatprep.subr.mxu0 0.0
    %1032 = vmatpush2.msra.mxu0 0.0
    %1033 = vmatprep.subr.mxu0 0.0
    %1034 = vmatpush2.msra.mxu0 0.0
    %1035 = vmatprep.subr.mxu0 0.0
    %1036 = vmatpush2.msra.mxu0 0.0
    %1037 = vmatprep.mubr.f32.mxu0 0.0
    %1038 = vmatmul.mubr.f32.gmra.mxu0 %v829
    %v1039 = vpop.f32.mrf.mxu0
    %v1040 = vadd.f32 0.0, %v1039
    %v1041 = vpop.f32.mrf.mxu0
    %v1042 = vadd.f32 0.0, %v1041
    %1043 = vdwg.mxu0
    %v1044 = vadd.f32 %v793, %v898
    %v1045 = vadd.f32 %v794, %v900
    %v1046 = vadd.f32 %v795, %v969
    %v1047 = vadd.f32 %v796, %v971
    %v1048 = vadd.f32 %v797, %v1040
    %v1049 = vadd.f32 %v798, %v1042
    %v1050 = vld [vmem:[%s8] sm:$0xff]
    %v1051 = vld [vmem:[%s8 + $0x8] sm:$0xff]
    %v1053 = vsel %vm88, %v1050, 0
    %v1056 = vsel %vm88, %v1051, 0
    %1058 = vmatprep.subr.mxu0 0.0
    %1059 = vmatpush1.msra.mxu0 0.0
    %1060 = vmatprep.subr.mxu0 0.0
    %1061 = vmatpush1.msra.mxu0 0.0
    %1062 = vmatprep.subr.mxu0 0.0
    %1063 = vmatpush1.msra.mxu0 0.0
    %1064 = vmatprep.subr.mxu0 0.0
    %1065 = vmatpush1.msra.mxu0 0.0
    %1066 = vmatprep.subr.mxu0 0.0
    %1067 = vmatpush1.msra.mxu0 0.0
    %1068 = vmatprep.subr.mxu0 0.0
    %1069 = vmatpush1.msra.mxu0 0.0
    %1070 = vmatprep.subr.mxu0 0.0
    %1071 = vmatpush1.msra.mxu0 0.0
    %1072 = vmatprep.subr.mxu0 0.0
    %1073 = vmatpush1.msra.mxu0 0.0
    %1074 = vmatprep.subr.mxu0 0.0
    %1075 = vmatpush1.msra.mxu0 0.0
    %1076 = vmatprep.subr.mxu0 0.0
    %1077 = vmatpush1.msra.mxu0 0.0
    %1078 = vmatprep.subr.mxu0 0.0
    %1079 = vmatpush1.msra.mxu0 0.0
    %1080 = vmatprep.subr.mxu0 0.0
    %1081 = vmatpush1.msra.mxu0 0.0
    %1082 = vmatprep.subr.mxu0 0.0
    %1083 = vmatpush1.msra.mxu0 0.0
    %1084 = vmatprep.subr.mxu0 0.0
    %1085 = vmatpush1.msra.mxu0 0.0
    %1086 = vmatprep.subr.mxu0 0.0
    %1087 = vmatpush1.msra.mxu0 0.0
    %1088 = vmatprep.subr.mxu0 %v39
    %1089 = vmatpush1.msra.mxu0 %v38
    %1090 = vmatprep.subr.mxu0 0.0
    %1091 = vmatpush2.msra.mxu0 0.0
    %1092 = vmatprep.subr.mxu0 0.0
    %1093 = vmatpush2.msra.mxu0 0.0
    %1094 = vmatprep.subr.mxu0 0.0
    %1095 = vmatpush2.msra.mxu0 0.0
    %1096 = vmatprep.subr.mxu0 0.0
    %1097 = vmatpush2.msra.mxu0 0.0
    %1098 = vmatprep.subr.mxu0 0.0
    %1099 = vmatpush2.msra.mxu0 0.0
    %1100 = vmatprep.subr.mxu0 0.0
    %1101 = vmatpush2.msra.mxu0 0.0
    %1102 = vmatprep.subr.mxu0 0.0
    %1103 = vmatpush2.msra.mxu0 0.0
    %1104 = vmatprep.subr.mxu0 0.0
    %1105 = vmatpush2.msra.mxu0 0.0
    %1106 = vmatprep.subr.mxu0 0.0
    %1107 = vmatpush2.msra.mxu0 0.0
    %1108 = vmatprep.subr.mxu0 0.0
    %1109 = vmatpush2.msra.mxu0 0.0
    %1110 = vmatprep.subr.mxu0 0.0
    %1111 = vmatpush2.msra.mxu0 0.0
    %1112 = vmatprep.subr.mxu0 0.0
    %1113 = vmatpush2.msra.mxu0 0.0
    %1114 = vmatprep.subr.mxu0 0.0
    %1115 = vmatpush2.msra.mxu0 0.0
    %1116 = vmatprep.subr.mxu0 0.0
    %1117 = vmatpush2.msra.mxu0 0.0
    %1118 = vmatprep.subr.mxu0 0.0
    %1119 = vmatpush2.msra.mxu0 0.0
    %1120 = vmatprep.subr.mxu0 0.0
    %1121 = vmatpush2.msra.mxu0 0.0
    %1122 = vmatprep.mubr.f32.mxu0 0.0
    %1123 = vmatmul.mubr.f32.gmra.mxu0 %v1053
    %v1124 = vpop.f32.mrf.mxu0
    %v1125 = vadd.f32 0.0, %v1124
    %v1126 = vpop.f32.mrf.mxu0
    %v1127 = vadd.f32 0.0, %v1126
    %1128 = vmatprep.mubr.f32.mxu0 0.0
    %1129 = vmatmul.mubr.f32.gmra.mxu0 %v1056
    %v1130 = vpop.f32.mrf.mxu0
    %v1131 = vadd.f32 0.0, %v1130
    %v1132 = vpop.f32.mrf.mxu0
    %v1133 = vadd.f32 0.0, %v1132
    %1134 = vdwg.mxu0
    %1135 = vmatprep.subr.mxu0 0.0
    %1136 = vmatpush1.msra.mxu0 0.0
    %1137 = vmatprep.subr.mxu0 0.0
    %1138 = vmatpush1.msra.mxu0 0.0
    %1139 = vmatprep.subr.mxu0 0.0
    %1140 = vmatpush1.msra.mxu0 0.0
    %1141 = vmatprep.subr.mxu0 0.0
    %1142 = vmatpush1.msra.mxu0 0.0
    %1143 = vmatprep.subr.mxu0 0.0
    %1144 = vmatpush1.msra.mxu0 0.0
    %1145 = vmatprep.subr.mxu0 0.0
    %1146 = vmatpush1.msra.mxu0 0.0
    %1147 = vmatprep.subr.mxu0 0.0
    %1148 = vmatpush1.msra.mxu0 0.0
    %1149 = vmatprep.subr.mxu0 0.0
    %1150 = vmatpush1.msra.mxu0 0.0
    %1151 = vmatprep.subr.mxu0 0.0
    %1152 = vmatpush1.msra.mxu0 0.0
    %1153 = vmatprep.subr.mxu0 0.0
    %1154 = vmatpush1.msra.mxu0 0.0
    %1155 = vmatprep.subr.mxu0 0.0
    %1156 = vmatpush1.msra.mxu0 0.0
    %1157 = vmatprep.subr.mxu0 0.0
    %1158 = vmatpush1.msra.mxu0 0.0
    %1159 = vmatprep.subr.mxu0 0.0
    %1160 = vmatpush1.msra.mxu0 0.0
    %1161 = vmatprep.subr.mxu0 0.0
    %1162 = vmatpush1.msra.mxu0 0.0
    %1163 = vmatprep.subr.mxu0 0.0
    %1164 = vmatpush1.msra.mxu0 0.0
    %1165 = vmatprep.subr.mxu0 %v41
    %1166 = vmatpush1.msra.mxu0 %v40
    %1167 = vmatprep.subr.mxu0 0.0
    %1168 = vmatpush2.msra.mxu0 0.0
    %1169 = vmatprep.subr.mxu0 0.0
    %1170 = vmatpush2.msra.mxu0 0.0
    %1171 = vmatprep.subr.mxu0 0.0
    %1172 = vmatpush2.msra.mxu0 0.0
    %1173 = vmatprep.subr.mxu0 0.0
    %1174 = vmatpush2.msra.mxu0 0.0
    %1175 = vmatprep.subr.mxu0 0.0
    %1176 = vmatpush2.msra.mxu0 0.0
    %1177 = vmatprep.subr.mxu0 0.0
    %1178 = vmatpush2.msra.mxu0 0.0
    %1179 = vmatprep.subr.mxu0 0.0
    %1180 = vmatpush2.msra.mxu0 0.0
    %1181 = vmatprep.subr.mxu0 0.0
    %1182 = vmatpush2.msra.mxu0 0.0
    %1183 = vmatprep.subr.mxu0 0.0
    %1184 = vmatpush2.msra.mxu0 0.0
    %1185 = vmatprep.subr.mxu0 0.0
    %1186 = vmatpush2.msra.mxu0 0.0
    %1187 = vmatprep.subr.mxu0 0.0
    %1188 = vmatpush2.msra.mxu0 0.0
    %1189 = vmatprep.subr.mxu0 0.0
    %1190 = vmatpush2.msra.mxu0 0.0
    %1191 = vmatprep.subr.mxu0 0.0
    %1192 = vmatpush2.msra.mxu0 0.0
    %1193 = vmatprep.subr.mxu0 0.0
    %1194 = vmatpush2.msra.mxu0 0.0
    %1195 = vmatprep.subr.mxu0 0.0
    %1196 = vmatpush2.msra.mxu0 0.0
    %1197 = vmatprep.subr.mxu0 0.0
    %1198 = vmatpush2.msra.mxu0 0.0
    %1199 = vmatprep.mubr.f32.mxu0 0.0
    %1200 = vmatmul.mubr.f32.gmra.mxu0 %v1053
    %v1201 = vpop.f32.mrf.mxu0
    %v1202 = vadd.f32 0.0, %v1201
    %v1203 = vpop.f32.mrf.mxu0
    %v1204 = vadd.f32 0.0, %v1203
    %1205 = vmatprep.mubr.f32.mxu0 0.0
    %1206 = vmatmul.mubr.f32.gmra.mxu0 %v1056
    %v1207 = vpop.f32.mrf.mxu0
    %v1208 = vadd.f32 0.0, %v1207
    %v1209 = vpop.f32.mrf.mxu0
    %v1210 = vadd.f32 0.0, %v1209
    %1211 = vdwg.mxu0
    %1212 = vmatprep.subr.mxu0 0.0
    %1213 = vmatpush1.msra.mxu0 0.0
    %1214 = vmatprep.subr.mxu0 0.0
    %1215 = vmatpush1.msra.mxu0 0.0
    %1216 = vmatprep.subr.mxu0 0.0
    %1217 = vmatpush1.msra.mxu0 0.0
    %1218 = vmatprep.subr.mxu0 0.0
    %1219 = vmatpush1.msra.mxu0 0.0
    %1220 = vmatprep.subr.mxu0 0.0
    %1221 = vmatpush1.msra.mxu0 0.0
    %1222 = vmatprep.subr.mxu0 0.0
    %1223 = vmatpush1.msra.mxu0 0.0
    %1224 = vmatprep.subr.mxu0 0.0
    %1225 = vmatpush1.msra.mxu0 0.0
    %1226 = vmatprep.subr.mxu0 0.0
    %1227 = vmatpush1.msra.mxu0 0.0
    %1228 = vmatprep.subr.mxu0 0.0
    %1229 = vmatpush1.msra.mxu0 0.0
    %1230 = vmatprep.subr.mxu0 0.0
    %1231 = vmatpush1.msra.mxu0 0.0
    %1232 = vmatprep.subr.mxu0 0.0
    %1233 = vmatpush1.msra.mxu0 0.0
    %1234 = vmatprep.subr.mxu0 0.0
    %1235 = vmatpush1.msra.mxu0 0.0
    %1236 = vmatprep.subr.mxu0 0.0
    %1237 = vmatpush1.msra.mxu0 0.0
    %1238 = vmatprep.subr.mxu0 0.0
    %1239 = vmatpush1.msra.mxu0 0.0
    %1240 = vmatprep.subr.mxu0 0.0
    %1241 = vmatpush1.msra.mxu0 0.0
    %1242 = vmatprep.subr.mxu0 %v43
    %1243 = vmatpush1.msra.mxu0 %v42
    %1244 = vmatprep.subr.mxu0 0.0
    %1245 = vmatpush2.msra.mxu0 0.0
    %1246 = vmatprep.subr.mxu0 0.0
    %1247 = vmatpush2.msra.mxu0 0.0
    %1248 = vmatprep.subr.mxu0 0.0
    %1249 = vmatpush2.msra.mxu0 0.0
    %1250 = vmatprep.subr.mxu0 0.0
    %1251 = vmatpush2.msra.mxu0 0.0
    %1252 = vmatprep.subr.mxu0 0.0
    %1253 = vmatpush2.msra.mxu0 0.0
    %1254 = vmatprep.subr.mxu0 0.0
    %1255 = vmatpush2.msra.mxu0 0.0
    %1256 = vmatprep.subr.mxu0 0.0
    %1257 = vmatpush2.msra.mxu0 0.0
    %1258 = vmatprep.subr.mxu0 0.0
    %1259 = vmatpush2.msra.mxu0 0.0
    %1260 = vmatprep.subr.mxu0 0.0
    %1261 = vmatpush2.msra.mxu0 0.0
    %1262 = vmatprep.subr.mxu0 0.0
    %1263 = vmatpush2.msra.mxu0 0.0
    %1264 = vmatprep.subr.mxu0 0.0
    %1265 = vmatpush2.msra.mxu0 0.0
    %1266 = vmatprep.subr.mxu0 0.0
    %1267 = vmatpush2.msra.mxu0 0.0
    %1268 = vmatprep.subr.mxu0 0.0
    %1269 = vmatpush2.msra.mxu0 0.0
    %1270 = vmatprep.subr.mxu0 0.0
    %1271 = vmatpush2.msra.mxu0 0.0
    %1272 = vmatprep.subr.mxu0 0.0
    %1273 = vmatpush2.msra.mxu0 0.0
    %1274 = vmatprep.subr.mxu0 0.0
    %1275 = vmatpush2.msra.mxu0 0.0
    %1276 = vmatprep.mubr.f32.mxu0 0.0
    %1277 = vmatmul.mubr.f32.gmra.mxu0 %v1053
    %v1278 = vpop.f32.mrf.mxu0
    %v1279 = vadd.f32 0.0, %v1278
    %v1280 = vpop.f32.mrf.mxu0
    %v1281 = vadd.f32 0.0, %v1280
    %1282 = vmatprep.mubr.f32.mxu0 0.0
    %1283 = vmatmul.mubr.f32.gmra.mxu0 %v1056
    %v1284 = vpop.f32.mrf.mxu0
    %v1285 = vadd.f32 0.0, %v1284
    %v1286 = vpop.f32.mrf.mxu0
    %v1287 = vadd.f32 0.0, %v1286
    %1288 = vdwg.mxu0
    %v1289 = vld [vmem:[%s9] sm:$0xff]
    %1291 = vset.pattern.permute.xlu0 0
    %1292 = vperm.xlu0 %1291, %v1289
    %v1293 = vpop.permute.xlu0 %1292
    %v1295 = vadd.f32 %v1131, %v1293
    %v1296 = vadd.f32 %v1133, %v1293
    %v1297 = vadd.f32 %v1208, %v1293
    %v1298 = vadd.f32 %v1210, %v1293
    %v1299 = vadd.f32 %v1285, %v1293
    %v1300 = vadd.f32 %v1287, %v1293
    %v1301 = vadd.f32 %v1044, %v1125
    %v1302 = vadd.f32 %v1045, %v1127
    %v1303 = vadd.f32 %v1046, %v1202
    %v1304 = vadd.f32 %v1047, %v1204
    %v1305 = vadd.f32 %v1048, %v1279
    %v1306 = vadd.f32 %v1049, %v1281
    %s1307 = scalar_lea.vmem %s2, 40
    %v1308 = vld [vmem:[%s1307] sm:$0xff]
    %1316 = vrot.lane.b32.xlu0 %v44, 127
    %v1317 = vpop.permute.xlu0 %1316
    %1318 = vrot.lane.b32.xlu0 %v45, 127
    %v1319 = vpop.permute.xlu0 %1318
    %1320 = vrot.lane.b32.xlu0 %v46, 127
    %v1321 = vpop.permute.xlu0 %1320
    %1322 = vrot.lane.b32.xlu0 %v47, 127
    %v1323 = vpop.permute.xlu0 %1322
    %1324 = vrot.lane.b32.xlu0 %v48, 127
    %v1325 = vpop.permute.xlu0 %1324
    %1326 = vrot.lane.b32.xlu0 %v49, 127
    %v1327 = vpop.permute.xlu0 %1326
    %1328 = vrot.lane.b32.xlu0 %v50, 127
    %v1329 = vpop.permute.xlu0 %1328
    %vm1330 = vcmask 1039360
    %v1331 = vsel %vm1330, %v1317, %v1319
    %v1332 = vsel %vm1330, %v1319, %v1321
    %v1333 = vsel %vm1330, %v1321, %v1323
    %v1334 = vsel %vm1330, %v1323, %v1325
    %v1335 = vsel %vm1330, %v1325, %v1327
    %v1336 = vsel %vm1330, %v1327, %v1329
    %v1344 = vsel %vm88, %v1308, 0
    %1346 = vmatprep.subr.mxu0 0.0
    %1347 = vmatpush1.msra.mxu0 0.0
    %1348 = vmatprep.subr.mxu0 0.0
    %1349 = vmatpush1.msra.mxu0 0.0
    %1350 = vmatprep.subr.mxu0 0.0
    %1351 = vmatpush1.msra.mxu0 0.0
    %1352 = vmatprep.subr.mxu0 0.0
    %1353 = vmatpush1.msra.mxu0 0.0
    %1354 = vmatprep.subr.mxu0 0.0
    %1355 = vmatpush1.msra.mxu0 0.0
    %1356 = vmatprep.subr.mxu0 0.0
    %1357 = vmatpush1.msra.mxu0 0.0
    %1358 = vmatprep.subr.mxu0 0.0
    %1359 = vmatpush1.msra.mxu0 0.0
    %1360 = vmatprep.subr.mxu0 0.0
    %1361 = vmatpush1.msra.mxu0 0.0
    %1362 = vmatprep.subr.mxu0 0.0
    %1363 = vmatpush1.msra.mxu0 0.0
    %1364 = vmatprep.subr.mxu0 0.0
    %1365 = vmatpush1.msra.mxu0 0.0
    %1366 = vmatprep.subr.mxu0 0.0
    %1367 = vmatpush1.msra.mxu0 0.0
    %1368 = vmatprep.subr.mxu0 0.0
    %1369 = vmatpush1.msra.mxu0 0.0
    %1370 = vmatprep.subr.mxu0 0.0
    %1371 = vmatpush1.msra.mxu0 0.0
    %1372 = vmatprep.subr.mxu0 0.0
    %1373 = vmatpush1.msra.mxu0 0.0
    %1374 = vmatprep.subr.mxu0 0.0
    %1375 = vmatpush1.msra.mxu0 0.0
    %1376 = vmatprep.subr.mxu0 %v1332
    %1377 = vmatpush1.msra.mxu0 %v1331
    %1378 = vmatprep.subr.mxu0 0.0
    %1379 = vmatpush2.msra.mxu0 0.0
    %1380 = vmatprep.subr.mxu0 0.0
    %1381 = vmatpush2.msra.mxu0 0.0
    %1382 = vmatprep.subr.mxu0 0.0
    %1383 = vmatpush2.msra.mxu0 0.0
    %1384 = vmatprep.subr.mxu0 0.0
    %1385 = vmatpush2.msra.mxu0 0.0
    %1386 = vmatprep.subr.mxu0 0.0
    %1387 = vmatpush2.msra.mxu0 0.0
    %1388 = vmatprep.subr.mxu0 0.0
    %1389 = vmatpush2.msra.mxu0 0.0
    %1390 = vmatprep.subr.mxu0 0.0
    %1391 = vmatpush2.msra.mxu0 0.0
    %1392 = vmatprep.subr.mxu0 0.0
    %1393 = vmatpush2.msra.mxu0 0.0
    %1394 = vmatprep.subr.mxu0 0.0
    %1395 = vmatpush2.msra.mxu0 0.0
    %1396 = vmatprep.subr.mxu0 0.0
    %1397 = vmatpush2.msra.mxu0 0.0
    %1398 = vmatprep.subr.mxu0 0.0
    %1399 = vmatpush2.msra.mxu0 0.0
    %1400 = vmatprep.subr.mxu0 0.0
    %1401 = vmatpush2.msra.mxu0 0.0
    %1402 = vmatprep.subr.mxu0 0.0
    %1403 = vmatpush2.msra.mxu0 0.0
    %1404 = vmatprep.subr.mxu0 0.0
    %1405 = vmatpush2.msra.mxu0 0.0
    %1406 = vmatprep.subr.mxu0 0.0
    %1407 = vmatpush2.msra.mxu0 0.0
    %1408 = vmatprep.subr.mxu0 0.0
    %1409 = vmatpush2.msra.mxu0 0.0
    %1410 = vmatprep.mubr.f32.mxu0 0.0
    %1411 = vmatmul.mubr.f32.gmra.mxu0 %v1344
    %v1412 = vpop.f32.mrf.mxu0
    %v1413 = vadd.f32 0.0, %v1412
    %v1414 = vpop.f32.mrf.mxu0
    %v1415 = vadd.f32 0.0, %v1414
    %1416 = vdwg.mxu0
    %1417 = vmatprep.subr.mxu0 0.0
    %1418 = vmatpush1.msra.mxu0 0.0
    %1419 = vmatprep.subr.mxu0 0.0
    %1420 = vmatpush1.msra.mxu0 0.0
    %1421 = vmatprep.subr.mxu0 0.0
    %1422 = vmatpush1.msra.mxu0 0.0
    %1423 = vmatprep.subr.mxu0 0.0
    %1424 = vmatpush1.msra.mxu0 0.0
    %1425 = vmatprep.subr.mxu0 0.0
    %1426 = vmatpush1.msra.mxu0 0.0
    %1427 = vmatprep.subr.mxu0 0.0
    %1428 = vmatpush1.msra.mxu0 0.0
    %1429 = vmatprep.subr.mxu0 0.0
    %1430 = vmatpush1.msra.mxu0 0.0
    %1431 = vmatprep.subr.mxu0 0.0
    %1432 = vmatpush1.msra.mxu0 0.0
    %1433 = vmatprep.subr.mxu0 0.0
    %1434 = vmatpush1.msra.mxu0 0.0
    %1435 = vmatprep.subr.mxu0 0.0
    %1436 = vmatpush1.msra.mxu0 0.0
    %1437 = vmatprep.subr.mxu0 0.0
    %1438 = vmatpush1.msra.mxu0 0.0
    %1439 = vmatprep.subr.mxu0 0.0
    %1440 = vmatpush1.msra.mxu0 0.0
    %1441 = vmatprep.subr.mxu0 0.0
    %1442 = vmatpush1.msra.mxu0 0.0
    %1443 = vmatprep.subr.mxu0 0.0
    %1444 = vmatpush1.msra.mxu0 0.0
    %1445 = vmatprep.subr.mxu0 0.0
    %1446 = vmatpush1.msra.mxu0 0.0
    %1447 = vmatprep.subr.mxu0 %v1334
    %1448 = vmatpush1.msra.mxu0 %v1333
    %1449 = vmatprep.subr.mxu0 0.0
    %1450 = vmatpush2.msra.mxu0 0.0
    %1451 = vmatprep.subr.mxu0 0.0
    %1452 = vmatpush2.msra.mxu0 0.0
    %1453 = vmatprep.subr.mxu0 0.0
    %1454 = vmatpush2.msra.mxu0 0.0
    %1455 = vmatprep.subr.mxu0 0.0
    %1456 = vmatpush2.msra.mxu0 0.0
    %1457 = vmatprep.subr.mxu0 0.0
    %1458 = vmatpush2.msra.mxu0 0.0
    %1459 = vmatprep.subr.mxu0 0.0
    %1460 = vmatpush2.msra.mxu0 0.0
    %1461 = vmatprep.subr.mxu0 0.0
    %1462 = vmatpush2.msra.mxu0 0.0
    %1463 = vmatprep.subr.mxu0 0.0
    %1464 = vmatpush2.msra.mxu0 0.0
    %1465 = vmatprep.subr.mxu0 0.0
    %1466 = vmatpush2.msra.mxu0 0.0
    %1467 = vmatprep.subr.mxu0 0.0
    %1468 = vmatpush2.msra.mxu0 0.0
    %1469 = vmatprep.subr.mxu0 0.0
    %1470 = vmatpush2.msra.mxu0 0.0
    %1471 = vmatprep.subr.mxu0 0.0
    %1472 = vmatpush2.msra.mxu0 0.0
    %1473 = vmatprep.subr.mxu0 0.0
    %1474 = vmatpush2.msra.mxu0 0.0
    %1475 = vmatprep.subr.mxu0 0.0
    %1476 = vmatpush2.msra.mxu0 0.0
    %1477 = vmatprep.subr.mxu0 0.0
    %1478 = vmatpush2.msra.mxu0 0.0
    %1479 = vmatprep.subr.mxu0 0.0
    %1480 = vmatpush2.msra.mxu0 0.0
    %1481 = vmatprep.mubr.f32.mxu0 0.0
    %1482 = vmatmul.mubr.f32.gmra.mxu0 %v1344
    %v1483 = vpop.f32.mrf.mxu0
    %v1484 = vadd.f32 0.0, %v1483
    %v1485 = vpop.f32.mrf.mxu0
    %v1486 = vadd.f32 0.0, %v1485
    %1487 = vdwg.mxu0
    %1488 = vmatprep.subr.mxu0 0.0
    %1489 = vmatpush1.msra.mxu0 0.0
    %1490 = vmatprep.subr.mxu0 0.0
    %1491 = vmatpush1.msra.mxu0 0.0
    %1492 = vmatprep.subr.mxu0 0.0
    %1493 = vmatpush1.msra.mxu0 0.0
    %1494 = vmatprep.subr.mxu0 0.0
    %1495 = vmatpush1.msra.mxu0 0.0
    %1496 = vmatprep.subr.mxu0 0.0
    %1497 = vmatpush1.msra.mxu0 0.0
    %1498 = vmatprep.subr.mxu0 0.0
    %1499 = vmatpush1.msra.mxu0 0.0
    %1500 = vmatprep.subr.mxu0 0.0
    %1501 = vmatpush1.msra.mxu0 0.0
    %1502 = vmatprep.subr.mxu0 0.0
    %1503 = vmatpush1.msra.mxu0 0.0
    %1504 = vmatprep.subr.mxu0 0.0
    %1505 = vmatpush1.msra.mxu0 0.0
    %1506 = vmatprep.subr.mxu0 0.0
    %1507 = vmatpush1.msra.mxu0 0.0
    %1508 = vmatprep.subr.mxu0 0.0
    %1509 = vmatpush1.msra.mxu0 0.0
    %1510 = vmatprep.subr.mxu0 0.0
    %1511 = vmatpush1.msra.mxu0 0.0
    %1512 = vmatprep.subr.mxu0 0.0
    %1513 = vmatpush1.msra.mxu0 0.0
    %1514 = vmatprep.subr.mxu0 0.0
    %1515 = vmatpush1.msra.mxu0 0.0
    %1516 = vmatprep.subr.mxu0 0.0
    %1517 = vmatpush1.msra.mxu0 0.0
    %1518 = vmatprep.subr.mxu0 %v1336
    %1519 = vmatpush1.msra.mxu0 %v1335
    %1520 = vmatprep.subr.mxu0 0.0
    %1521 = vmatpush2.msra.mxu0 0.0
    %1522 = vmatprep.subr.mxu0 0.0
    %1523 = vmatpush2.msra.mxu0 0.0
    %1524 = vmatprep.subr.mxu0 0.0
    %1525 = vmatpush2.msra.mxu0 0.0
    %1526 = vmatprep.subr.mxu0 0.0
    %1527 = vmatpush2.msra.mxu0 0.0
    %1528 = vmatprep.subr.mxu0 0.0
    %1529 = vmatpush2.msra.mxu0 0.0
    %1530 = vmatprep.subr.mxu0 0.0
    %1531 = vmatpush2.msra.mxu0 0.0
    %1532 = vmatprep.subr.mxu0 0.0
    %1533 = vmatpush2.msra.mxu0 0.0
    %1534 = vmatprep.subr.mxu0 0.0
    %1535 = vmatpush2.msra.mxu0 0.0
    %1536 = vmatprep.subr.mxu0 0.0
    %1537 = vmatpush2.msra.mxu0 0.0
    %1538 = vmatprep.subr.mxu0 0.0
    %1539 = vmatpush2.msra.mxu0 0.0
    %1540 = vmatprep.subr.mxu0 0.0
    %1541 = vmatpush2.msra.mxu0 0.0
    %1542 = vmatprep.subr.mxu0 0.0
    %1543 = vmatpush2.msra.mxu0 0.0
    %1544 = vmatprep.subr.mxu0 0.0
    %1545 = vmatpush2.msra.mxu0 0.0
    %1546 = vmatprep.subr.mxu0 0.0
    %1547 = vmatpush2.msra.mxu0 0.0
    %1548 = vmatprep.subr.mxu0 0.0
    %1549 = vmatpush2.msra.mxu0 0.0
    %1550 = vmatprep.subr.mxu0 0.0
    %1551 = vmatpush2.msra.mxu0 0.0
    %1552 = vmatprep.mubr.f32.mxu0 0.0
    %1553 = vmatmul.mubr.f32.gmra.mxu0 %v1344
    %v1554 = vpop.f32.mrf.mxu0
    %v1555 = vadd.f32 0.0, %v1554
    %v1556 = vpop.f32.mrf.mxu0
    %v1557 = vadd.f32 0.0, %v1556
    %1558 = vdwg.mxu0
    %v1559 = vadd.f32 %v1301, %v1413
    %v1560 = vadd.f32 %v1302, %v1415
    %v1561 = vadd.f32 %v1303, %v1484
    %v1562 = vadd.f32 %v1304, %v1486
    %v1563 = vadd.f32 %v1305, %v1555
    %v1564 = vadd.f32 %v1306, %v1557
    %s1565 = scalar_lea.vmem %s2, 48
    %v1566 = vld [vmem:[%s1565] sm:$0xff]
    %1567 = vrot.lane.b32.xlu0 %v44, 111
    %v1568 = vpop.permute.xlu0 %1567
    %1569 = vrot.lane.b32.xlu0 %v45, 111
    %v1570 = vpop.permute.xlu0 %1569
    %1571 = vrot.lane.b32.xlu0 %v46, 111
    %v1572 = vpop.permute.xlu0 %1571
    %1573 = vrot.lane.b32.xlu0 %v47, 111
    %v1574 = vpop.permute.xlu0 %1573
    %1575 = vrot.lane.b32.xlu0 %v48, 111
    %v1576 = vpop.permute.xlu0 %1575
    %1577 = vrot.lane.b32.xlu0 %v49, 111
    %v1578 = vpop.permute.xlu0 %1577
    %1579 = vrot.lane.b32.xlu0 %v50, 111
    %v1580 = vpop.permute.xlu0 %1579
    %vm1581 = vcmask 908288
    %v1582 = vsel %vm1581, %v1568, %v1570
    %v1583 = vsel %vm1581, %v1570, %v1572
    %v1584 = vsel %vm1581, %v1572, %v1574
    %v1585 = vsel %vm1581, %v1574, %v1576
    %v1586 = vsel %vm1581, %v1576, %v1578
    %v1587 = vsel %vm1581, %v1578, %v1580
    %v1595 = vsel %vm88, %v1566, 0
    %1597 = vmatprep.subr.mxu0 0.0
    %1598 = vmatpush1.msra.mxu0 0.0
    %1599 = vmatprep.subr.mxu0 0.0
    %1600 = vmatpush1.msra.mxu0 0.0
    %1601 = vmatprep.subr.mxu0 0.0
    %1602 = vmatpush1.msra.mxu0 0.0
    %1603 = vmatprep.subr.mxu0 0.0
    %1604 = vmatpush1.msra.mxu0 0.0
    %1605 = vmatprep.subr.mxu0 0.0
    %1606 = vmatpush1.msra.mxu0 0.0
    %1607 = vmatprep.subr.mxu0 0.0
    %1608 = vmatpush1.msra.mxu0 0.0
    %1609 = vmatprep.subr.mxu0 0.0
    %1610 = vmatpush1.msra.mxu0 0.0
    %1611 = vmatprep.subr.mxu0 0.0
    %1612 = vmatpush1.msra.mxu0 0.0
    %1613 = vmatprep.subr.mxu0 0.0
    %1614 = vmatpush1.msra.mxu0 0.0
    %1615 = vmatprep.subr.mxu0 0.0
    %1616 = vmatpush1.msra.mxu0 0.0
    %1617 = vmatprep.subr.mxu0 0.0
    %1618 = vmatpush1.msra.mxu0 0.0
    %1619 = vmatprep.subr.mxu0 0.0
    %1620 = vmatpush1.msra.mxu0 0.0
    %1621 = vmatprep.subr.mxu0 0.0
    %1622 = vmatpush1.msra.mxu0 0.0
    %1623 = vmatprep.subr.mxu0 0.0
    %1624 = vmatpush1.msra.mxu0 0.0
    %1625 = vmatprep.subr.mxu0 0.0
    %1626 = vmatpush1.msra.mxu0 0.0
    %1627 = vmatprep.subr.mxu0 %v1583
    %1628 = vmatpush1.msra.mxu0 %v1582
    %1629 = vmatprep.subr.mxu0 0.0
    %1630 = vmatpush2.msra.mxu0 0.0
    %1631 = vmatprep.subr.mxu0 0.0
    %1632 = vmatpush2.msra.mxu0 0.0
    %1633 = vmatprep.subr.mxu0 0.0
    %1634 = vmatpush2.msra.mxu0 0.0
    %1635 = vmatprep.subr.mxu0 0.0
    %1636 = vmatpush2.msra.mxu0 0.0
    %1637 = vmatprep.subr.mxu0 0.0
    %1638 = vmatpush2.msra.mxu0 0.0
    %1639 = vmatprep.subr.mxu0 0.0
    %1640 = vmatpush2.msra.mxu0 0.0
    %1641 = vmatprep.subr.mxu0 0.0
    %1642 = vmatpush2.msra.mxu0 0.0
    %1643 = vmatprep.subr.mxu0 0.0
    %1644 = vmatpush2.msra.mxu0 0.0
    %1645 = vmatprep.subr.mxu0 0.0
    %1646 = vmatpush2.msra.mxu0 0.0
    %1647 = vmatprep.subr.mxu0 0.0
    %1648 = vmatpush2.msra.mxu0 0.0
    %1649 = vmatprep.subr.mxu0 0.0
    %1650 = vmatpush2.msra.mxu0 0.0
    %1651 = vmatprep.subr.mxu0 0.0
    %1652 = vmatpush2.msra.mxu0 0.0
    %1653 = vmatprep.subr.mxu0 0.0
    %1654 = vmatpush2.msra.mxu0 0.0
    %1655 = vmatprep.subr.mxu0 0.0
    %1656 = vmatpush2.msra.mxu0 0.0
    %1657 = vmatprep.subr.mxu0 0.0
    %1658 = vmatpush2.msra.mxu0 0.0
    %1659 = vmatprep.subr.mxu0 0.0
    %1660 = vmatpush2.msra.mxu0 0.0
    %1661 = vmatprep.mubr.f32.mxu0 0.0
    %1662 = vmatmul.mubr.f32.gmra.mxu0 %v1595
    %v1663 = vpop.f32.mrf.mxu0
    %v1664 = vadd.f32 0.0, %v1663
    %v1665 = vpop.f32.mrf.mxu0
    %v1666 = vadd.f32 0.0, %v1665
    %1667 = vdwg.mxu0
    %1668 = vmatprep.subr.mxu0 0.0
    %1669 = vmatpush1.msra.mxu0 0.0
    %1670 = vmatprep.subr.mxu0 0.0
    %1671 = vmatpush1.msra.mxu0 0.0
    %1672 = vmatprep.subr.mxu0 0.0
    %1673 = vmatpush1.msra.mxu0 0.0
    %1674 = vmatprep.subr.mxu0 0.0
    %1675 = vmatpush1.msra.mxu0 0.0
    %1676 = vmatprep.subr.mxu0 0.0
    %1677 = vmatpush1.msra.mxu0 0.0
    %1678 = vmatprep.subr.mxu0 0.0
    %1679 = vmatpush1.msra.mxu0 0.0
    %1680 = vmatprep.subr.mxu0 0.0
    %1681 = vmatpush1.msra.mxu0 0.0
    %1682 = vmatprep.subr.mxu0 0.0
    %1683 = vmatpush1.msra.mxu0 0.0
    %1684 = vmatprep.subr.mxu0 0.0
    %1685 = vmatpush1.msra.mxu0 0.0
    %1686 = vmatprep.subr.mxu0 0.0
    %1687 = vmatpush1.msra.mxu0 0.0
    %1688 = vmatprep.subr.mxu0 0.0
    %1689 = vmatpush1.msra.mxu0 0.0
    %1690 = vmatprep.subr.mxu0 0.0
    %1691 = vmatpush1.msra.mxu0 0.0
    %1692 = vmatprep.subr.mxu0 0.0
    %1693 = vmatpush1.msra.mxu0 0.0
    %1694 = vmatprep.subr.mxu0 0.0
    %1695 = vmatpush1.msra.mxu0 0.0
    %1696 = vmatprep.subr.mxu0 0.0
    %1697 = vmatpush1.msra.mxu0 0.0
    %1698 = vmatprep.subr.mxu0 %v1585
    %1699 = vmatpush1.msra.mxu0 %v1584
    %1700 = vmatprep.subr.mxu0 0.0
    %1701 = vmatpush2.msra.mxu0 0.0
    %1702 = vmatprep.subr.mxu0 0.0
    %1703 = vmatpush2.msra.mxu0 0.0
    %1704 = vmatprep.subr.mxu0 0.0
    %1705 = vmatpush2.msra.mxu0 0.0
    %1706 = vmatprep.subr.mxu0 0.0
    %1707 = vmatpush2.msra.mxu0 0.0
    %1708 = vmatprep.subr.mxu0 0.0
    %1709 = vmatpush2.msra.mxu0 0.0
    %1710 = vmatprep.subr.mxu0 0.0
    %1711 = vmatpush2.msra.mxu0 0.0
    %1712 = vmatprep.subr.mxu0 0.0
    %1713 = vmatpush2.msra.mxu0 0.0
    %1714 = vmatprep.subr.mxu0 0.0
    %1715 = vmatpush2.msra.mxu0 0.0
    %1716 = vmatprep.subr.mxu0 0.0
    %1717 = vmatpush2.msra.mxu0 0.0
    %1718 = vmatprep.subr.mxu0 0.0
    %1719 = vmatpush2.msra.mxu0 0.0
    %1720 = vmatprep.subr.mxu0 0.0
    %1721 = vmatpush2.msra.mxu0 0.0
    %1722 = vmatprep.subr.mxu0 0.0
    %1723 = vmatpush2.msra.mxu0 0.0
    %1724 = vmatprep.subr.mxu0 0.0
    %1725 = vmatpush2.msra.mxu0 0.0
    %1726 = vmatprep.subr.mxu0 0.0
    %1727 = vmatpush2.msra.mxu0 0.0
    %1728 = vmatprep.subr.mxu0 0.0
    %1729 = vmatpush2.msra.mxu0 0.0
    %1730 = vmatprep.subr.mxu0 0.0
    %1731 = vmatpush2.msra.mxu0 0.0
    %1732 = vmatprep.mubr.f32.mxu0 0.0
    %1733 = vmatmul.mubr.f32.gmra.mxu0 %v1595
    %v1734 = vpop.f32.mrf.mxu0
    %v1735 = vadd.f32 0.0, %v1734
    %v1736 = vpop.f32.mrf.mxu0
    %v1737 = vadd.f32 0.0, %v1736
    %1738 = vdwg.mxu0
    %1739 = vmatprep.subr.mxu0 0.0
    %1740 = vmatpush1.msra.mxu0 0.0
    %1741 = vmatprep.subr.mxu0 0.0
    %1742 = vmatpush1.msra.mxu0 0.0
    %1743 = vmatprep.subr.mxu0 0.0
    %1744 = vmatpush1.msra.mxu0 0.0
    %1745 = vmatprep.subr.mxu0 0.0
    %1746 = vmatpush1.msra.mxu0 0.0
    %1747 = vmatprep.subr.mxu0 0.0
    %1748 = vmatpush1.msra.mxu0 0.0
    %1749 = vmatprep.subr.mxu0 0.0
    %1750 = vmatpush1.msra.mxu0 0.0
    %1751 = vmatprep.subr.mxu0 0.0
    %1752 = vmatpush1.msra.mxu0 0.0
    %1753 = vmatprep.subr.mxu0 0.0
    %1754 = vmatpush1.msra.mxu0 0.0
    %1755 = vmatprep.subr.mxu0 0.0
    %1756 = vmatpush1.msra.mxu0 0.0
    %1757 = vmatprep.subr.mxu0 0.0
    %1758 = vmatpush1.msra.mxu0 0.0
    %1759 = vmatprep.subr.mxu0 0.0
    %1760 = vmatpush1.msra.mxu0 0.0
    %1761 = vmatprep.subr.mxu0 0.0
    %1762 = vmatpush1.msra.mxu0 0.0
    %1763 = vmatprep.subr.mxu0 0.0
    %1764 = vmatpush1.msra.mxu0 0.0
    %1765 = vmatprep.subr.mxu0 0.0
    %1766 = vmatpush1.msra.mxu0 0.0
    %1767 = vmatprep.subr.mxu0 0.0
    %1768 = vmatpush1.msra.mxu0 0.0
    %1769 = vmatprep.subr.mxu0 %v1587
    %1770 = vmatpush1.msra.mxu0 %v1586
    %1771 = vmatprep.subr.mxu0 0.0
    %1772 = vmatpush2.msra.mxu0 0.0
    %1773 = vmatprep.subr.mxu0 0.0
    %1774 = vmatpush2.msra.mxu0 0.0
    %1775 = vmatprep.subr.mxu0 0.0
    %1776 = vmatpush2.msra.mxu0 0.0
    %1777 = vmatprep.subr.mxu0 0.0
    %1778 = vmatpush2.msra.mxu0 0.0
    %1779 = vmatprep.subr.mxu0 0.0
    %1780 = vmatpush2.msra.mxu0 0.0
    %1781 = vmatprep.subr.mxu0 0.0
    %1782 = vmatpush2.msra.mxu0 0.0
    %1783 = vmatprep.subr.mxu0 0.0
    %1784 = vmatpush2.msra.mxu0 0.0
    %1785 = vmatprep.subr.mxu0 0.0
    %1786 = vmatpush2.msra.mxu0 0.0
    %1787 = vmatprep.subr.mxu0 0.0
    %1788 = vmatpush2.msra.mxu0 0.0
    %1789 = vmatprep.subr.mxu0 0.0
    %1790 = vmatpush2.msra.mxu0 0.0
    %1791 = vmatprep.subr.mxu0 0.0
    %1792 = vmatpush2.msra.mxu0 0.0
    %1793 = vmatprep.subr.mxu0 0.0
    %1794 = vmatpush2.msra.mxu0 0.0
    %1795 = vmatprep.subr.mxu0 0.0
    %1796 = vmatpush2.msra.mxu0 0.0
    %1797 = vmatprep.subr.mxu0 0.0
    %1798 = vmatpush2.msra.mxu0 0.0
    %1799 = vmatprep.subr.mxu0 0.0
    %1800 = vmatpush2.msra.mxu0 0.0
    %1801 = vmatprep.subr.mxu0 0.0
    %1802 = vmatpush2.msra.mxu0 0.0
    %1803 = vmatprep.mubr.f32.mxu0 0.0
    %1804 = vmatmul.mubr.f32.gmra.mxu0 %v1595
    %v1805 = vpop.f32.mrf.mxu0
    %v1806 = vadd.f32 0.0, %v1805
    %v1807 = vpop.f32.mrf.mxu0
    %v1808 = vadd.f32 0.0, %v1807
    %1809 = vdwg.mxu0
    %v1810 = vadd.f32 %v1559, %v1664
    %v1811 = vadd.f32 %v1560, %v1666
    %v1812 = vadd.f32 %v1561, %v1735
    %v1813 = vadd.f32 %v1562, %v1737
    %v1814 = vadd.f32 %v1563, %v1806
    %v1815 = vadd.f32 %v1564, %v1808
    %s1816 = scalar_lea.vmem %s2, 56
    %v1817 = vld [vmem:[%s1816] sm:$0xff]
    %1818 = vrot.lane.b32.xlu0 %v44, 110
    %v1819 = vpop.permute.xlu0 %1818
    %1820 = vrot.lane.b32.xlu0 %v45, 110
    %v1821 = vpop.permute.xlu0 %1820
    %1822 = vrot.lane.b32.xlu0 %v46, 110
    %v1823 = vpop.permute.xlu0 %1822
    %1824 = vrot.lane.b32.xlu0 %v47, 110
    %v1825 = vpop.permute.xlu0 %1824
    %1826 = vrot.lane.b32.xlu0 %v48, 110
    %v1827 = vpop.permute.xlu0 %1826
    %1828 = vrot.lane.b32.xlu0 %v49, 110
    %v1829 = vpop.permute.xlu0 %1828
    %1830 = vrot.lane.b32.xlu0 %v50, 110
    %v1831 = vpop.permute.xlu0 %1830
    %vm1832 = vcmask 900096
    %v1833 = vsel %vm1832, %v1819, %v1821
    %v1834 = vsel %vm1832, %v1821, %v1823
    %v1835 = vsel %vm1832, %v1823, %v1825
    %v1836 = vsel %vm1832, %v1825, %v1827
    %v1837 = vsel %vm1832, %v1827, %v1829
    %v1838 = vsel %vm1832, %v1829, %v1831
    %v1846 = vsel %vm88, %v1817, 0
    %1848 = vmatprep.subr.mxu0 0.0
    %1849 = vmatpush1.msra.mxu0 0.0
    %1850 = vmatprep.subr.mxu0 0.0
    %1851 = vmatpush1.msra.mxu0 0.0
    %1852 = vmatprep.subr.mxu0 0.0
    %1853 = vmatpush1.msra.mxu0 0.0
    %1854 = vmatprep.subr.mxu0 0.0
    %1855 = vmatpush1.msra.mxu0 0.0
    %1856 = vmatprep.subr.mxu0 0.0
    %1857 = vmatpush1.msra.mxu0 0.0
    %1858 = vmatprep.subr.mxu0 0.0
    %1859 = vmatpush1.msra.mxu0 0.0
    %1860 = vmatprep.subr.mxu0 0.0
    %1861 = vmatpush1.msra.mxu0 0.0
    %1862 = vmatprep.subr.mxu0 0.0
    %1863 = vmatpush1.msra.mxu0 0.0
    %1864 = vmatprep.subr.mxu0 0.0
    %1865 = vmatpush1.msra.mxu0 0.0
    %1866 = vmatprep.subr.mxu0 0.0
    %1867 = vmatpush1.msra.mxu0 0.0
    %1868 = vmatprep.subr.mxu0 0.0
    %1869 = vmatpush1.msra.mxu0 0.0
    %1870 = vmatprep.subr.mxu0 0.0
    %1871 = vmatpush1.msra.mxu0 0.0
    %1872 = vmatprep.subr.mxu0 0.0
    %1873 = vmatpush1.msra.mxu0 0.0
    %1874 = vmatprep.subr.mxu0 0.0
    %1875 = vmatpush1.msra.mxu0 0.0
    %1876 = vmatprep.subr.mxu0 0.0
    %1877 = vmatpush1.msra.mxu0 0.0
    %1878 = vmatprep.subr.mxu0 %v1834
    %1879 = vmatpush1.msra.mxu0 %v1833
    %1880 = vmatprep.subr.mxu0 0.0
    %1881 = vmatpush2.msra.mxu0 0.0
    %1882 = vmatprep.subr.mxu0 0.0
    %1883 = vmatpush2.msra.mxu0 0.0
    %1884 = vmatprep.subr.mxu0 0.0
    %1885 = vmatpush2.msra.mxu0 0.0
    %1886 = vmatprep.subr.mxu0 0.0
    %1887 = vmatpush2.msra.mxu0 0.0
    %1888 = vmatprep.subr.mxu0 0.0
    %1889 = vmatpush2.msra.mxu0 0.0
    %1890 = vmatprep.subr.mxu0 0.0
    %1891 = vmatpush2.msra.mxu0 0.0
    %1892 = vmatprep.subr.mxu0 0.0
    %1893 = vmatpush2.msra.mxu0 0.0
    %1894 = vmatprep.subr.mxu0 0.0
    %1895 = vmatpush2.msra.mxu0 0.0
    %1896 = vmatprep.subr.mxu0 0.0
    %1897 = vmatpush2.msra.mxu0 0.0
    %1898 = vmatprep.subr.mxu0 0.0
    %1899 = vmatpush2.msra.mxu0 0.0
    %1900 = vmatprep.subr.mxu0 0.0
    %1901 = vmatpush2.msra.mxu0 0.0
    %1902 = vmatprep.subr.mxu0 0.0
    %1903 = vmatpush2.msra.mxu0 0.0
    %1904 = vmatprep.subr.mxu0 0.0
    %1905 = vmatpush2.msra.mxu0 0.0
    %1906 = vmatprep.subr.mxu0 0.0
    %1907 = vmatpush2.msra.mxu0 0.0
    %1908 = vmatprep.subr.mxu0 0.0
    %1909 = vmatpush2.msra.mxu0 0.0
    %1910 = vmatprep.subr.mxu0 0.0
    %1911 = vmatpush2.msra.mxu0 0.0
    %1912 = vmatprep.mubr.f32.mxu0 0.0
    %1913 = vmatmul.mubr.f32.gmra.mxu0 %v1846
    %v1914 = vpop.f32.mrf.mxu0
    %v1915 = vadd.f32 0.0, %v1914
    %v1916 = vpop.f32.mrf.mxu0
    %v1917 = vadd.f32 0.0, %v1916
    %1918 = vdwg.mxu0
    %1919 = vmatprep.subr.mxu0 0.0
    %1920 = vmatpush1.msra.mxu0 0.0
    %1921 = vmatprep.subr.mxu0 0.0
    %1922 = vmatpush1.msra.mxu0 0.0
    %1923 = vmatprep.subr.mxu0 0.0
    %1924 = vmatpush1.msra.mxu0 0.0
    %1925 = vmatprep.subr.mxu0 0.0
    %1926 = vmatpush1.msra.mxu0 0.0
    %1927 = vmatprep.subr.mxu0 0.0
    %1928 = vmatpush1.msra.mxu0 0.0
    %1929 = vmatprep.subr.mxu0 0.0
    %1930 = vmatpush1.msra.mxu0 0.0
    %1931 = vmatprep.subr.mxu0 0.0
    %1932 = vmatpush1.msra.mxu0 0.0
    %1933 = vmatprep.subr.mxu0 0.0
    %1934 = vmatpush1.msra.mxu0 0.0
    %1935 = vmatprep.subr.mxu0 0.0
    %1936 = vmatpush1.msra.mxu0 0.0
    %1937 = vmatprep.subr.mxu0 0.0
    %1938 = vmatpush1.msra.mxu0 0.0
    %1939 = vmatprep.subr.mxu0 0.0
    %1940 = vmatpush1.msra.mxu0 0.0
    %1941 = vmatprep.subr.mxu0 0.0
    %1942 = vmatpush1.msra.mxu0 0.0
    %1943 = vmatprep.subr.mxu0 0.0
    %1944 = vmatpush1.msra.mxu0 0.0
    %1945 = vmatprep.subr.mxu0 0.0
    %1946 = vmatpush1.msra.mxu0 0.0
    %1947 = vmatprep.subr.mxu0 0.0
    %1948 = vmatpush1.msra.mxu0 0.0
    %1949 = vmatprep.subr.mxu0 %v1836
    %1950 = vmatpush1.msra.mxu0 %v1835
    %1951 = vmatprep.subr.mxu0 0.0
    %1952 = vmatpush2.msra.mxu0 0.0
    %1953 = vmatprep.subr.mxu0 0.0
    %1954 = vmatpush2.msra.mxu0 0.0
    %1955 = vmatprep.subr.mxu0 0.0
    %1956 = vmatpush2.msra.mxu0 0.0
    %1957 = vmatprep.subr.mxu0 0.0
    %1958 = vmatpush2.msra.mxu0 0.0
    %1959 = vmatprep.subr.mxu0 0.0
    %1960 = vmatpush2.msra.mxu0 0.0
    %1961 = vmatprep.subr.mxu0 0.0
    %1962 = vmatpush2.msra.mxu0 0.0
    %1963 = vmatprep.subr.mxu0 0.0
    %1964 = vmatpush2.msra.mxu0 0.0
    %1965 = vmatprep.subr.mxu0 0.0
    %1966 = vmatpush2.msra.mxu0 0.0
    %1967 = vmatprep.subr.mxu0 0.0
    %1968 = vmatpush2.msra.mxu0 0.0
    %1969 = vmatprep.subr.mxu0 0.0
    %1970 = vmatpush2.msra.mxu0 0.0
    %1971 = vmatprep.subr.mxu0 0.0
    %1972 = vmatpush2.msra.mxu0 0.0
    %1973 = vmatprep.subr.mxu0 0.0
    %1974 = vmatpush2.msra.mxu0 0.0
    %1975 = vmatprep.subr.mxu0 0.0
    %1976 = vmatpush2.msra.mxu0 0.0
    %1977 = vmatprep.subr.mxu0 0.0
    %1978 = vmatpush2.msra.mxu0 0.0
    %1979 = vmatprep.subr.mxu0 0.0
    %1980 = vmatpush2.msra.mxu0 0.0
    %1981 = vmatprep.subr.mxu0 0.0
    %1982 = vmatpush2.msra.mxu0 0.0
    %1983 = vmatprep.mubr.f32.mxu0 0.0
    %1984 = vmatmul.mubr.f32.gmra.mxu0 %v1846
    %v1985 = vpop.f32.mrf.mxu0
    %v1986 = vadd.f32 0.0, %v1985
    %v1987 = vpop.f32.mrf.mxu0
    %v1988 = vadd.f32 0.0, %v1987
    %1989 = vdwg.mxu0
    %1990 = vmatprep.subr.mxu0 0.0
    %1991 = vmatpush1.msra.mxu0 0.0
    %1992 = vmatprep.subr.mxu0 0.0
    %1993 = vmatpush1.msra.mxu0 0.0
    %1994 = vmatprep.subr.mxu0 0.0
    %1995 = vmatpush1.msra.mxu0 0.0
    %1996 = vmatprep.subr.mxu0 0.0
    %1997 = vmatpush1.msra.mxu0 0.0
    %1998 = vmatprep.subr.mxu0 0.0
    %1999 = vmatpush1.msra.mxu0 0.0
    %2000 = vmatprep.subr.mxu0 0.0
    %2001 = vmatpush1.msra.mxu0 0.0
    %2002 = vmatprep.subr.mxu0 0.0
    %2003 = vmatpush1.msra.mxu0 0.0
    %2004 = vmatprep.subr.mxu0 0.0
    %2005 = vmatpush1.msra.mxu0 0.0
    %2006 = vmatprep.subr.mxu0 0.0
    %2007 = vmatpush1.msra.mxu0 0.0
    %2008 = vmatprep.subr.mxu0 0.0
    %2009 = vmatpush1.msra.mxu0 0.0
    %2010 = vmatprep.subr.mxu0 0.0
    %2011 = vmatpush1.msra.mxu0 0.0
    %2012 = vmatprep.subr.mxu0 0.0
    %2013 = vmatpush1.msra.mxu0 0.0
    %2014 = vmatprep.subr.mxu0 0.0
    %2015 = vmatpush1.msra.mxu0 0.0
    %2016 = vmatprep.subr.mxu0 0.0
    %2017 = vmatpush1.msra.mxu0 0.0
    %2018 = vmatprep.subr.mxu0 0.0
    %2019 = vmatpush1.msra.mxu0 0.0
    %2020 = vmatprep.subr.mxu0 %v1838
    %2021 = vmatpush1.msra.mxu0 %v1837
    %2022 = vmatprep.subr.mxu0 0.0
    %2023 = vmatpush2.msra.mxu0 0.0
    %2024 = vmatprep.subr.mxu0 0.0
    %2025 = vmatpush2.msra.mxu0 0.0
    %2026 = vmatprep.subr.mxu0 0.0
    %2027 = vmatpush2.msra.mxu0 0.0
    %2028 = vmatprep.subr.mxu0 0.0
    %2029 = vmatpush2.msra.mxu0 0.0
    %2030 = vmatprep.subr.mxu0 0.0
    %2031 = vmatpush2.msra.mxu0 0.0
    %2032 = vmatprep.subr.mxu0 0.0
    %2033 = vmatpush2.msra.mxu0 0.0
    %2034 = vmatprep.subr.mxu0 0.0
    %2035 = vmatpush2.msra.mxu0 0.0
    %2036 = vmatprep.subr.mxu0 0.0
    %2037 = vmatpush2.msra.mxu0 0.0
    %2038 = vmatprep.subr.mxu0 0.0
    %2039 = vmatpush2.msra.mxu0 0.0
    %2040 = vmatprep.subr.mxu0 0.0
    %2041 = vmatpush2.msra.mxu0 0.0
    %2042 = vmatprep.subr.mxu0 0.0
    %2043 = vmatpush2.msra.mxu0 0.0
    %2044 = vmatprep.subr.mxu0 0.0
    %2045 = vmatpush2.msra.mxu0 0.0
    %2046 = vmatprep.subr.mxu0 0.0
    %2047 = vmatpush2.msra.mxu0 0.0
    %2048 = vmatprep.subr.mxu0 0.0
    %2049 = vmatpush2.msra.mxu0 0.0
    %2050 = vmatprep.subr.mxu0 0.0
    %2051 = vmatpush2.msra.mxu0 0.0
    %2052 = vmatprep.subr.mxu0 0.0
    %2053 = vmatpush2.msra.mxu0 0.0
    %2054 = vmatprep.mubr.f32.mxu0 0.0
    %2055 = vmatmul.mubr.f32.gmra.mxu0 %v1846
    %v2056 = vpop.f32.mrf.mxu0
    %v2057 = vadd.f32 0.0, %v2056
    %v2058 = vpop.f32.mrf.mxu0
    %v2059 = vadd.f32 0.0, %v2058
    %2060 = vdwg.mxu0
    %v2061 = vadd.f32 %v1810, %v1915
    %v2062 = vadd.f32 %v1811, %v1917
    %v2063 = vadd.f32 %v1812, %v1986
    %v2064 = vadd.f32 %v1813, %v1988
    %v2065 = vadd.f32 %v1814, %v2057
    %v2066 = vadd.f32 %v1815, %v2059
    %s2067 = scalar_lea.vmem %s2, 64
    %v2068 = vld [vmem:[%s2067] sm:$0xff]
    %2069 = vrot.lane.b32.xlu0 %v44, 109
    %v2070 = vpop.permute.xlu0 %2069
    %2071 = vrot.lane.b32.xlu0 %v45, 109
    %v2072 = vpop.permute.xlu0 %2071
    %2073 = vrot.lane.b32.xlu0 %v46, 109
    %v2074 = vpop.permute.xlu0 %2073
    %2075 = vrot.lane.b32.xlu0 %v47, 109
    %v2076 = vpop.permute.xlu0 %2075
    %2077 = vrot.lane.b32.xlu0 %v48, 109
    %v2078 = vpop.permute.xlu0 %2077
    %2079 = vrot.lane.b32.xlu0 %v49, 109
    %v2080 = vpop.permute.xlu0 %2079
    %2081 = vrot.lane.b32.xlu0 %v50, 109
    %v2082 = vpop.permute.xlu0 %2081
    %vm2083 = vcmask 891904
    %v2084 = vsel %vm2083, %v2070, %v2072
    %v2085 = vsel %vm2083, %v2072, %v2074
    %v2086 = vsel %vm2083, %v2074, %v2076
    %v2087 = vsel %vm2083, %v2076, %v2078
    %v2088 = vsel %vm2083, %v2078, %v2080
    %v2089 = vsel %vm2083, %v2080, %v2082
    %v2097 = vsel %vm88, %v2068, 0
    %2099 = vmatprep.subr.mxu0 0.0
    %2100 = vmatpush1.msra.mxu0 0.0
    %2101 = vmatprep.subr.mxu0 0.0
    %2102 = vmatpush1.msra.mxu0 0.0
    %2103 = vmatprep.subr.mxu0 0.0
    %2104 = vmatpush1.msra.mxu0 0.0
    %2105 = vmatprep.subr.mxu0 0.0
    %2106 = vmatpush1.msra.mxu0 0.0
    %2107 = vmatprep.subr.mxu0 0.0
    %2108 = vmatpush1.msra.mxu0 0.0
    %2109 = vmatprep.subr.mxu0 0.0
    %2110 = vmatpush1.msra.mxu0 0.0
    %2111 = vmatprep.subr.mxu0 0.0
    %2112 = vmatpush1.msra.mxu0 0.0
    %2113 = vmatprep.subr.mxu0 0.0
    %2114 = vmatpush1.msra.mxu0 0.0
    %2115 = vmatprep.subr.mxu0 0.0
    %2116 = vmatpush1.msra.mxu0 0.0
    %2117 = vmatprep.subr.mxu0 0.0
    %2118 = vmatpush1.msra.mxu0 0.0
    %2119 = vmatprep.subr.mxu0 0.0
    %2120 = vmatpush1.msra.mxu0 0.0
    %2121 = vmatprep.subr.mxu0 0.0
    %2122 = vmatpush1.msra.mxu0 0.0
    %2123 = vmatprep.subr.mxu0 0.0
    %2124 = vmatpush1.msra.mxu0 0.0
    %2125 = vmatprep.subr.mxu0 0.0
    %2126 = vmatpush1.msra.mxu0 0.0
    %2127 = vmatprep.subr.mxu0 0.0
    %2128 = vmatpush1.msra.mxu0 0.0
    %2129 = vmatprep.subr.mxu0 %v2085
    %2130 = vmatpush1.msra.mxu0 %v2084
    %2131 = vmatprep.subr.mxu0 0.0
    %2132 = vmatpush2.msra.mxu0 0.0
    %2133 = vmatprep.subr.mxu0 0.0
    %2134 = vmatpush2.msra.mxu0 0.0
    %2135 = vmatprep.subr.mxu0 0.0
    %2136 = vmatpush2.msra.mxu0 0.0
    %2137 = vmatprep.subr.mxu0 0.0
    %2138 = vmatpush2.msra.mxu0 0.0
    %2139 = vmatprep.subr.mxu0 0.0
    %2140 = vmatpush2.msra.mxu0 0.0
    %2141 = vmatprep.subr.mxu0 0.0
    %2142 = vmatpush2.msra.mxu0 0.0
    %2143 = vmatprep.subr.mxu0 0.0
    %2144 = vmatpush2.msra.mxu0 0.0
    %2145 = vmatprep.subr.mxu0 0.0
    %2146 = vmatpush2.msra.mxu0 0.0
    %2147 = vmatprep.subr.mxu0 0.0
    %2148 = vmatpush2.msra.mxu0 0.0
    %2149 = vmatprep.subr.mxu0 0.0
    %2150 = vmatpush2.msra.mxu0 0.0
    %2151 = vmatprep.subr.mxu0 0.0
    %2152 = vmatpush2.msra.mxu0 0.0
    %2153 = vmatprep.subr.mxu0 0.0
    %2154 = vmatpush2.msra.mxu0 0.0
    %2155 = vmatprep.subr.mxu0 0.0
    %2156 = vmatpush2.msra.mxu0 0.0
    %2157 = vmatprep.subr.mxu0 0.0
    %2158 = vmatpush2.msra.mxu0 0.0
    %2159 = vmatprep.subr.mxu0 0.0
    %2160 = vmatpush2.msra.mxu0 0.0
    %2161 = vmatprep.subr.mxu0 0.0
    %2162 = vmatpush2.msra.mxu0 0.0
    %2163 = vmatprep.mubr.f32.mxu0 0.0
    %2164 = vmatmul.mubr.f32.gmra.mxu0 %v2097
    %v2165 = vpop.f32.mrf.mxu0
    %v2166 = vadd.f32 0.0, %v2165
    %v2167 = vpop.f32.mrf.mxu0
    %v2168 = vadd.f32 0.0, %v2167
    %2169 = vdwg.mxu0
    %2170 = vmatprep.subr.mxu0 0.0
    %2171 = vmatpush1.msra.mxu0 0.0
    %2172 = vmatprep.subr.mxu0 0.0
    %2173 = vmatpush1.msra.mxu0 0.0
    %2174 = vmatprep.subr.mxu0 0.0
    %2175 = vmatpush1.msra.mxu0 0.0
    %2176 = vmatprep.subr.mxu0 0.0
    %2177 = vmatpush1.msra.mxu0 0.0
    %2178 = vmatprep.subr.mxu0 0.0
    %2179 = vmatpush1.msra.mxu0 0.0
    %2180 = vmatprep.subr.mxu0 0.0
    %2181 = vmatpush1.msra.mxu0 0.0
    %2182 = vmatprep.subr.mxu0 0.0
    %2183 = vmatpush1.msra.mxu0 0.0
    %2184 = vmatprep.subr.mxu0 0.0
    %2185 = vmatpush1.msra.mxu0 0.0
    %2186 = vmatprep.subr.mxu0 0.0
    %2187 = vmatpush1.msra.mxu0 0.0
    %2188 = vmatprep.subr.mxu0 0.0
    %2189 = vmatpush1.msra.mxu0 0.0
    %2190 = vmatprep.subr.mxu0 0.0
    %2191 = vmatpush1.msra.mxu0 0.0
    %2192 = vmatprep.subr.mxu0 0.0
    %2193 = vmatpush1.msra.mxu0 0.0
    %2194 = vmatprep.subr.mxu0 0.0
    %2195 = vmatpush1.msra.mxu0 0.0
    %2196 = vmatprep.subr.mxu0 0.0
    %2197 = vmatpush1.msra.mxu0 0.0
    %2198 = vmatprep.subr.mxu0 0.0
    %2199 = vmatpush1.msra.mxu0 0.0
    %2200 = vmatprep.subr.mxu0 %v2087
    %2201 = vmatpush1.msra.mxu0 %v2086
    %2202 = vmatprep.subr.mxu0 0.0
    %2203 = vmatpush2.msra.mxu0 0.0
    %2204 = vmatprep.subr.mxu0 0.0
    %2205 = vmatpush2.msra.mxu0 0.0
    %2206 = vmatprep.subr.mxu0 0.0
    %2207 = vmatpush2.msra.mxu0 0.0
    %2208 = vmatprep.subr.mxu0 0.0
    %2209 = vmatpush2.msra.mxu0 0.0
    %2210 = vmatprep.subr.mxu0 0.0
    %2211 = vmatpush2.msra.mxu0 0.0
    %2212 = vmatprep.subr.mxu0 0.0
    %2213 = vmatpush2.msra.mxu0 0.0
    %2214 = vmatprep.subr.mxu0 0.0
    %2215 = vmatpush2.msra.mxu0 0.0
    %2216 = vmatprep.subr.mxu0 0.0
    %2217 = vmatpush2.msra.mxu0 0.0
    %2218 = vmatprep.subr.mxu0 0.0
    %2219 = vmatpush2.msra.mxu0 0.0
    %2220 = vmatprep.subr.mxu0 0.0
    %2221 = vmatpush2.msra.mxu0 0.0
    %2222 = vmatprep.subr.mxu0 0.0
    %2223 = vmatpush2.msra.mxu0 0.0
    %2224 = vmatprep.subr.mxu0 0.0
    %2225 = vmatpush2.msra.mxu0 0.0
    %2226 = vmatprep.subr.mxu0 0.0
    %2227 = vmatpush2.msra.mxu0 0.0
    %2228 = vmatprep.subr.mxu0 0.0
    %2229 = vmatpush2.msra.mxu0 0.0
    %2230 = vmatprep.subr.mxu0 0.0
    %2231 = vmatpush2.msra.mxu0 0.0
    %2232 = vmatprep.subr.mxu0 0.0
    %2233 = vmatpush2.msra.mxu0 0.0
    %2234 = vmatprep.mubr.f32.mxu0 0.0
    %2235 = vmatmul.mubr.f32.gmra.mxu0 %v2097
    %v2236 = vpop.f32.mrf.mxu0
    %v2237 = vadd.f32 0.0, %v2236
    %v2238 = vpop.f32.mrf.mxu0
    %v2239 = vadd.f32 0.0, %v2238
    %2240 = vdwg.mxu0
    %2241 = vmatprep.subr.mxu0 0.0
    %2242 = vmatpush1.msra.mxu0 0.0
    %2243 = vmatprep.subr.mxu0 0.0
    %2244 = vmatpush1.msra.mxu0 0.0
    %2245 = vmatprep.subr.mxu0 0.0
    %2246 = vmatpush1.msra.mxu0 0.0
    %2247 = vmatprep.subr.mxu0 0.0
    %2248 = vmatpush1.msra.mxu0 0.0
    %2249 = vmatprep.subr.mxu0 0.0
    %2250 = vmatpush1.msra.mxu0 0.0
    %2251 = vmatprep.subr.mxu0 0.0
    %2252 = vmatpush1.msra.mxu0 0.0
    %2253 = vmatprep.subr.mxu0 0.0
    %2254 = vmatpush1.msra.mxu0 0.0
    %2255 = vmatprep.subr.mxu0 0.0
    %2256 = vmatpush1.msra.mxu0 0.0
    %2257 = vmatprep.subr.mxu0 0.0
    %2258 = vmatpush1.msra.mxu0 0.0
    %2259 = vmatprep.subr.mxu0 0.0
    %2260 = vmatpush1.msra.mxu0 0.0
    %2261 = vmatprep.subr.mxu0 0.0
    %2262 = vmatpush1.msra.mxu0 0.0
    %2263 = vmatprep.subr.mxu0 0.0
    %2264 = vmatpush1.msra.mxu0 0.0
    %2265 = vmatprep.subr.mxu0 0.0
    %2266 = vmatpush1.msra.mxu0 0.0
    %2267 = vmatprep.subr.mxu0 0.0
    %2268 = vmatpush1.msra.mxu0 0.0
    %2269 = vmatprep.subr.mxu0 0.0
    %2270 = vmatpush1.msra.mxu0 0.0
    %2271 = vmatprep.subr.mxu0 %v2089
    %2272 = vmatpush1.msra.mxu0 %v2088
    %2273 = vmatprep.subr.mxu0 0.0
    %2274 = vmatpush2.msra.mxu0 0.0
    %2275 = vmatprep.subr.mxu0 0.0
    %2276 = vmatpush2.msra.mxu0 0.0
    %2277 = vmatprep.subr.mxu0 0.0
    %2278 = vmatpush2.msra.mxu0 0.0
    %2279 = vmatprep.subr.mxu0 0.0
    %2280 = vmatpush2.msra.mxu0 0.0
    %2281 = vmatprep.subr.mxu0 0.0
    %2282 = vmatpush2.msra.mxu0 0.0
    %2283 = vmatprep.subr.mxu0 0.0
    %2284 = vmatpush2.msra.mxu0 0.0
    %2285 = vmatprep.subr.mxu0 0.0
    %2286 = vmatpush2.msra.mxu0 0.0
    %2287 = vmatprep.subr.mxu0 0.0
    %2288 = vmatpush2.msra.mxu0 0.0
    %2289 = vmatprep.subr.mxu0 0.0
    %2290 = vmatpush2.msra.mxu0 0.0
    %2291 = vmatprep.subr.mxu0 0.0
    %2292 = vmatpush2.msra.mxu0 0.0
    %2293 = vmatprep.subr.mxu0 0.0
    %2294 = vmatpush2.msra.mxu0 0.0
    %2295 = vmatprep.subr.mxu0 0.0
    %2296 = vmatpush2.msra.mxu0 0.0
    %2297 = vmatprep.subr.mxu0 0.0
    %2298 = vmatpush2.msra.mxu0 0.0
    %2299 = vmatprep.subr.mxu0 0.0
    %2300 = vmatpush2.msra.mxu0 0.0
    %2301 = vmatprep.subr.mxu0 0.0
    %2302 = vmatpush2.msra.mxu0 0.0
    %2303 = vmatprep.subr.mxu0 0.0
    %2304 = vmatpush2.msra.mxu0 0.0
    %2305 = vmatprep.mubr.f32.mxu0 0.0
    %2306 = vmatmul.mubr.f32.gmra.mxu0 %v2097
    %v2307 = vpop.f32.mrf.mxu0
    %v2308 = vadd.f32 0.0, %v2307
    %v2309 = vpop.f32.mrf.mxu0
    %v2310 = vadd.f32 0.0, %v2309
    %2311 = vdwg.mxu0
    %v2312 = vadd.f32 %v2061, %v2166
    %v2313 = vadd.f32 %v2062, %v2168
    %v2314 = vadd.f32 %v2063, %v2237
    %v2315 = vadd.f32 %v2064, %v2239
    %v2316 = vadd.f32 %v2065, %v2308
    %v2317 = vadd.f32 %v2066, %v2310
    %v2318 = vld [vmem:[%s3] sm:$0xff]
    %v2319 = vld [vmem:[%s4] sm:$0xff]
    %2321 = vset.pattern.permute.xlu0 19
    %2322 = vperm.xlu0 %2321, %v2312
    %v2323 = vpop.permute.xlu0 %2322
    %v2325 = vsub.f32 %v2312, %v2323
    %v2326 = vsub.f32 %v2313, %v2323
    %v2327 = vsub.f32 %v2314, %v2323
    %v2328 = vsub.f32 %v2315, %v2323
    %v2329 = vsub.f32 %v2316, %v2323
    %v2330 = vsub.f32 %v2317, %v2323
    %v2332 = vlaneseq
    %v2333 = vshrl.u32 %v2332, 7
    %v2334 = vsub.s32 0, %v2333
    %v2335 = vrot.slane %v36, %v2334
    %v2336 = vlaneseq
    %v2337 = vshrl.u32 %v2336, 7
    %v2338 = vsub.s32 1, %v2337
    %v2339 = vrot.slane %v36, %v2338
    %v2340 = vlaneseq
    %v2341 = vshrl.u32 %v2340, 7
    %v2342 = vsub.s32 2, %v2341
    %v2343 = vrot.slane %v36, %v2342
    %v2344 = vlaneseq
    %v2345 = vshrl.u32 %v2344, 7
    %v2346 = vsub.s32 3, %v2345
    %v2347 = vrot.slane %v36, %v2346
    %v2348 = vlaneseq
    %v2349 = vshrl.u32 %v2348, 7
    %v2350 = vsub.s32 4, %v2349
    %v2351 = vrot.slane %v36, %v2350
    %v2352 = vlaneseq
    %v2353 = vshrl.u32 %v2352, 7
    %v2354 = vsub.s32 5, %v2353
    %v2355 = vrot.slane %v36, %v2354
    %v2362 = vmul.f32 %v2325, %v2335
    %v2363 = vmul.f32 %v2326, %v2339
    %v2364 = vmul.f32 %v2327, %v2343
    %v2365 = vmul.f32 %v2328, %v2347
    %v2366 = vmul.f32 %v2329, %v2351
    %v2367 = vmul.f32 %v2330, %v2355
    %v2368 = vadd.f32 %v2362, %v2363
    %v2369 = vadd.f32 %v2368, %v2364
    %v2370 = vadd.f32 %v2369, %v2365
    %v2371 = vadd.f32 %v2370, %v2366
    %v2372 = vadd.f32 %v2371, %v2367
    %2373 = vadd.xlane.f32.xlu0 %v2372
    %v2374 = vpop.xlane.xlu0 %2373
    %v2375 = vmul.f32 %v2362, %v2362
    %v2376 = vmul.f32 %v2363, %v2363
    %v2377 = vmul.f32 %v2364, %v2364
    %v2378 = vmul.f32 %v2365, %v2365
    %v2379 = vmul.f32 %v2366, %v2366
    %v2380 = vmul.f32 %v2367, %v2367
    %v2381 = vadd.f32 %v2375, %v2376
    %v2382 = vadd.f32 %v2381, %v2377
    %v2383 = vadd.f32 %v2382, %v2378
    %v2384 = vadd.f32 %v2383, %v2379
    %v2385 = vadd.f32 %v2384, %v2380
    %2386 = vadd.xlane.f32.xlu0 %v2385
    %v2387 = vpop.xlane.xlu0 %2386
    %v2388 = vmul.f32 %v2374, 0.001953125
    %v2389 = vmul.f32 %v2387, 0.001953125
    %v2390 = vmul.f32 %v2388, %v2388
    %v2391 = vsub.f32 %v2389, %v2390
    %v2392 = vmax.f32 %v2391, 0.0
    %v2393 = vadd.f32 %v2392, 1e-05
    %v2394 = vrsqrt.pop %v2393
    %v2395 = vmul.f32 %v2318, %v2394
    %v2396 = vmul.f32 %v2388, %v2395
    %v2397 = vsub.f32 %v2319, %v2396
    %2399 = vset.pattern.permute.xlu0 0
    %2400 = vperm.xlu0 %2399, %v2395
    %v2401 = vpop.permute.xlu0 %2400
    %v2403 = vmul.f32 %v2325, %v2401
    %v2404 = vmul.f32 %v2326, %v2401
    %v2405 = vmul.f32 %v2327, %v2401
    %v2406 = vmul.f32 %v2328, %v2401
    %v2407 = vmul.f32 %v2329, %v2401
    %v2408 = vmul.f32 %v2330, %v2401
    %2410 = vset.pattern.permute.xlu0 0
    %2411 = vperm.xlu0 %2410, %v2397
    %v2412 = vpop.permute.xlu0 %2411
    %v2414 = vadd.f32 %v2403, %v2412
    %v2415 = vadd.f32 %v2404, %v2412
    %v2416 = vadd.f32 %v2405, %v2412
    %v2417 = vadd.f32 %v2406, %v2412
    %v2418 = vadd.f32 %v2407, %v2412
    %v2419 = vadd.f32 %v2408, %v2412
    %v2420 = vmax.f32 %v2414, 0.0
    %v2421 = vmax.f32 %v2415, 0.0
    %v2422 = vmax.f32 %v2416, 0.0
    %v2423 = vmax.f32 %v2417, 0.0
    %v2424 = vmax.f32 %v2418, 0.0
    %v2425 = vmax.f32 %v2419, 0.0
    %v2426 = vmul.f32 %v2420, %v2335
    %v2427 = vmul.f32 %v2421, %v2339
    %v2428 = vmul.f32 %v2422, %v2343
    %v2429 = vmul.f32 %v2423, %v2347
    %v2430 = vmul.f32 %v2424, %v2351
    %v2431 = vmul.f32 %v2425, %v2355
    %2432 = vst [vmem:[#allocation2] sm:$0xff] 0.0
    %2433 = vst [vmem:[#allocation2 + $0x38] sm:$0xff] 0.0
    %2434 = vst [vmem:[#allocation2 + $0x8] sm:$0xff] %v2426
    %2435 = vst [vmem:[#allocation2 + $0x10] sm:$0xff] %v2427
    %2436 = vst [vmem:[#allocation2 + $0x18] sm:$0xff] %v2428
    %2437 = vst [vmem:[#allocation2 + $0x20] sm:$0xff] %v2429
    %2438 = vst [vmem:[#allocation2 + $0x28] sm:$0xff] %v2430
    %2439 = vst [vmem:[#allocation2 + $0x30] sm:$0xff] %v2431
    %v2440 = vld [vmem:[#allocation2] sm:$0xff]
    %v2441 = vld [vmem:[#allocation2 + $0x8] sm:$0xff]
    %v2442 = vld [vmem:[#allocation2 + $0x10] sm:$0xff]
    %v2443 = vld [vmem:[#allocation2 + $0x18] sm:$0xff]
    %v2444 = vld [vmem:[#allocation2 + $0x20] sm:$0xff]
    %v2445 = vld [vmem:[#allocation2 + $0x28] sm:$0xff]
    %v2446 = vld [vmem:[#allocation2 + $0x30] sm:$0xff]
    %v2447 = vld [vmem:[#allocation2 + $0x8] sm:$0xff]
    %v2448 = vld [vmem:[#allocation2 + $0x10] sm:$0xff]
    %v2449 = vld [vmem:[#allocation2 + $0x18] sm:$0xff]
    %v2450 = vld [vmem:[#allocation2 + $0x20] sm:$0xff]
    %v2451 = vld [vmem:[#allocation2 + $0x28] sm:$0xff]
    %v2452 = vld [vmem:[#allocation2 + $0x30] sm:$0xff]
    %v2453 = vld [vmem:[#allocation2 + $0x38] sm:$0xff]
    %v2454 = vld [vmem:[%s5] sm:$0xff]
    %s2455 = scalar_lea.vmem %s5, 8
    %v2456 = vld [vmem:[%s2455] sm:$0xff]
    %2464 = vrot.lane.b32.xlu0 %v2440, 18
    %v2465 = vpop.permute.xlu0 %2464
    %2466 = vrot.lane.b32.xlu0 %v2441, 18
    %v2467 = vpop.permute.xlu0 %2466
    %2468 = vrot.lane.b32.xlu0 %v2442, 18
    %v2469 = vpop.permute.xlu0 %2468
    %2470 = vrot.lane.b32.xlu0 %v2443, 18
    %v2471 = vpop.permute.xlu0 %2470
    %2472 = vrot.lane.b32.xlu0 %v2444, 18
    %v2473 = vpop.permute.xlu0 %2472
    %2474 = vrot.lane.b32.xlu0 %v2445, 18
    %v2475 = vpop.permute.xlu0 %2474
    %2476 = vrot.lane.b32.xlu0 %v2446, 18
    %v2477 = vpop.permute.xlu0 %2476
    %v2478 = vsel %vm75, %v2465, %v2467
    %v2479 = vsel %vm75, %v2467, %v2469
    %v2480 = vsel %vm75, %v2469, %v2471
    %v2481 = vsel %vm75, %v2471, %v2473
    %v2482 = vsel %vm75, %v2473, %v2475
    %v2483 = vsel %vm75, %v2475, %v2477
    %v2491 = vsel %vm88, %v2456, 0
    %2493 = vmatprep.subr.mxu0 0.0
    %2494 = vmatpush1.msra.mxu0 0.0
    %2495 = vmatprep.subr.mxu0 0.0
    %2496 = vmatpush1.msra.mxu0 0.0
    %2497 = vmatprep.subr.mxu0 0.0
    %2498 = vmatpush1.msra.mxu0 0.0
    %2499 = vmatprep.subr.mxu0 0.0
    %2500 = vmatpush1.msra.mxu0 0.0
    %2501 = vmatprep.subr.mxu0 0.0
    %2502 = vmatpush1.msra.mxu0 0.0
    %2503 = vmatprep.subr.mxu0 0.0
    %2504 = vmatpush1.msra.mxu0 0.0
    %2505 = vmatprep.subr.mxu0 0.0
    %2506 = vmatpush1.msra.mxu0 0.0
    %2507 = vmatprep.subr.mxu0 0.0
    %2508 = vmatpush1.msra.mxu0 0.0
    %2509 = vmatprep.subr.mxu0 0.0
    %2510 = vmatpush1.msra.mxu0 0.0
    %2511 = vmatprep.subr.mxu0 0.0
    %2512 = vmatpush1.msra.mxu0 0.0
    %2513 = vmatprep.subr.mxu0 0.0
    %2514 = vmatpush1.msra.mxu0 0.0
    %2515 = vmatprep.subr.mxu0 0.0
    %2516 = vmatpush1.msra.mxu0 0.0
    %2517 = vmatprep.subr.mxu0 0.0
    %2518 = vmatpush1.msra.mxu0 0.0
    %2519 = vmatprep.subr.mxu0 0.0
    %2520 = vmatpush1.msra.mxu0 0.0
    %2521 = vmatprep.subr.mxu0 0.0
    %2522 = vmatpush1.msra.mxu0 0.0
    %2523 = vmatprep.subr.mxu0 %v2479
    %2524 = vmatpush1.msra.mxu0 %v2478
    %2525 = vmatprep.subr.mxu0 0.0
    %2526 = vmatpush2.msra.mxu0 0.0
    %2527 = vmatprep.subr.mxu0 0.0
    %2528 = vmatpush2.msra.mxu0 0.0
    %2529 = vmatprep.subr.mxu0 0.0
    %2530 = vmatpush2.msra.mxu0 0.0
    %2531 = vmatprep.subr.mxu0 0.0
    %2532 = vmatpush2.msra.mxu0 0.0
    %2533 = vmatprep.subr.mxu0 0.0
    %2534 = vmatpush2.msra.mxu0 0.0
    %2535 = vmatprep.subr.mxu0 0.0
    %2536 = vmatpush2.msra.mxu0 0.0
    %2537 = vmatprep.subr.mxu0 0.0
    %2538 = vmatpush2.msra.mxu0 0.0
    %2539 = vmatprep.subr.mxu0 0.0
    %2540 = vmatpush2.msra.mxu0 0.0
    %2541 = vmatprep.subr.mxu0 0.0
    %2542 = vmatpush2.msra.mxu0 0.0
    %2543 = vmatprep.subr.mxu0 0.0
    %2544 = vmatpush2.msra.mxu0 0.0
    %2545 = vmatprep.subr.mxu0 0.0
    %2546 = vmatpush2.msra.mxu0 0.0
    %2547 = vmatprep.subr.mxu0 0.0
    %2548 = vmatpush2.msra.mxu0 0.0
    %2549 = vmatprep.subr.mxu0 0.0
    %2550 = vmatpush2.msra.mxu0 0.0
    %2551 = vmatprep.subr.mxu0 0.0
    %2552 = vmatpush2.msra.mxu0 0.0
    %2553 = vmatprep.subr.mxu0 0.0
    %2554 = vmatpush2.msra.mxu0 0.0
    %2555 = vmatprep.subr.mxu0 0.0
    %2556 = vmatpush2.msra.mxu0 0.0
    %2557 = vmatprep.mubr.f32.mxu0 0.0
    %2558 = vmatmul.mubr.f32.gmra.mxu0 %v2491
    %v2559 = vpop.f32.mrf.mxu0
    %v2560 = vadd.f32 0.0, %v2559
    %v2561 = vpop.f32.mrf.mxu0
    %v2562 = vadd.f32 0.0, %v2561
    %2563 = vdwg.mxu0
    %2564 = vmatprep.subr.mxu0 0.0
    %2565 = vmatpush1.msra.mxu0 0.0
    %2566 = vmatprep.subr.mxu0 0.0
    %2567 = vmatpush1.msra.mxu0 0.0
    %2568 = vmatprep.subr.mxu0 0.0
    %2569 = vmatpush1.msra.mxu0 0.0
    %2570 = vmatprep.subr.mxu0 0.0
    %2571 = vmatpush1.msra.mxu0 0.0
    %2572 = vmatprep.subr.mxu0 0.0
    %2573 = vmatpush1.msra.mxu0 0.0
    %2574 = vmatprep.subr.mxu0 0.0
    %2575 = vmatpush1.msra.mxu0 0.0
    %2576 = vmatprep.subr.mxu0 0.0
    %2577 = vmatpush1.msra.mxu0 0.0
    %2578 = vmatprep.subr.mxu0 0.0
    %2579 = vmatpush1.msra.mxu0 0.0
    %2580 = vmatprep.subr.mxu0 0.0
    %2581 = vmatpush1.msra.mxu0 0.0
    %2582 = vmatprep.subr.mxu0 0.0
    %2583 = vmatpush1.msra.mxu0 0.0
    %2584 = vmatprep.subr.mxu0 0.0
    %2585 = vmatpush1.msra.mxu0 0.0
    %2586 = vmatprep.subr.mxu0 0.0
    %2587 = vmatpush1.msra.mxu0 0.0
    %2588 = vmatprep.subr.mxu0 0.0
    %2589 = vmatpush1.msra.mxu0 0.0
    %2590 = vmatprep.subr.mxu0 0.0
    %2591 = vmatpush1.msra.mxu0 0.0
    %2592 = vmatprep.subr.mxu0 0.0
    %2593 = vmatpush1.msra.mxu0 0.0
    %2594 = vmatprep.subr.mxu0 %v2481
    %2595 = vmatpush1.msra.mxu0 %v2480
    %2596 = vmatprep.subr.mxu0 0.0
    %2597 = vmatpush2.msra.mxu0 0.0
    %2598 = vmatprep.subr.mxu0 0.0
    %2599 = vmatpush2.msra.mxu0 0.0
    %2600 = vmatprep.subr.mxu0 0.0
    %2601 = vmatpush2.msra.mxu0 0.0
    %2602 = vmatprep.subr.mxu0 0.0
    %2603 = vmatpush2.msra.mxu0 0.0
    %2604 = vmatprep.subr.mxu0 0.0
    %2605 = vmatpush2.msra.mxu0 0.0
    %2606 = vmatprep.subr.mxu0 0.0
    %2607 = vmatpush2.msra.mxu0 0.0
    %2608 = vmatprep.subr.mxu0 0.0
    %2609 = vmatpush2.msra.mxu0 0.0
    %2610 = vmatprep.subr.mxu0 0.0
    %2611 = vmatpush2.msra.mxu0 0.0
    %2612 = vmatprep.subr.mxu0 0.0
    %2613 = vmatpush2.msra.mxu0 0.0
    %2614 = vmatprep.subr.mxu0 0.0
    %2615 = vmatpush2.msra.mxu0 0.0
    %2616 = vmatprep.subr.mxu0 0.0
    %2617 = vmatpush2.msra.mxu0 0.0
    %2618 = vmatprep.subr.mxu0 0.0
    %2619 = vmatpush2.msra.mxu0 0.0
    %2620 = vmatprep.subr.mxu0 0.0
    %2621 = vmatpush2.msra.mxu0 0.0
    %2622 = vmatprep.subr.mxu0 0.0
    %2623 = vmatpush2.msra.mxu0 0.0
    %2624 = vmatprep.subr.mxu0 0.0
    %2625 = vmatpush2.msra.mxu0 0.0
    %2626 = vmatprep.subr.mxu0 0.0
    %2627 = vmatpush2.msra.mxu0 0.0
    %2628 = vmatprep.mubr.f32.mxu0 0.0
    %2629 = vmatmul.mubr.f32.gmra.mxu0 %v2491
    %v2630 = vpop.f32.mrf.mxu0
    %v2631 = vadd.f32 0.0, %v2630
    %v2632 = vpop.f32.mrf.mxu0
    %v2633 = vadd.f32 0.0, %v2632
    %2634 = vdwg.mxu0
    %2635 = vmatprep.subr.mxu0 0.0
    %2636 = vmatpush1.msra.mxu0 0.0
    %2637 = vmatprep.subr.mxu0 0.0
    %2638 = vmatpush1.msra.mxu0 0.0
    %2639 = vmatprep.subr.mxu0 0.0
    %2640 = vmatpush1.msra.mxu0 0.0
    %2641 = vmatprep.subr.mxu0 0.0
    %2642 = vmatpush1.msra.mxu0 0.0
    %2643 = vmatprep.subr.mxu0 0.0
    %2644 = vmatpush1.msra.mxu0 0.0
    %2645 = vmatprep.subr.mxu0 0.0
    %2646 = vmatpush1.msra.mxu0 0.0
    %2647 = vmatprep.subr.mxu0 0.0
    %2648 = vmatpush1.msra.mxu0 0.0
    %2649 = vmatprep.subr.mxu0 0.0
    %2650 = vmatpush1.msra.mxu0 0.0
    %2651 = vmatprep.subr.mxu0 0.0
    %2652 = vmatpush1.msra.mxu0 0.0
    %2653 = vmatprep.subr.mxu0 0.0
    %2654 = vmatpush1.msra.mxu0 0.0
    %2655 = vmatprep.subr.mxu0 0.0
    %2656 = vmatpush1.msra.mxu0 0.0
    %2657 = vmatprep.subr.mxu0 0.0
    %2658 = vmatpush1.msra.mxu0 0.0
    %2659 = vmatprep.subr.mxu0 0.0
    %2660 = vmatpush1.msra.mxu0 0.0
    %2661 = vmatprep.subr.mxu0 0.0
    %2662 = vmatpush1.msra.mxu0 0.0
    %2663 = vmatprep.subr.mxu0 0.0
    %2664 = vmatpush1.msra.mxu0 0.0
    %2665 = vmatprep.subr.mxu0 %v2483
    %2666 = vmatpush1.msra.mxu0 %v2482
    %2667 = vmatprep.subr.mxu0 0.0
    %2668 = vmatpush2.msra.mxu0 0.0
    %2669 = vmatprep.subr.mxu0 0.0
    %2670 = vmatpush2.msra.mxu0 0.0
    %2671 = vmatprep.subr.mxu0 0.0
    %2672 = vmatpush2.msra.mxu0 0.0
    %2673 = vmatprep.subr.mxu0 0.0
    %2674 = vmatpush2.msra.mxu0 0.0
    %2675 = vmatprep.subr.mxu0 0.0
    %2676 = vmatpush2.msra.mxu0 0.0
    %2677 = vmatprep.subr.mxu0 0.0
    %2678 = vmatpush2.msra.mxu0 0.0
    %2679 = vmatprep.subr.mxu0 0.0
    %2680 = vmatpush2.msra.mxu0 0.0
    %2681 = vmatprep.subr.mxu0 0.0
    %2682 = vmatpush2.msra.mxu0 0.0
    %2683 = vmatprep.subr.mxu0 0.0
    %2684 = vmatpush2.msra.mxu0 0.0
    %2685 = vmatprep.subr.mxu0 0.0
    %2686 = vmatpush2.msra.mxu0 0.0
    %2687 = vmatprep.subr.mxu0 0.0
    %2688 = vmatpush2.msra.mxu0 0.0
    %2689 = vmatprep.subr.mxu0 0.0
    %2690 = vmatpush2.msra.mxu0 0.0
    %2691 = vmatprep.subr.mxu0 0.0
    %2692 = vmatpush2.msra.mxu0 0.0
    %2693 = vmatprep.subr.mxu0 0.0
    %2694 = vmatpush2.msra.mxu0 0.0
    %2695 = vmatprep.subr.mxu0 0.0
    %2696 = vmatpush2.msra.mxu0 0.0
    %2697 = vmatprep.subr.mxu0 0.0
    %2698 = vmatpush2.msra.mxu0 0.0
    %2699 = vmatprep.mubr.f32.mxu0 0.0
    %2700 = vmatmul.mubr.f32.gmra.mxu0 %v2491
    %v2701 = vpop.f32.mrf.mxu0
    %v2702 = vadd.f32 0.0, %v2701
    %v2703 = vpop.f32.mrf.mxu0
    %v2704 = vadd.f32 0.0, %v2703
    %2705 = vdwg.mxu0
    %2706 = vrot.lane.b32.xlu0 %v2440, 19
    %v2707 = vpop.permute.xlu0 %2706
    %2708 = vrot.lane.b32.xlu0 %v2441, 19
    %v2709 = vpop.permute.xlu0 %2708
    %2710 = vrot.lane.b32.xlu0 %v2442, 19
    %v2711 = vpop.permute.xlu0 %2710
    %2712 = vrot.lane.b32.xlu0 %v2443, 19
    %v2713 = vpop.permute.xlu0 %2712
    %2714 = vrot.lane.b32.xlu0 %v2444, 19
    %v2715 = vpop.permute.xlu0 %2714
    %2716 = vrot.lane.b32.xlu0 %v2445, 19
    %v2717 = vpop.permute.xlu0 %2716
    %2718 = vrot.lane.b32.xlu0 %v2446, 19
    %v2719 = vpop.permute.xlu0 %2718
    %v2720 = vsel %vm319, %v2707, %v2709
    %v2721 = vsel %vm319, %v2709, %v2711
    %v2722 = vsel %vm319, %v2711, %v2713
    %v2723 = vsel %vm319, %v2713, %v2715
    %v2724 = vsel %vm319, %v2715, %v2717
    %v2725 = vsel %vm319, %v2717, %v2719
    %v2733 = vsel %vm88, %v2454, 0
    %2735 = vmatprep.subr.mxu0 0.0
    %2736 = vmatpush1.msra.mxu0 0.0
    %2737 = vmatprep.subr.mxu0 0.0
    %2738 = vmatpush1.msra.mxu0 0.0
    %2739 = vmatprep.subr.mxu0 0.0
    %2740 = vmatpush1.msra.mxu0 0.0
    %2741 = vmatprep.subr.mxu0 0.0
    %2742 = vmatpush1.msra.mxu0 0.0
    %2743 = vmatprep.subr.mxu0 0.0
    %2744 = vmatpush1.msra.mxu0 0.0
    %2745 = vmatprep.subr.mxu0 0.0
    %2746 = vmatpush1.msra.mxu0 0.0
    %2747 = vmatprep.subr.mxu0 0.0
    %2748 = vmatpush1.msra.mxu0 0.0
    %2749 = vmatprep.subr.mxu0 0.0
    %2750 = vmatpush1.msra.mxu0 0.0
    %2751 = vmatprep.subr.mxu0 0.0
    %2752 = vmatpush1.msra.mxu0 0.0
    %2753 = vmatprep.subr.mxu0 0.0
    %2754 = vmatpush1.msra.mxu0 0.0
    %2755 = vmatprep.subr.mxu0 0.0
    %2756 = vmatpush1.msra.mxu0 0.0
    %2757 = vmatprep.subr.mxu0 0.0
    %2758 = vmatpush1.msra.mxu0 0.0
    %2759 = vmatprep.subr.mxu0 0.0
    %2760 = vmatpush1.msra.mxu0 0.0
    %2761 = vmatprep.subr.mxu0 0.0
    %2762 = vmatpush1.msra.mxu0 0.0
    %2763 = vmatprep.subr.mxu0 0.0
    %2764 = vmatpush1.msra.mxu0 0.0
    %2765 = vmatprep.subr.mxu0 %v2721
    %2766 = vmatpush1.msra.mxu0 %v2720
    %2767 = vmatprep.subr.mxu0 0.0
    %2768 = vmatpush2.msra.mxu0 0.0
    %2769 = vmatprep.subr.mxu0 0.0
    %2770 = vmatpush2.msra.mxu0 0.0
    %2771 = vmatprep.subr.mxu0 0.0
    %2772 = vmatpush2.msra.mxu0 0.0
    %2773 = vmatprep.subr.mxu0 0.0
    %2774 = vmatpush2.msra.mxu0 0.0
    %2775 = vmatprep.subr.mxu0 0.0
    %2776 = vmatpush2.msra.mxu0 0.0
    %2777 = vmatprep.subr.mxu0 0.0
    %2778 = vmatpush2.msra.mxu0 0.0
    %2779 = vmatprep.subr.mxu0 0.0
    %2780 = vmatpush2.msra.mxu0 0.0
    %2781 = vmatprep.subr.mxu0 0.0
    %2782 = vmatpush2.msra.mxu0 0.0
    %2783 = vmatprep.subr.mxu0 0.0
    %2784 = vmatpush2.msra.mxu0 0.0
    %2785 = vmatprep.subr.mxu0 0.0
    %2786 = vmatpush2.msra.mxu0 0.0
    %2787 = vmatprep.subr.mxu0 0.0
    %2788 = vmatpush2.msra.mxu0 0.0
    %2789 = vmatprep.subr.mxu0 0.0
    %2790 = vmatpush2.msra.mxu0 0.0
    %2791 = vmatprep.subr.mxu0 0.0
    %2792 = vmatpush2.msra.mxu0 0.0
    %2793 = vmatprep.subr.mxu0 0.0
    %2794 = vmatpush2.msra.mxu0 0.0
    %2795 = vmatprep.subr.mxu0 0.0
    %2796 = vmatpush2.msra.mxu0 0.0
    %2797 = vmatprep.subr.mxu0 0.0
    %2798 = vmatpush2.msra.mxu0 0.0
    %2799 = vmatprep.mubr.f32.mxu0 0.0
    %2800 = vmatmul.mubr.f32.gmra.mxu0 %v2733
    %v2801 = vpop.f32.mrf.mxu0
    %v2802 = vadd.f32 %v2560, %v2801
    %v2803 = vpop.f32.mrf.mxu0
    %v2804 = vadd.f32 %v2562, %v2803
    %2805 = vdwg.mxu0
    %2806 = vmatprep.subr.mxu0 0.0
    %2807 = vmatpush1.msra.mxu0 0.0
    %2808 = vmatprep.subr.mxu0 0.0
    %2809 = vmatpush1.msra.mxu0 0.0
    %2810 = vmatprep.subr.mxu0 0.0
    %2811 = vmatpush1.msra.mxu0 0.0
    %2812 = vmatprep.subr.mxu0 0.0
    %2813 = vmatpush1.msra.mxu0 0.0
    %2814 = vmatprep.subr.mxu0 0.0
    %2815 = vmatpush1.msra.mxu0 0.0
    %2816 = vmatprep.subr.mxu0 0.0
    %2817 = vmatpush1.msra.mxu0 0.0
    %2818 = vmatprep.subr.mxu0 0.0
    %2819 = vmatpush1.msra.mxu0 0.0
    %2820 = vmatprep.subr.mxu0 0.0
    %2821 = vmatpush1.msra.mxu0 0.0
    %2822 = vmatprep.subr.mxu0 0.0
    %2823 = vmatpush1.msra.mxu0 0.0
    %2824 = vmatprep.subr.mxu0 0.0
    %2825 = vmatpush1.msra.mxu0 0.0
    %2826 = vmatprep.subr.mxu0 0.0
    %2827 = vmatpush1.msra.mxu0 0.0
    %2828 = vmatprep.subr.mxu0 0.0
    %2829 = vmatpush1.msra.mxu0 0.0
    %2830 = vmatprep.subr.mxu0 0.0
    %2831 = vmatpush1.msra.mxu0 0.0
    %2832 = vmatprep.subr.mxu0 0.0
    %2833 = vmatpush1.msra.mxu0 0.0
    %2834 = vmatprep.subr.mxu0 0.0
    %2835 = vmatpush1.msra.mxu0 0.0
    %2836 = vmatprep.subr.mxu0 %v2723
    %2837 = vmatpush1.msra.mxu0 %v2722
    %2838 = vmatprep.subr.mxu0 0.0
    %2839 = vmatpush2.msra.mxu0 0.0
    %2840 = vmatprep.subr.mxu0 0.0
    %2841 = vmatpush2.msra.mxu0 0.0
    %2842 = vmatprep.subr.mxu0 0.0
    %2843 = vmatpush2.msra.mxu0 0.0
    %2844 = vmatprep.subr.mxu0 0.0
    %2845 = vmatpush2.msra.mxu0 0.0
    %2846 = vmatprep.subr.mxu0 0.0
    %2847 = vmatpush2.msra.mxu0 0.0
    %2848 = vmatprep.subr.mxu0 0.0
    %2849 = vmatpush2.msra.mxu0 0.0
    %2850 = vmatprep.subr.mxu0 0.0
    %2851 = vmatpush2.msra.mxu0 0.0
    %2852 = vmatprep.subr.mxu0 0.0
    %2853 = vmatpush2.msra.mxu0 0.0
    %2854 = vmatprep.subr.mxu0 0.0
    %2855 = vmatpush2.msra.mxu0 0.0
    %2856 = vmatprep.subr.mxu0 0.0
    %2857 = vmatpush2.msra.mxu0 0.0
    %2858 = vmatprep.subr.mxu0 0.0
    %2859 = vmatpush2.msra.mxu0 0.0
    %2860 = vmatprep.subr.mxu0 0.0
    %2861 = vmatpush2.msra.mxu0 0.0
    %2862 = vmatprep.subr.mxu0 0.0
    %2863 = vmatpush2.msra.mxu0 0.0
    %2864 = vmatprep.subr.mxu0 0.0
    %2865 = vmatpush2.msra.mxu0 0.0
    %2866 = vmatprep.subr.mxu0 0.0
    %2867 = vmatpush2.msra.mxu0 0.0
    %2868 = vmatprep.subr.mxu0 0.0
    %2869 = vmatpush2.msra.mxu0 0.0
    %2870 = vmatprep.mubr.f32.mxu0 0.0
    %2871 = vmatmul.mubr.f32.gmra.mxu0 %v2733
    %v2872 = vpop.f32.mrf.mxu0
    %v2873 = vadd.f32 %v2631, %v2872
    %v2874 = vpop.f32.mrf.mxu0
    %v2875 = vadd.f32 %v2633, %v2874
    %2876 = vdwg.mxu0
    %2877 = vmatprep.subr.mxu0 0.0
    %2878 = vmatpush1.msra.mxu0 0.0
    %2879 = vmatprep.subr.mxu0 0.0
    %2880 = vmatpush1.msra.mxu0 0.0
    %2881 = vmatprep.subr.mxu0 0.0
    %2882 = vmatpush1.msra.mxu0 0.0
    %2883 = vmatprep.subr.mxu0 0.0
    %2884 = vmatpush1.msra.mxu0 0.0
    %2885 = vmatprep.subr.mxu0 0.0
    %2886 = vmatpush1.msra.mxu0 0.0
    %2887 = vmatprep.subr.mxu0 0.0
    %2888 = vmatpush1.msra.mxu0 0.0
    %2889 = vmatprep.subr.mxu0 0.0
    %2890 = vmatpush1.msra.mxu0 0.0
    %2891 = vmatprep.subr.mxu0 0.0
    %2892 = vmatpush1.msra.mxu0 0.0
    %2893 = vmatprep.subr.mxu0 0.0
    %2894 = vmatpush1.msra.mxu0 0.0
    %2895 = vmatprep.subr.mxu0 0.0
    %2896 = vmatpush1.msra.mxu0 0.0
    %2897 = vmatprep.subr.mxu0 0.0
    %2898 = vmatpush1.msra.mxu0 0.0
    %2899 = vmatprep.subr.mxu0 0.0
    %2900 = vmatpush1.msra.mxu0 0.0
    %2901 = vmatprep.subr.mxu0 0.0
    %2902 = vmatpush1.msra.mxu0 0.0
    %2903 = vmatprep.subr.mxu0 0.0
    %2904 = vmatpush1.msra.mxu0 0.0
    %2905 = vmatprep.subr.mxu0 0.0
    %2906 = vmatpush1.msra.mxu0 0.0
    %2907 = vmatprep.subr.mxu0 %v2725
    %2908 = vmatpush1.msra.mxu0 %v2724
    %2909 = vmatprep.subr.mxu0 0.0
    %2910 = vmatpush2.msra.mxu0 0.0
    %2911 = vmatprep.subr.mxu0 0.0
    %2912 = vmatpush2.msra.mxu0 0.0
    %2913 = vmatprep.subr.mxu0 0.0
    %2914 = vmatpush2.msra.mxu0 0.0
    %2915 = vmatprep.subr.mxu0 0.0
    %2916 = vmatpush2.msra.mxu0 0.0
    %2917 = vmatprep.subr.mxu0 0.0
    %2918 = vmatpush2.msra.mxu0 0.0
    %2919 = vmatprep.subr.mxu0 0.0
    %2920 = vmatpush2.msra.mxu0 0.0
    %2921 = vmatprep.subr.mxu0 0.0
    %2922 = vmatpush2.msra.mxu0 0.0
    %2923 = vmatprep.subr.mxu0 0.0
    %2924 = vmatpush2.msra.mxu0 0.0
    %2925 = vmatprep.subr.mxu0 0.0
    %2926 = vmatpush2.msra.mxu0 0.0
    %2927 = vmatprep.subr.mxu0 0.0
    %2928 = vmatpush2.msra.mxu0 0.0
    %2929 = vmatprep.subr.mxu0 0.0
    %2930 = vmatpush2.msra.mxu0 0.0
    %2931 = vmatprep.subr.mxu0 0.0
    %2932 = vmatpush2.msra.mxu0 0.0
    %2933 = vmatprep.subr.mxu0 0.0
    %2934 = vmatpush2.msra.mxu0 0.0
    %2935 = vmatprep.subr.mxu0 0.0
    %2936 = vmatpush2.msra.mxu0 0.0
    %2937 = vmatprep.subr.mxu0 0.0
    %2938 = vmatpush2.msra.mxu0 0.0
    %2939 = vmatprep.subr.mxu0 0.0
    %2940 = vmatpush2.msra.mxu0 0.0
    %2941 = vmatprep.mubr.f32.mxu0 0.0
    %2942 = vmatmul.mubr.f32.gmra.mxu0 %v2733
    %v2943 = vpop.f32.mrf.mxu0
    %v2944 = vadd.f32 %v2702, %v2943
    %v2945 = vpop.f32.mrf.mxu0
    %v2946 = vadd.f32 %v2704, %v2945
    %2947 = vdwg.mxu0
    %s2948 = scalar_lea.vmem %s5, 16
    %v2949 = vld [vmem:[%s2948] sm:$0xff]
    %2950 = vrot.lane.b32.xlu0 %v2440, 17
    %v2951 = vpop.permute.xlu0 %2950
    %2952 = vrot.lane.b32.xlu0 %v2441, 17
    %v2953 = vpop.permute.xlu0 %2952
    %2954 = vrot.lane.b32.xlu0 %v2442, 17
    %v2955 = vpop.permute.xlu0 %2954
    %2956 = vrot.lane.b32.xlu0 %v2443, 17
    %v2957 = vpop.permute.xlu0 %2956
    %2958 = vrot.lane.b32.xlu0 %v2444, 17
    %v2959 = vpop.permute.xlu0 %2958
    %2960 = vrot.lane.b32.xlu0 %v2445, 17
    %v2961 = vpop.permute.xlu0 %2960
    %2962 = vrot.lane.b32.xlu0 %v2446, 17
    %v2963 = vpop.permute.xlu0 %2962
    %v2964 = vsel %vm564, %v2951, %v2953
    %v2965 = vsel %vm564, %v2953, %v2955
    %v2966 = vsel %vm564, %v2955, %v2957
    %v2967 = vsel %vm564, %v2957, %v2959
    %v2968 = vsel %vm564, %v2959, %v2961
    %v2969 = vsel %vm564, %v2961, %v2963
    %v2977 = vsel %vm88, %v2949, 0
    %2979 = vmatprep.subr.mxu0 0.0
    %2980 = vmatpush1.msra.mxu0 0.0
    %2981 = vmatprep.subr.mxu0 0.0
    %2982 = vmatpush1.msra.mxu0 0.0
    %2983 = vmatprep.subr.mxu0 0.0
    %2984 = vmatpush1.msra.mxu0 0.0
    %2985 = vmatprep.subr.mxu0 0.0
    %2986 = vmatpush1.msra.mxu0 0.0
    %2987 = vmatprep.subr.mxu0 0.0
    %2988 = vmatpush1.msra.mxu0 0.0
    %2989 = vmatprep.subr.mxu0 0.0
    %2990 = vmatpush1.msra.mxu0 0.0
    %2991 = vmatprep.subr.mxu0 0.0
    %2992 = vmatpush1.msra.mxu0 0.0
    %2993 = vmatprep.subr.mxu0 0.0
    %2994 = vmatpush1.msra.mxu0 0.0
    %2995 = vmatprep.subr.mxu0 0.0
    %2996 = vmatpush1.msra.mxu0 0.0
    %2997 = vmatprep.subr.mxu0 0.0
    %2998 = vmatpush1.msra.mxu0 0.0
    %2999 = vmatprep.subr.mxu0 0.0
    %3000 = vmatpush1.msra.mxu0 0.0
    %3001 = vmatprep.subr.mxu0 0.0
    %3002 = vmatpush1.msra.mxu0 0.0
    %3003 = vmatprep.subr.mxu0 0.0
    %3004 = vmatpush1.msra.mxu0 0.0
    %3005 = vmatprep.subr.mxu0 0.0
    %3006 = vmatpush1.msra.mxu0 0.0
    %3007 = vmatprep.subr.mxu0 0.0
    %3008 = vmatpush1.msra.mxu0 0.0
    %3009 = vmatprep.subr.mxu0 %v2965
    %3010 = vmatpush1.msra.mxu0 %v2964
    %3011 = vmatprep.subr.mxu0 0.0
    %3012 = vmatpush2.msra.mxu0 0.0
    %3013 = vmatprep.subr.mxu0 0.0
    %3014 = vmatpush2.msra.mxu0 0.0
    %3015 = vmatprep.subr.mxu0 0.0
    %3016 = vmatpush2.msra.mxu0 0.0
    %3017 = vmatprep.subr.mxu0 0.0
    %3018 = vmatpush2.msra.mxu0 0.0
    %3019 = vmatprep.subr.mxu0 0.0
    %3020 = vmatpush2.msra.mxu0 0.0
    %3021 = vmatprep.subr.mxu0 0.0
    %3022 = vmatpush2.msra.mxu0 0.0
    %3023 = vmatprep.subr.mxu0 0.0
    %3024 = vmatpush2.msra.mxu0 0.0
    %3025 = vmatprep.subr.mxu0 0.0
    %3026 = vmatpush2.msra.mxu0 0.0
    %3027 = vmatprep.subr.mxu0 0.0
    %3028 = vmatpush2.msra.mxu0 0.0
    %3029 = vmatprep.subr.mxu0 0.0
    %3030 = vmatpush2.msra.mxu0 0.0
    %3031 = vmatprep.subr.mxu0 0.0
    %3032 = vmatpush2.msra.mxu0 0.0
    %3033 = vmatprep.subr.mxu0 0.0
    %3034 = vmatpush2.msra.mxu0 0.0
    %3035 = vmatprep.subr.mxu0 0.0
    %3036 = vmatpush2.msra.mxu0 0.0
    %3037 = vmatprep.subr.mxu0 0.0
    %3038 = vmatpush2.msra.mxu0 0.0
    %3039 = vmatprep.subr.mxu0 0.0
    %3040 = vmatpush2.msra.mxu0 0.0
    %3041 = vmatprep.subr.mxu0 0.0
    %3042 = vmatpush2.msra.mxu0 0.0
    %3043 = vmatprep.mubr.f32.mxu0 0.0
    %3044 = vmatmul.mubr.f32.gmra.mxu0 %v2977
    %v3045 = vpop.f32.mrf.mxu0
    %v3046 = vadd.f32 0.0, %v3045
    %v3047 = vpop.f32.mrf.mxu0
    %v3048 = vadd.f32 0.0, %v3047
    %3049 = vdwg.mxu0
    %3050 = vmatprep.subr.mxu0 0.0
    %3051 = vmatpush1.msra.mxu0 0.0
    %3052 = vmatprep.subr.mxu0 0.0
    %3053 = vmatpush1.msra.mxu0 0.0
    %3054 = vmatprep.subr.mxu0 0.0
    %3055 = vmatpush1.msra.mxu0 0.0
    %3056 = vmatprep.subr.mxu0 0.0
    %3057 = vmatpush1.msra.mxu0 0.0
    %3058 = vmatprep.subr.mxu0 0.0
    %3059 = vmatpush1.msra.mxu0 0.0
    %3060 = vmatprep.subr.mxu0 0.0
    %3061 = vmatpush1.msra.mxu0 0.0
    %3062 = vmatprep.subr.mxu0 0.0
    %3063 = vmatpush1.msra.mxu0 0.0
    %3064 = vmatprep.subr.mxu0 0.0
    %3065 = vmatpush1.msra.mxu0 0.0
    %3066 = vmatprep.subr.mxu0 0.0
    %3067 = vmatpush1.msra.mxu0 0.0
    %3068 = vmatprep.subr.mxu0 0.0
    %3069 = vmatpush1.msra.mxu0 0.0
    %3070 = vmatprep.subr.mxu0 0.0
    %3071 = vmatpush1.msra.mxu0 0.0
    %3072 = vmatprep.subr.mxu0 0.0
    %3073 = vmatpush1.msra.mxu0 0.0
    %3074 = vmatprep.subr.mxu0 0.0
    %3075 = vmatpush1.msra.mxu0 0.0
    %3076 = vmatprep.subr.mxu0 0.0
    %3077 = vmatpush1.msra.mxu0 0.0
    %3078 = vmatprep.subr.mxu0 0.0
    %3079 = vmatpush1.msra.mxu0 0.0
    %3080 = vmatprep.subr.mxu0 %v2967
    %3081 = vmatpush1.msra.mxu0 %v2966
    %3082 = vmatprep.subr.mxu0 0.0
    %3083 = vmatpush2.msra.mxu0 0.0
    %3084 = vmatprep.subr.mxu0 0.0
    %3085 = vmatpush2.msra.mxu0 0.0
    %3086 = vmatprep.subr.mxu0 0.0
    %3087 = vmatpush2.msra.mxu0 0.0
    %3088 = vmatprep.subr.mxu0 0.0
    %3089 = vmatpush2.msra.mxu0 0.0
    %3090 = vmatprep.subr.mxu0 0.0
    %3091 = vmatpush2.msra.mxu0 0.0
    %3092 = vmatprep.subr.mxu0 0.0
    %3093 = vmatpush2.msra.mxu0 0.0
    %3094 = vmatprep.subr.mxu0 0.0
    %3095 = vmatpush2.msra.mxu0 0.0
    %3096 = vmatprep.subr.mxu0 0.0
    %3097 = vmatpush2.msra.mxu0 0.0
    %3098 = vmatprep.subr.mxu0 0.0
    %3099 = vmatpush2.msra.mxu0 0.0
    %3100 = vmatprep.subr.mxu0 0.0
    %3101 = vmatpush2.msra.mxu0 0.0
    %3102 = vmatprep.subr.mxu0 0.0
    %3103 = vmatpush2.msra.mxu0 0.0
    %3104 = vmatprep.subr.mxu0 0.0
    %3105 = vmatpush2.msra.mxu0 0.0
    %3106 = vmatprep.subr.mxu0 0.0
    %3107 = vmatpush2.msra.mxu0 0.0
    %3108 = vmatprep.subr.mxu0 0.0
    %3109 = vmatpush2.msra.mxu0 0.0
    %3110 = vmatprep.subr.mxu0 0.0
    %3111 = vmatpush2.msra.mxu0 0.0
    %3112 = vmatprep.subr.mxu0 0.0
    %3113 = vmatpush2.msra.mxu0 0.0
    %3114 = vmatprep.mubr.f32.mxu0 0.0
    %3115 = vmatmul.mubr.f32.gmra.mxu0 %v2977
    %v3116 = vpop.f32.mrf.mxu0
    %v3117 = vadd.f32 0.0, %v3116
    %v3118 = vpop.f32.mrf.mxu0
    %v3119 = vadd.f32 0.0, %v3118
    %3120 = vdwg.mxu0
    %3121 = vmatprep.subr.mxu0 0.0
    %3122 = vmatpush1.msra.mxu0 0.0
    %3123 = vmatprep.subr.mxu0 0.0
    %3124 = vmatpush1.msra.mxu0 0.0
    %3125 = vmatprep.subr.mxu0 0.0
    %3126 = vmatpush1.msra.mxu0 0.0
    %3127 = vmatprep.subr.mxu0 0.0
    %3128 = vmatpush1.msra.mxu0 0.0
    %3129 = vmatprep.subr.mxu0 0.0
    %3130 = vmatpush1.msra.mxu0 0.0
    %3131 = vmatprep.subr.mxu0 0.0
    %3132 = vmatpush1.msra.mxu0 0.0
    %3133 = vmatprep.subr.mxu0 0.0
    %3134 = vmatpush1.msra.mxu0 0.0
    %3135 = vmatprep.subr.mxu0 0.0
    %3136 = vmatpush1.msra.mxu0 0.0
    %3137 = vmatprep.subr.mxu0 0.0
    %3138 = vmatpush1.msra.mxu0 0.0
    %3139 = vmatprep.subr.mxu0 0.0
    %3140 = vmatpush1.msra.mxu0 0.0
    %3141 = vmatprep.subr.mxu0 0.0
    %3142 = vmatpush1.msra.mxu0 0.0
    %3143 = vmatprep.subr.mxu0 0.0
    %3144 = vmatpush1.msra.mxu0 0.0
    %3145 = vmatprep.subr.mxu0 0.0
    %3146 = vmatpush1.msra.mxu0 0.0
    %3147 = vmatprep.subr.mxu0 0.0
    %3148 = vmatpush1.msra.mxu0 0.0
    %3149 = vmatprep.subr.mxu0 0.0
    %3150 = vmatpush1.msra.mxu0 0.0
    %3151 = vmatprep.subr.mxu0 %v2969
    %3152 = vmatpush1.msra.mxu0 %v2968
    %3153 = vmatprep.subr.mxu0 0.0
    %3154 = vmatpush2.msra.mxu0 0.0
    %3155 = vmatprep.subr.mxu0 0.0
    %3156 = vmatpush2.msra.mxu0 0.0
    %3157 = vmatprep.subr.mxu0 0.0
    %3158 = vmatpush2.msra.mxu0 0.0
    %3159 = vmatprep.subr.mxu0 0.0
    %3160 = vmatpush2.msra.mxu0 0.0
    %3161 = vmatprep.subr.mxu0 0.0
    %3162 = vmatpush2.msra.mxu0 0.0
    %3163 = vmatprep.subr.mxu0 0.0
    %3164 = vmatpush2.msra.mxu0 0.0
    %3165 = vmatprep.subr.mxu0 0.0
    %3166 = vmatpush2.msra.mxu0 0.0
    %3167 = vmatprep.subr.mxu0 0.0
    %3168 = vmatpush2.msra.mxu0 0.0
    %3169 = vmatprep.subr.mxu0 0.0
    %3170 = vmatpush2.msra.mxu0 0.0
    %3171 = vmatprep.subr.mxu0 0.0
    %3172 = vmatpush2.msra.mxu0 0.0
    %3173 = vmatprep.subr.mxu0 0.0
    %3174 = vmatpush2.msra.mxu0 0.0
    %3175 = vmatprep.subr.mxu0 0.0
    %3176 = vmatpush2.msra.mxu0 0.0
    %3177 = vmatprep.subr.mxu0 0.0
    %3178 = vmatpush2.msra.mxu0 0.0
    %3179 = vmatprep.subr.mxu0 0.0
    %3180 = vmatpush2.msra.mxu0 0.0
    %3181 = vmatprep.subr.mxu0 0.0
    %3182 = vmatpush2.msra.mxu0 0.0
    %3183 = vmatprep.subr.mxu0 0.0
    %3184 = vmatpush2.msra.mxu0 0.0
    %3185 = vmatprep.mubr.f32.mxu0 0.0
    %3186 = vmatmul.mubr.f32.gmra.mxu0 %v2977
    %v3187 = vpop.f32.mrf.mxu0
    %v3188 = vadd.f32 0.0, %v3187
    %v3189 = vpop.f32.mrf.mxu0
    %v3190 = vadd.f32 0.0, %v3189
    %3191 = vdwg.mxu0
    %v3192 = vadd.f32 %v2802, %v3046
    %v3193 = vadd.f32 %v2804, %v3048
    %v3194 = vadd.f32 %v2873, %v3117
    %v3195 = vadd.f32 %v2875, %v3119
    %v3196 = vadd.f32 %v2944, %v3188
    %v3197 = vadd.f32 %v2946, %v3190
    %s3198 = scalar_lea.vmem %s5, 24
    %v3199 = vld [vmem:[%s3198] sm:$0xff]
    %3200 = vrot.lane.b32.xlu0 %v2440, 1
    %v3201 = vpop.permute.xlu0 %3200
    %3202 = vrot.lane.b32.xlu0 %v2441, 1
    %v3203 = vpop.permute.xlu0 %3202
    %3204 = vrot.lane.b32.xlu0 %v2442, 1
    %v3205 = vpop.permute.xlu0 %3204
    %3206 = vrot.lane.b32.xlu0 %v2443, 1
    %v3207 = vpop.permute.xlu0 %3206
    %3208 = vrot.lane.b32.xlu0 %v2444, 1
    %v3209 = vpop.permute.xlu0 %3208
    %3210 = vrot.lane.b32.xlu0 %v2445, 1
    %v3211 = vpop.permute.xlu0 %3210
    %3212 = vrot.lane.b32.xlu0 %v2446, 1
    %v3213 = vpop.permute.xlu0 %3212
    %v3214 = vsel %vm815, %v3201, %v3203
    %v3215 = vsel %vm815, %v3203, %v3205
    %v3216 = vsel %vm815, %v3205, %v3207
    %v3217 = vsel %vm815, %v3207, %v3209
    %v3218 = vsel %vm815, %v3209, %v3211
    %v3219 = vsel %vm815, %v3211, %v3213
    %v3227 = vsel %vm88, %v3199, 0
    %3229 = vmatprep.subr.mxu0 0.0
    %3230 = vmatpush1.msra.mxu0 0.0
    %3231 = vmatprep.subr.mxu0 0.0
    %3232 = vmatpush1.msra.mxu0 0.0
    %3233 = vmatprep.subr.mxu0 0.0
    %3234 = vmatpush1.msra.mxu0 0.0
    %3235 = vmatprep.subr.mxu0 0.0
    %3236 = vmatpush1.msra.mxu0 0.0
    %3237 = vmatprep.subr.mxu0 0.0
    %3238 = vmatpush1.msra.mxu0 0.0
    %3239 = vmatprep.subr.mxu0 0.0
    %3240 = vmatpush1.msra.mxu0 0.0
    %3241 = vmatprep.subr.mxu0 0.0
    %3242 = vmatpush1.msra.mxu0 0.0
    %3243 = vmatprep.subr.mxu0 0.0
    %3244 = vmatpush1.msra.mxu0 0.0
    %3245 = vmatprep.subr.mxu0 0.0
    %3246 = vmatpush1.msra.mxu0 0.0
    %3247 = vmatprep.subr.mxu0 0.0
    %3248 = vmatpush1.msra.mxu0 0.0
    %3249 = vmatprep.subr.mxu0 0.0
    %3250 = vmatpush1.msra.mxu0 0.0
    %3251 = vmatprep.subr.mxu0 0.0
    %3252 = vmatpush1.msra.mxu0 0.0
    %3253 = vmatprep.subr.mxu0 0.0
    %3254 = vmatpush1.msra.mxu0 0.0
    %3255 = vmatprep.subr.mxu0 0.0
    %3256 = vmatpush1.msra.mxu0 0.0
    %3257 = vmatprep.subr.mxu0 0.0
    %3258 = vmatpush1.msra.mxu0 0.0
    %3259 = vmatprep.subr.mxu0 %v3215
    %3260 = vmatpush1.msra.mxu0 %v3214
    %3261 = vmatprep.subr.mxu0 0.0
    %3262 = vmatpush2.msra.mxu0 0.0
    %3263 = vmatprep.subr.mxu0 0.0
    %3264 = vmatpush2.msra.mxu0 0.0
    %3265 = vmatprep.subr.mxu0 0.0
    %3266 = vmatpush2.msra.mxu0 0.0
    %3267 = vmatprep.subr.mxu0 0.0
    %3268 = vmatpush2.msra.mxu0 0.0
    %3269 = vmatprep.subr.mxu0 0.0
    %3270 = vmatpush2.msra.mxu0 0.0
    %3271 = vmatprep.subr.mxu0 0.0
    %3272 = vmatpush2.msra.mxu0 0.0
    %3273 = vmatprep.subr.mxu0 0.0
    %3274 = vmatpush2.msra.mxu0 0.0
    %3275 = vmatprep.subr.mxu0 0.0
    %3276 = vmatpush2.msra.mxu0 0.0
    %3277 = vmatprep.subr.mxu0 0.0
    %3278 = vmatpush2.msra.mxu0 0.0
    %3279 = vmatprep.subr.mxu0 0.0
    %3280 = vmatpush2.msra.mxu0 0.0
    %3281 = vmatprep.subr.mxu0 0.0
    %3282 = vmatpush2.msra.mxu0 0.0
    %3283 = vmatprep.subr.mxu0 0.0
    %3284 = vmatpush2.msra.mxu0 0.0
    %3285 = vmatprep.subr.mxu0 0.0
    %3286 = vmatpush2.msra.mxu0 0.0
    %3287 = vmatprep.subr.mxu0 0.0
    %3288 = vmatpush2.msra.mxu0 0.0
    %3289 = vmatprep.subr.mxu0 0.0
    %3290 = vmatpush2.msra.mxu0 0.0
    %3291 = vmatprep.subr.mxu0 0.0
    %3292 = vmatpush2.msra.mxu0 0.0
    %3293 = vmatprep.mubr.f32.mxu0 0.0
    %3294 = vmatmul.mubr.f32.gmra.mxu0 %v3227
    %v3295 = vpop.f32.mrf.mxu0
    %v3296 = vadd.f32 0.0, %v3295
    %v3297 = vpop.f32.mrf.mxu0
    %v3298 = vadd.f32 0.0, %v3297
    %3299 = vdwg.mxu0
    %3300 = vmatprep.subr.mxu0 0.0
    %3301 = vmatpush1.msra.mxu0 0.0
    %3302 = vmatprep.subr.mxu0 0.0
    %3303 = vmatpush1.msra.mxu0 0.0
    %3304 = vmatprep.subr.mxu0 0.0
    %3305 = vmatpush1.msra.mxu0 0.0
    %3306 = vmatprep.subr.mxu0 0.0
    %3307 = vmatpush1.msra.mxu0 0.0
    %3308 = vmatprep.subr.mxu0 0.0
    %3309 = vmatpush1.msra.mxu0 0.0
    %3310 = vmatprep.subr.mxu0 0.0
    %3311 = vmatpush1.msra.mxu0 0.0
    %3312 = vmatprep.subr.mxu0 0.0
    %3313 = vmatpush1.msra.mxu0 0.0
    %3314 = vmatprep.subr.mxu0 0.0
    %3315 = vmatpush1.msra.mxu0 0.0
    %3316 = vmatprep.subr.mxu0 0.0
    %3317 = vmatpush1.msra.mxu0 0.0
    %3318 = vmatprep.subr.mxu0 0.0
    %3319 = vmatpush1.msra.mxu0 0.0
    %3320 = vmatprep.subr.mxu0 0.0
    %3321 = vmatpush1.msra.mxu0 0.0
    %3322 = vmatprep.subr.mxu0 0.0
    %3323 = vmatpush1.msra.mxu0 0.0
    %3324 = vmatprep.subr.mxu0 0.0
    %3325 = vmatpush1.msra.mxu0 0.0
    %3326 = vmatprep.subr.mxu0 0.0
    %3327 = vmatpush1.msra.mxu0 0.0
    %3328 = vmatprep.subr.mxu0 0.0
    %3329 = vmatpush1.msra.mxu0 0.0
    %3330 = vmatprep.subr.mxu0 %v3217
    %3331 = vmatpush1.msra.mxu0 %v3216
    %3332 = vmatprep.subr.mxu0 0.0
    %3333 = vmatpush2.msra.mxu0 0.0
    %3334 = vmatprep.subr.mxu0 0.0
    %3335 = vmatpush2.msra.mxu0 0.0
    %3336 = vmatprep.subr.mxu0 0.0
    %3337 = vmatpush2.msra.mxu0 0.0
    %3338 = vmatprep.subr.mxu0 0.0
    %3339 = vmatpush2.msra.mxu0 0.0
    %3340 = vmatprep.subr.mxu0 0.0
    %3341 = vmatpush2.msra.mxu0 0.0
    %3342 = vmatprep.subr.mxu0 0.0
    %3343 = vmatpush2.msra.mxu0 0.0
    %3344 = vmatprep.subr.mxu0 0.0
    %3345 = vmatpush2.msra.mxu0 0.0
    %3346 = vmatprep.subr.mxu0 0.0
    %3347 = vmatpush2.msra.mxu0 0.0
    %3348 = vmatprep.subr.mxu0 0.0
    %3349 = vmatpush2.msra.mxu0 0.0
    %3350 = vmatprep.subr.mxu0 0.0
    %3351 = vmatpush2.msra.mxu0 0.0
    %3352 = vmatprep.subr.mxu0 0.0
    %3353 = vmatpush2.msra.mxu0 0.0
    %3354 = vmatprep.subr.mxu0 0.0
    %3355 = vmatpush2.msra.mxu0 0.0
    %3356 = vmatprep.subr.mxu0 0.0
    %3357 = vmatpush2.msra.mxu0 0.0
    %3358 = vmatprep.subr.mxu0 0.0
    %3359 = vmatpush2.msra.mxu0 0.0
    %3360 = vmatprep.subr.mxu0 0.0
    %3361 = vmatpush2.msra.mxu0 0.0
    %3362 = vmatprep.subr.mxu0 0.0
    %3363 = vmatpush2.msra.mxu0 0.0
    %3364 = vmatprep.mubr.f32.mxu0 0.0
    %3365 = vmatmul.mubr.f32.gmra.mxu0 %v3227
    %v3366 = vpop.f32.mrf.mxu0
    %v3367 = vadd.f32 0.0, %v3366
    %v3368 = vpop.f32.mrf.mxu0
    %v3369 = vadd.f32 0.0, %v3368
    %3370 = vdwg.mxu0
    %3371 = vmatprep.subr.mxu0 0.0
    %3372 = vmatpush1.msra.mxu0 0.0
    %3373 = vmatprep.subr.mxu0 0.0
    %3374 = vmatpush1.msra.mxu0 0.0
    %3375 = vmatprep.subr.mxu0 0.0
    %3376 = vmatpush1.msra.mxu0 0.0
    %3377 = vmatprep.subr.mxu0 0.0
    %3378 = vmatpush1.msra.mxu0 0.0
    %3379 = vmatprep.subr.mxu0 0.0
    %3380 = vmatpush1.msra.mxu0 0.0
    %3381 = vmatprep.subr.mxu0 0.0
    %3382 = vmatpush1.msra.mxu0 0.0
    %3383 = vmatprep.subr.mxu0 0.0
    %3384 = vmatpush1.msra.mxu0 0.0
    %3385 = vmatprep.subr.mxu0 0.0
    %3386 = vmatpush1.msra.mxu0 0.0
    %3387 = vmatprep.subr.mxu0 0.0
    %3388 = vmatpush1.msra.mxu0 0.0
    %3389 = vmatprep.subr.mxu0 0.0
    %3390 = vmatpush1.msra.mxu0 0.0
    %3391 = vmatprep.subr.mxu0 0.0
    %3392 = vmatpush1.msra.mxu0 0.0
    %3393 = vmatprep.subr.mxu0 0.0
    %3394 = vmatpush1.msra.mxu0 0.0
    %3395 = vmatprep.subr.mxu0 0.0
    %3396 = vmatpush1.msra.mxu0 0.0
    %3397 = vmatprep.subr.mxu0 0.0
    %3398 = vmatpush1.msra.mxu0 0.0
    %3399 = vmatprep.subr.mxu0 0.0
    %3400 = vmatpush1.msra.mxu0 0.0
    %3401 = vmatprep.subr.mxu0 %v3219
    %3402 = vmatpush1.msra.mxu0 %v3218
    %3403 = vmatprep.subr.mxu0 0.0
    %3404 = vmatpush2.msra.mxu0 0.0
    %3405 = vmatprep.subr.mxu0 0.0
    %3406 = vmatpush2.msra.mxu0 0.0
    %3407 = vmatprep.subr.mxu0 0.0
    %3408 = vmatpush2.msra.mxu0 0.0
    %3409 = vmatprep.subr.mxu0 0.0
    %3410 = vmatpush2.msra.mxu0 0.0
    %3411 = vmatprep.subr.mxu0 0.0
    %3412 = vmatpush2.msra.mxu0 0.0
    %3413 = vmatprep.subr.mxu0 0.0
    %3414 = vmatpush2.msra.mxu0 0.0
    %3415 = vmatprep.subr.mxu0 0.0
    %3416 = vmatpush2.msra.mxu0 0.0
    %3417 = vmatprep.subr.mxu0 0.0
    %3418 = vmatpush2.msra.mxu0 0.0
    %3419 = vmatprep.subr.mxu0 0.0
    %3420 = vmatpush2.msra.mxu0 0.0
    %3421 = vmatprep.subr.mxu0 0.0
    %3422 = vmatpush2.msra.mxu0 0.0
    %3423 = vmatprep.subr.mxu0 0.0
    %3424 = vmatpush2.msra.mxu0 0.0
    %3425 = vmatprep.subr.mxu0 0.0
    %3426 = vmatpush2.msra.mxu0 0.0
    %3427 = vmatprep.subr.mxu0 0.0
    %3428 = vmatpush2.msra.mxu0 0.0
    %3429 = vmatprep.subr.mxu0 0.0
    %3430 = vmatpush2.msra.mxu0 0.0
    %3431 = vmatprep.subr.mxu0 0.0
    %3432 = vmatpush2.msra.mxu0 0.0
    %3433 = vmatprep.subr.mxu0 0.0
    %3434 = vmatpush2.msra.mxu0 0.0
    %3435 = vmatprep.mubr.f32.mxu0 0.0
    %3436 = vmatmul.mubr.f32.gmra.mxu0 %v3227
    %v3437 = vpop.f32.mrf.mxu0
    %v3438 = vadd.f32 0.0, %v3437
    %v3439 = vpop.f32.mrf.mxu0
    %v3440 = vadd.f32 0.0, %v3439
    %3441 = vdwg.mxu0
    %v3442 = vadd.f32 %v3192, %v3296
    %v3443 = vadd.f32 %v3193, %v3298
    %v3444 = vadd.f32 %v3194, %v3367
    %v3445 = vadd.f32 %v3195, %v3369
    %v3446 = vadd.f32 %v3196, %v3438
    %v3447 = vadd.f32 %v3197, %v3440
    %s3448 = scalar_lea.vmem %s5, 32
    %v3449 = vld [vmem:[%s3448] sm:$0xff]
    %v3451 = vsel %vm88, %v3449, 0
    %3453 = vmatprep.subr.mxu0 0.0
    %3454 = vmatpush1.msra.mxu0 0.0
    %3455 = vmatprep.subr.mxu0 0.0
    %3456 = vmatpush1.msra.mxu0 0.0
    %3457 = vmatprep.subr.mxu0 0.0
    %3458 = vmatpush1.msra.mxu0 0.0
    %3459 = vmatprep.subr.mxu0 0.0
    %3460 = vmatpush1.msra.mxu0 0.0
    %3461 = vmatprep.subr.mxu0 0.0
    %3462 = vmatpush1.msra.mxu0 0.0
    %3463 = vmatprep.subr.mxu0 0.0
    %3464 = vmatpush1.msra.mxu0 0.0
    %3465 = vmatprep.subr.mxu0 0.0
    %3466 = vmatpush1.msra.mxu0 0.0
    %3467 = vmatprep.subr.mxu0 0.0
    %3468 = vmatpush1.msra.mxu0 0.0
    %3469 = vmatprep.subr.mxu0 0.0
    %3470 = vmatpush1.msra.mxu0 0.0
    %3471 = vmatprep.subr.mxu0 0.0
    %3472 = vmatpush1.msra.mxu0 0.0
    %3473 = vmatprep.subr.mxu0 0.0
    %3474 = vmatpush1.msra.mxu0 0.0
    %3475 = vmatprep.subr.mxu0 0.0
    %3476 = vmatpush1.msra.mxu0 0.0
    %3477 = vmatprep.subr.mxu0 0.0
    %3478 = vmatpush1.msra.mxu0 0.0
    %3479 = vmatprep.subr.mxu0 0.0
    %3480 = vmatpush1.msra.mxu0 0.0
    %3481 = vmatprep.subr.mxu0 0.0
    %3482 = vmatpush1.msra.mxu0 0.0
    %3483 = vmatprep.subr.mxu0 %v2442
    %3484 = vmatpush1.msra.mxu0 %v2441
    %3485 = vmatprep.subr.mxu0 0.0
    %3486 = vmatpush2.msra.mxu0 0.0
    %3487 = vmatprep.subr.mxu0 0.0
    %3488 = vmatpush2.msra.mxu0 0.0
    %3489 = vmatprep.subr.mxu0 0.0
    %3490 = vmatpush2.msra.mxu0 0.0
    %3491 = vmatprep.subr.mxu0 0.0
    %3492 = vmatpush2.msra.mxu0 0.0
    %3493 = vmatprep.subr.mxu0 0.0
    %3494 = vmatpush2.msra.mxu0 0.0
    %3495 = vmatprep.subr.mxu0 0.0
    %3496 = vmatpush2.msra.mxu0 0.0
    %3497 = vmatprep.subr.mxu0 0.0
    %3498 = vmatpush2.msra.mxu0 0.0
    %3499 = vmatprep.subr.mxu0 0.0
    %3500 = vmatpush2.msra.mxu0 0.0
    %3501 = vmatprep.subr.mxu0 0.0
    %3502 = vmatpush2.msra.mxu0 0.0
    %3503 = vmatprep.subr.mxu0 0.0
    %3504 = vmatpush2.msra.mxu0 0.0
    %3505 = vmatprep.subr.mxu0 0.0
    %3506 = vmatpush2.msra.mxu0 0.0
    %3507 = vmatprep.subr.mxu0 0.0
    %3508 = vmatpush2.msra.mxu0 0.0
    %3509 = vmatprep.subr.mxu0 0.0
    %3510 = vmatpush2.msra.mxu0 0.0
    %3511 = vmatprep.subr.mxu0 0.0
    %3512 = vmatpush2.msra.mxu0 0.0
    %3513 = vmatprep.subr.mxu0 0.0
    %3514 = vmatpush2.msra.mxu0 0.0
    %3515 = vmatprep.subr.mxu0 0.0
    %3516 = vmatpush2.msra.mxu0 0.0
    %3517 = vmatprep.mubr.f32.mxu0 0.0
    %3518 = vmatmul.mubr.f32.gmra.mxu0 %v3451
    %v3519 = vpop.f32.mrf.mxu0
    %v3520 = vadd.f32 0.0, %v3519
    %v3521 = vpop.f32.mrf.mxu0
    %v3522 = vadd.f32 0.0, %v3521
    %3523 = vdwg.mxu0
    %3524 = vmatprep.subr.mxu0 0.0
    %3525 = vmatpush1.msra.mxu0 0.0
    %3526 = vmatprep.subr.mxu0 0.0
    %3527 = vmatpush1.msra.mxu0 0.0
    %3528 = vmatprep.subr.mxu0 0.0
    %3529 = vmatpush1.msra.mxu0 0.0
    %3530 = vmatprep.subr.mxu0 0.0
    %3531 = vmatpush1.msra.mxu0 0.0
    %3532 = vmatprep.subr.mxu0 0.0
    %3533 = vmatpush1.msra.mxu0 0.0
    %3534 = vmatprep.subr.mxu0 0.0
    %3535 = vmatpush1.msra.mxu0 0.0
    %3536 = vmatprep.subr.mxu0 0.0
    %3537 = vmatpush1.msra.mxu0 0.0
    %3538 = vmatprep.subr.mxu0 0.0
    %3539 = vmatpush1.msra.mxu0 0.0
    %3540 = vmatprep.subr.mxu0 0.0
    %3541 = vmatpush1.msra.mxu0 0.0
    %3542 = vmatprep.subr.mxu0 0.0
    %3543 = vmatpush1.msra.mxu0 0.0
    %3544 = vmatprep.subr.mxu0 0.0
    %3545 = vmatpush1.msra.mxu0 0.0
    %3546 = vmatprep.subr.mxu0 0.0
    %3547 = vmatpush1.msra.mxu0 0.0
    %3548 = vmatprep.subr.mxu0 0.0
    %3549 = vmatpush1.msra.mxu0 0.0
    %3550 = vmatprep.subr.mxu0 0.0
    %3551 = vmatpush1.msra.mxu0 0.0
    %3552 = vmatprep.subr.mxu0 0.0
    %3553 = vmatpush1.msra.mxu0 0.0
    %3554 = vmatprep.subr.mxu0 %v2444
    %3555 = vmatpush1.msra.mxu0 %v2443
    %3556 = vmatprep.subr.mxu0 0.0
    %3557 = vmatpush2.msra.mxu0 0.0
    %3558 = vmatprep.subr.mxu0 0.0
    %3559 = vmatpush2.msra.mxu0 0.0
    %3560 = vmatprep.subr.mxu0 0.0
    %3561 = vmatpush2.msra.mxu0 0.0
    %3562 = vmatprep.subr.mxu0 0.0
    %3563 = vmatpush2.msra.mxu0 0.0
    %3564 = vmatprep.subr.mxu0 0.0
    %3565 = vmatpush2.msra.mxu0 0.0
    %3566 = vmatprep.subr.mxu0 0.0
    %3567 = vmatpush2.msra.mxu0 0.0
    %3568 = vmatprep.subr.mxu0 0.0
    %3569 = vmatpush2.msra.mxu0 0.0
    %3570 = vmatprep.subr.mxu0 0.0
    %3571 = vmatpush2.msra.mxu0 0.0
    %3572 = vmatprep.subr.mxu0 0.0
    %3573 = vmatpush2.msra.mxu0 0.0
    %3574 = vmatprep.subr.mxu0 0.0
    %3575 = vmatpush2.msra.mxu0 0.0
    %3576 = vmatprep.subr.mxu0 0.0
    %3577 = vmatpush2.msra.mxu0 0.0
    %3578 = vmatprep.subr.mxu0 0.0
    %3579 = vmatpush2.msra.mxu0 0.0
    %3580 = vmatprep.subr.mxu0 0.0
    %3581 = vmatpush2.msra.mxu0 0.0
    %3582 = vmatprep.subr.mxu0 0.0
    %3583 = vmatpush2.msra.mxu0 0.0
    %3584 = vmatprep.subr.mxu0 0.0
    %3585 = vmatpush2.msra.mxu0 0.0
    %3586 = vmatprep.subr.mxu0 0.0
    %3587 = vmatpush2.msra.mxu0 0.0
    %3588 = vmatprep.mubr.f32.mxu0 0.0
    %3589 = vmatmul.mubr.f32.gmra.mxu0 %v3451
    %v3590 = vpop.f32.mrf.mxu0
    %v3591 = vadd.f32 0.0, %v3590
    %v3592 = vpop.f32.mrf.mxu0
    %v3593 = vadd.f32 0.0, %v3592
    %3594 = vdwg.mxu0
    %3595 = vmatprep.subr.mxu0 0.0
    %3596 = vmatpush1.msra.mxu0 0.0
    %3597 = vmatprep.subr.mxu0 0.0
    %3598 = vmatpush1.msra.mxu0 0.0
    %3599 = vmatprep.subr.mxu0 0.0
    %3600 = vmatpush1.msra.mxu0 0.0
    %3601 = vmatprep.subr.mxu0 0.0
    %3602 = vmatpush1.msra.mxu0 0.0
    %3603 = vmatprep.subr.mxu0 0.0
    %3604 = vmatpush1.msra.mxu0 0.0
    %3605 = vmatprep.subr.mxu0 0.0
    %3606 = vmatpush1.msra.mxu0 0.0
    %3607 = vmatprep.subr.mxu0 0.0
    %3608 = vmatpush1.msra.mxu0 0.0
    %3609 = vmatprep.subr.mxu0 0.0
    %3610 = vmatpush1.msra.mxu0 0.0
    %3611 = vmatprep.subr.mxu0 0.0
    %3612 = vmatpush1.msra.mxu0 0.0
    %3613 = vmatprep.subr.mxu0 0.0
    %3614 = vmatpush1.msra.mxu0 0.0
    %3615 = vmatprep.subr.mxu0 0.0
    %3616 = vmatpush1.msra.mxu0 0.0
    %3617 = vmatprep.subr.mxu0 0.0
    %3618 = vmatpush1.msra.mxu0 0.0
    %3619 = vmatprep.subr.mxu0 0.0
    %3620 = vmatpush1.msra.mxu0 0.0
    %3621 = vmatprep.subr.mxu0 0.0
    %3622 = vmatpush1.msra.mxu0 0.0
    %3623 = vmatprep.subr.mxu0 0.0
    %3624 = vmatpush1.msra.mxu0 0.0
    %3625 = vmatprep.subr.mxu0 %v2446
    %3626 = vmatpush1.msra.mxu0 %v2445
    %3627 = vmatprep.subr.mxu0 0.0
    %3628 = vmatpush2.msra.mxu0 0.0
    %3629 = vmatprep.subr.mxu0 0.0
    %3630 = vmatpush2.msra.mxu0 0.0
    %3631 = vmatprep.subr.mxu0 0.0
    %3632 = vmatpush2.msra.mxu0 0.0
    %3633 = vmatprep.subr.mxu0 0.0
    %3634 = vmatpush2.msra.mxu0 0.0
    %3635 = vmatprep.subr.mxu0 0.0
    %3636 = vmatpush2.msra.mxu0 0.0
    %3637 = vmatprep.subr.mxu0 0.0
    %3638 = vmatpush2.msra.mxu0 0.0
    %3639 = vmatprep.subr.mxu0 0.0
    %3640 = vmatpush2.msra.mxu0 0.0
    %3641 = vmatprep.subr.mxu0 0.0
    %3642 = vmatpush2.msra.mxu0 0.0
    %3643 = vmatprep.subr.mxu0 0.0
    %3644 = vmatpush2.msra.mxu0 0.0
    %3645 = vmatprep.subr.mxu0 0.0
    %3646 = vmatpush2.msra.mxu0 0.0
    %3647 = vmatprep.subr.mxu0 0.0
    %3648 = vmatpush2.msra.mxu0 0.0
    %3649 = vmatprep.subr.mxu0 0.0
    %3650 = vmatpush2.msra.mxu0 0.0
    %3651 = vmatprep.subr.mxu0 0.0
    %3652 = vmatpush2.msra.mxu0 0.0
    %3653 = vmatprep.subr.mxu0 0.0
    %3654 = vmatpush2.msra.mxu0 0.0
    %3655 = vmatprep.subr.mxu0 0.0
    %3656 = vmatpush2.msra.mxu0 0.0
    %3657 = vmatprep.subr.mxu0 0.0
    %3658 = vmatpush2.msra.mxu0 0.0
    %3659 = vmatprep.mubr.f32.mxu0 0.0
    %3660 = vmatmul.mubr.f32.gmra.mxu0 %v3451
    %v3661 = vpop.f32.mrf.mxu0
    %v3662 = vadd.f32 0.0, %v3661
    %v3663 = vpop.f32.mrf.mxu0
    %v3664 = vadd.f32 0.0, %v3663
    %3665 = vdwg.mxu0
    %v3666 = vadd.f32 %v3442, %v3520
    %v3667 = vadd.f32 %v3443, %v3522
    %v3668 = vadd.f32 %v3444, %v3591
    %v3669 = vadd.f32 %v3445, %v3593
    %v3670 = vadd.f32 %v3446, %v3662
    %v3671 = vadd.f32 %v3447, %v3664
    %s3672 = scalar_lea.vmem %s5, 40
    %v3673 = vld [vmem:[%s3672] sm:$0xff]
    %3681 = vrot.lane.b32.xlu0 %v2447, 127
    %v3682 = vpop.permute.xlu0 %3681
    %3683 = vrot.lane.b32.xlu0 %v2448, 127
    %v3684 = vpop.permute.xlu0 %3683
    %3685 = vrot.lane.b32.xlu0 %v2449, 127
    %v3686 = vpop.permute.xlu0 %3685
    %3687 = vrot.lane.b32.xlu0 %v2450, 127
    %v3688 = vpop.permute.xlu0 %3687
    %3689 = vrot.lane.b32.xlu0 %v2451, 127
    %v3690 = vpop.permute.xlu0 %3689
    %3691 = vrot.lane.b32.xlu0 %v2452, 127
    %v3692 = vpop.permute.xlu0 %3691
    %3693 = vrot.lane.b32.xlu0 %v2453, 127
    %v3694 = vpop.permute.xlu0 %3693
    %v3695 = vsel %vm1330, %v3682, %v3684
    %v3696 = vsel %vm1330, %v3684, %v3686
    %v3697 = vsel %vm1330, %v3686, %v3688
    %v3698 = vsel %vm1330, %v3688, %v3690
    %v3699 = vsel %vm1330, %v3690, %v3692
    %v3700 = vsel %vm1330, %v3692, %v3694
    %v3708 = vsel %vm88, %v3673, 0
    %3710 = vmatprep.subr.mxu0 0.0
    %3711 = vmatpush1.msra.mxu0 0.0
    %3712 = vmatprep.subr.mxu0 0.0
    %3713 = vmatpush1.msra.mxu0 0.0
    %3714 = vmatprep.subr.mxu0 0.0
    %3715 = vmatpush1.msra.mxu0 0.0
    %3716 = vmatprep.subr.mxu0 0.0
    %3717 = vmatpush1.msra.mxu0 0.0
    %3718 = vmatprep.subr.mxu0 0.0
    %3719 = vmatpush1.msra.mxu0 0.0
    %3720 = vmatprep.subr.mxu0 0.0
    %3721 = vmatpush1.msra.mxu0 0.0
    %3722 = vmatprep.subr.mxu0 0.0
    %3723 = vmatpush1.msra.mxu0 0.0
    %3724 = vmatprep.subr.mxu0 0.0
    %3725 = vmatpush1.msra.mxu0 0.0
    %3726 = vmatprep.subr.mxu0 0.0
    %3727 = vmatpush1.msra.mxu0 0.0
    %3728 = vmatprep.subr.mxu0 0.0
    %3729 = vmatpush1.msra.mxu0 0.0
    %3730 = vmatprep.subr.mxu0 0.0
    %3731 = vmatpush1.msra.mxu0 0.0
    %3732 = vmatprep.subr.mxu0 0.0
    %3733 = vmatpush1.msra.mxu0 0.0
    %3734 = vmatprep.subr.mxu0 0.0
    %3735 = vmatpush1.msra.mxu0 0.0
    %3736 = vmatprep.subr.mxu0 0.0
    %3737 = vmatpush1.msra.mxu0 0.0
    %3738 = vmatprep.subr.mxu0 0.0
    %3739 = vmatpush1.msra.mxu0 0.0
    %3740 = vmatprep.subr.mxu0 %v3696
    %3741 = vmatpush1.msra.mxu0 %v3695
    %3742 = vmatprep.subr.mxu0 0.0
    %3743 = vmatpush2.msra.mxu0 0.0
    %3744 = vmatprep.subr.mxu0 0.0
    %3745 = vmatpush2.msra.mxu0 0.0
    %3746 = vmatprep.subr.mxu0 0.0
    %3747 = vmatpush2.msra.mxu0 0.0
    %3748 = vmatprep.subr.mxu0 0.0
    %3749 = vmatpush2.msra.mxu0 0.0
    %3750 = vmatprep.subr.mxu0 0.0
    %3751 = vmatpush2.msra.mxu0 0.0
    %3752 = vmatprep.subr.mxu0 0.0
    %3753 = vmatpush2.msra.mxu0 0.0
    %3754 = vmatprep.subr.mxu0 0.0
    %3755 = vmatpush2.msra.mxu0 0.0
    %3756 = vmatprep.subr.mxu0 0.0
    %3757 = vmatpush2.msra.mxu0 0.0
    %3758 = vmatprep.subr.mxu0 0.0
    %3759 = vmatpush2.msra.mxu0 0.0
    %3760 = vmatprep.subr.mxu0 0.0
    %3761 = vmatpush2.msra.mxu0 0.0
    %3762 = vmatprep.subr.mxu0 0.0
    %3763 = vmatpush2.msra.mxu0 0.0
    %3764 = vmatprep.subr.mxu0 0.0
    %3765 = vmatpush2.msra.mxu0 0.0
    %3766 = vmatprep.subr.mxu0 0.0
    %3767 = vmatpush2.msra.mxu0 0.0
    %3768 = vmatprep.subr.mxu0 0.0
    %3769 = vmatpush2.msra.mxu0 0.0
    %3770 = vmatprep.subr.mxu0 0.0
    %3771 = vmatpush2.msra.mxu0 0.0
    %3772 = vmatprep.subr.mxu0 0.0
    %3773 = vmatpush2.msra.mxu0 0.0
    %3774 = vmatprep.mubr.f32.mxu0 0.0
    %3775 = vmatmul.mubr.f32.gmra.mxu0 %v3708
    %v3776 = vpop.f32.mrf.mxu0
    %v3777 = vadd.f32 0.0, %v3776
    %v3778 = vpop.f32.mrf.mxu0
    %v3779 = vadd.f32 0.0, %v3778
    %3780 = vdwg.mxu0
    %3781 = vmatprep.subr.mxu0 0.0
    %3782 = vmatpush1.msra.mxu0 0.0
    %3783 = vmatprep.subr.mxu0 0.0
    %3784 = vmatpush1.msra.mxu0 0.0
    %3785 = vmatprep.subr.mxu0 0.0
    %3786 = vmatpush1.msra.mxu0 0.0
    %3787 = vmatprep.subr.mxu0 0.0
    %3788 = vmatpush1.msra.mxu0 0.0
    %3789 = vmatprep.subr.mxu0 0.0
    %3790 = vmatpush1.msra.mxu0 0.0
    %3791 = vmatprep.subr.mxu0 0.0
    %3792 = vmatpush1.msra.mxu0 0.0
    %3793 = vmatprep.subr.mxu0 0.0
    %3794 = vmatpush1.msra.mxu0 0.0
    %3795 = vmatprep.subr.mxu0 0.0
    %3796 = vmatpush1.msra.mxu0 0.0
    %3797 = vmatprep.subr.mxu0 0.0
    %3798 = vmatpush1.msra.mxu0 0.0
    %3799 = vmatprep.subr.mxu0 0.0
    %3800 = vmatpush1.msra.mxu0 0.0
    %3801 = vmatprep.subr.mxu0 0.0
    %3802 = vmatpush1.msra.mxu0 0.0
    %3803 = vmatprep.subr.mxu0 0.0
    %3804 = vmatpush1.msra.mxu0 0.0
    %3805 = vmatprep.subr.mxu0 0.0
    %3806 = vmatpush1.msra.mxu0 0.0
    %3807 = vmatprep.subr.mxu0 0.0
    %3808 = vmatpush1.msra.mxu0 0.0
    %3809 = vmatprep.subr.mxu0 0.0
    %3810 = vmatpush1.msra.mxu0 0.0
    %3811 = vmatprep.subr.mxu0 %v3698
    %3812 = vmatpush1.msra.mxu0 %v3697
    %3813 = vmatprep.subr.mxu0 0.0
    %3814 = vmatpush2.msra.mxu0 0.0
    %3815 = vmatprep.subr.mxu0 0.0
    %3816 = vmatpush2.msra.mxu0 0.0
    %3817 = vmatprep.subr.mxu0 0.0
    %3818 = vmatpush2.msra.mxu0 0.0
    %3819 = vmatprep.subr.mxu0 0.0
    %3820 = vmatpush2.msra.mxu0 0.0
    %3821 = vmatprep.subr.mxu0 0.0
    %3822 = vmatpush2.msra.mxu0 0.0
    %3823 = vmatprep.subr.mxu0 0.0
    %3824 = vmatpush2.msra.mxu0 0.0
    %3825 = vmatprep.subr.mxu0 0.0
    %3826 = vmatpush2.msra.mxu0 0.0
    %3827 = vmatprep.subr.mxu0 0.0
    %3828 = vmatpush2.msra.mxu0 0.0
    %3829 = vmatprep.subr.mxu0 0.0
    %3830 = vmatpush2.msra.mxu0 0.0
    %3831 = vmatprep.subr.mxu0 0.0
    %3832 = vmatpush2.msra.mxu0 0.0
    %3833 = vmatprep.subr.mxu0 0.0
    %3834 = vmatpush2.msra.mxu0 0.0
    %3835 = vmatprep.subr.mxu0 0.0
    %3836 = vmatpush2.msra.mxu0 0.0
    %3837 = vmatprep.subr.mxu0 0.0
    %3838 = vmatpush2.msra.mxu0 0.0
    %3839 = vmatprep.subr.mxu0 0.0
    %3840 = vmatpush2.msra.mxu0 0.0
    %3841 = vmatprep.subr.mxu0 0.0
    %3842 = vmatpush2.msra.mxu0 0.0
    %3843 = vmatprep.subr.mxu0 0.0
    %3844 = vmatpush2.msra.mxu0 0.0
    %3845 = vmatprep.mubr.f32.mxu0 0.0
    %3846 = vmatmul.mubr.f32.gmra.mxu0 %v3708
    %v3847 = vpop.f32.mrf.mxu0
    %v3848 = vadd.f32 0.0, %v3847
    %v3849 = vpop.f32.mrf.mxu0
    %v3850 = vadd.f32 0.0, %v3849
    %3851 = vdwg.mxu0
    %3852 = vmatprep.subr.mxu0 0.0
    %3853 = vmatpush1.msra.mxu0 0.0
    %3854 = vmatprep.subr.mxu0 0.0
    %3855 = vmatpush1.msra.mxu0 0.0
    %3856 = vmatprep.subr.mxu0 0.0
    %3857 = vmatpush1.msra.mxu0 0.0
    %3858 = vmatprep.subr.mxu0 0.0
    %3859 = vmatpush1.msra.mxu0 0.0
    %3860 = vmatprep.subr.mxu0 0.0
    %3861 = vmatpush1.msra.mxu0 0.0
    %3862 = vmatprep.subr.mxu0 0.0
    %3863 = vmatpush1.msra.mxu0 0.0
    %3864 = vmatprep.subr.mxu0 0.0
    %3865 = vmatpush1.msra.mxu0 0.0
    %3866 = vmatprep.subr.mxu0 0.0
    %3867 = vmatpush1.msra.mxu0 0.0
    %3868 = vmatprep.subr.mxu0 0.0
    %3869 = vmatpush1.msra.mxu0 0.0
    %3870 = vmatprep.subr.mxu0 0.0
    %3871 = vmatpush1.msra.mxu0 0.0
    %3872 = vmatprep.subr.mxu0 0.0
    %3873 = vmatpush1.msra.mxu0 0.0
    %3874 = vmatprep.subr.mxu0 0.0
    %3875 = vmatpush1.msra.mxu0 0.0
    %3876 = vmatprep.subr.mxu0 0.0
    %3877 = vmatpush1.msra.mxu0 0.0
    %3878 = vmatprep.subr.mxu0 0.0
    %3879 = vmatpush1.msra.mxu0 0.0
    %3880 = vmatprep.subr.mxu0 0.0
    %3881 = vmatpush1.msra.mxu0 0.0
    %3882 = vmatprep.subr.mxu0 %v3700
    %3883 = vmatpush1.msra.mxu0 %v3699
    %3884 = vmatprep.subr.mxu0 0.0
    %3885 = vmatpush2.msra.mxu0 0.0
    %3886 = vmatprep.subr.mxu0 0.0
    %3887 = vmatpush2.msra.mxu0 0.0
    %3888 = vmatprep.subr.mxu0 0.0
    %3889 = vmatpush2.msra.mxu0 0.0
    %3890 = vmatprep.subr.mxu0 0.0
    %3891 = vmatpush2.msra.mxu0 0.0
    %3892 = vmatprep.subr.mxu0 0.0
    %3893 = vmatpush2.msra.mxu0 0.0
    %3894 = vmatprep.subr.mxu0 0.0
    %3895 = vmatpush2.msra.mxu0 0.0
    %3896 = vmatprep.subr.mxu0 0.0
    %3897 = vmatpush2.msra.mxu0 0.0
    %3898 = vmatprep.subr.mxu0 0.0
    %3899 = vmatpush2.msra.mxu0 0.0
    %3900 = vmatprep.subr.mxu0 0.0
    %3901 = vmatpush2.msra.mxu0 0.0
    %3902 = vmatprep.subr.mxu0 0.0
    %3903 = vmatpush2.msra.mxu0 0.0
    %3904 = vmatprep.subr.mxu0 0.0
    %3905 = vmatpush2.msra.mxu0 0.0
    %3906 = vmatprep.subr.mxu0 0.0
    %3907 = vmatpush2.msra.mxu0 0.0
    %3908 = vmatprep.subr.mxu0 0.0
    %3909 = vmatpush2.msra.mxu0 0.0
    %3910 = vmatprep.subr.mxu0 0.0
    %3911 = vmatpush2.msra.mxu0 0.0
    %3912 = vmatprep.subr.mxu0 0.0
    %3913 = vmatpush2.msra.mxu0 0.0
    %3914 = vmatprep.subr.mxu0 0.0
    %3915 = vmatpush2.msra.mxu0 0.0
    %3916 = vmatprep.mubr.f32.mxu0 0.0
    %3917 = vmatmul.mubr.f32.gmra.mxu0 %v3708
    %v3918 = vpop.f32.mrf.mxu0
    %v3919 = vadd.f32 0.0, %v3918
    %v3920 = vpop.f32.mrf.mxu0
    %v3921 = vadd.f32 0.0, %v3920
    %3922 = vdwg.mxu0
    %v3923 = vadd.f32 %v3666, %v3777
    %v3924 = vadd.f32 %v3667, %v3779
    %v3925 = vadd.f32 %v3668, %v3848
    %v3926 = vadd.f32 %v3669, %v3850
    %v3927 = vadd.f32 %v3670, %v3919
    %v3928 = vadd.f32 %v3671, %v3921
    %s3929 = scalar_lea.vmem %s5, 48
    %v3930 = vld [vmem:[%s3929] sm:$0xff]
    %3931 = vrot.lane.b32.xlu0 %v2447, 111
    %v3932 = vpop.permute.xlu0 %3931
    %3933 = vrot.lane.b32.xlu0 %v2448, 111
    %v3934 = vpop.permute.xlu0 %3933
    %3935 = vrot.lane.b32.xlu0 %v2449, 111
    %v3936 = vpop.permute.xlu0 %3935
    %3937 = vrot.lane.b32.xlu0 %v2450, 111
    %v3938 = vpop.permute.xlu0 %3937
    %3939 = vrot.lane.b32.xlu0 %v2451, 111
    %v3940 = vpop.permute.xlu0 %3939
    %3941 = vrot.lane.b32.xlu0 %v2452, 111
    %v3942 = vpop.permute.xlu0 %3941
    %3943 = vrot.lane.b32.xlu0 %v2453, 111
    %v3944 = vpop.permute.xlu0 %3943
    %v3945 = vsel %vm1581, %v3932, %v3934
    %v3946 = vsel %vm1581, %v3934, %v3936
    %v3947 = vsel %vm1581, %v3936, %v3938
    %v3948 = vsel %vm1581, %v3938, %v3940
    %v3949 = vsel %vm1581, %v3940, %v3942
    %v3950 = vsel %vm1581, %v3942, %v3944
    %v3958 = vsel %vm88, %v3930, 0
    %3960 = vmatprep.subr.mxu0 0.0
    %3961 = vmatpush1.msra.mxu0 0.0
    %3962 = vmatprep.subr.mxu0 0.0
    %3963 = vmatpush1.msra.mxu0 0.0
    %3964 = vmatprep.subr.mxu0 0.0
    %3965 = vmatpush1.msra.mxu0 0.0
    %3966 = vmatprep.subr.mxu0 0.0
    %3967 = vmatpush1.msra.mxu0 0.0
    %3968 = vmatprep.subr.mxu0 0.0
    %3969 = vmatpush1.msra.mxu0 0.0
    %3970 = vmatprep.subr.mxu0 0.0
    %3971 = vmatpush1.msra.mxu0 0.0
    %3972 = vmatprep.subr.mxu0 0.0
    %3973 = vmatpush1.msra.mxu0 0.0
    %3974 = vmatprep.subr.mxu0 0.0
    %3975 = vmatpush1.msra.mxu0 0.0
    %3976 = vmatprep.subr.mxu0 0.0
    %3977 = vmatpush1.msra.mxu0 0.0
    %3978 = vmatprep.subr.mxu0 0.0
    %3979 = vmatpush1.msra.mxu0 0.0
    %3980 = vmatprep.subr.mxu0 0.0
    %3981 = vmatpush1.msra.mxu0 0.0
    %3982 = vmatprep.subr.mxu0 0.0
    %3983 = vmatpush1.msra.mxu0 0.0
    %3984 = vmatprep.subr.mxu0 0.0
    %3985 = vmatpush1.msra.mxu0 0.0
    %3986 = vmatprep.subr.mxu0 0.0
    %3987 = vmatpush1.msra.mxu0 0.0
    %3988 = vmatprep.subr.mxu0 0.0
    %3989 = vmatpush1.msra.mxu0 0.0
    %3990 = vmatprep.subr.mxu0 %v3946
    %3991 = vmatpush1.msra.mxu0 %v3945
    %3992 = vmatprep.subr.mxu0 0.0
    %3993 = vmatpush2.msra.mxu0 0.0
    %3994 = vmatprep.subr.mxu0 0.0
    %3995 = vmatpush2.msra.mxu0 0.0
    %3996 = vmatprep.subr.mxu0 0.0
    %3997 = vmatpush2.msra.mxu0 0.0
    %3998 = vmatprep.subr.mxu0 0.0
    %3999 = vmatpush2.msra.mxu0 0.0
    %4000 = vmatprep.subr.mxu0 0.0
    %4001 = vmatpush2.msra.mxu0 0.0
    %4002 = vmatprep.subr.mxu0 0.0
    %4003 = vmatpush2.msra.mxu0 0.0
    %4004 = vmatprep.subr.mxu0 0.0
    %4005 = vmatpush2.msra.mxu0 0.0
    %4006 = vmatprep.subr.mxu0 0.0
    %4007 = vmatpush2.msra.mxu0 0.0
    %4008 = vmatprep.subr.mxu0 0.0
    %4009 = vmatpush2.msra.mxu0 0.0
    %4010 = vmatprep.subr.mxu0 0.0
    %4011 = vmatpush2.msra.mxu0 0.0
    %4012 = vmatprep.subr.mxu0 0.0
    %4013 = vmatpush2.msra.mxu0 0.0
    %4014 = vmatprep.subr.mxu0 0.0
    %4015 = vmatpush2.msra.mxu0 0.0
    %4016 = vmatprep.subr.mxu0 0.0
    %4017 = vmatpush2.msra.mxu0 0.0
    %4018 = vmatprep.subr.mxu0 0.0
    %4019 = vmatpush2.msra.mxu0 0.0
    %4020 = vmatprep.subr.mxu0 0.0
    %4021 = vmatpush2.msra.mxu0 0.0
    %4022 = vmatprep.subr.mxu0 0.0
    %4023 = vmatpush2.msra.mxu0 0.0
    %4024 = vmatprep.mubr.f32.mxu0 0.0
    %4025 = vmatmul.mubr.f32.gmra.mxu0 %v3958
    %v4026 = vpop.f32.mrf.mxu0
    %v4027 = vadd.f32 0.0, %v4026
    %v4028 = vpop.f32.mrf.mxu0
    %v4029 = vadd.f32 0.0, %v4028
    %4030 = vdwg.mxu0
    %4031 = vmatprep.subr.mxu0 0.0
    %4032 = vmatpush1.msra.mxu0 0.0
    %4033 = vmatprep.subr.mxu0 0.0
    %4034 = vmatpush1.msra.mxu0 0.0
    %4035 = vmatprep.subr.mxu0 0.0
    %4036 = vmatpush1.msra.mxu0 0.0
    %4037 = vmatprep.subr.mxu0 0.0
    %4038 = vmatpush1.msra.mxu0 0.0
    %4039 = vmatprep.subr.mxu0 0.0
    %4040 = vmatpush1.msra.mxu0 0.0
    %4041 = vmatprep.subr.mxu0 0.0
    %4042 = vmatpush1.msra.mxu0 0.0
    %4043 = vmatprep.subr.mxu0 0.0
    %4044 = vmatpush1.msra.mxu0 0.0
    %4045 = vmatprep.subr.mxu0 0.0
    %4046 = vmatpush1.msra.mxu0 0.0
    %4047 = vmatprep.subr.mxu0 0.0
    %4048 = vmatpush1.msra.mxu0 0.0
    %4049 = vmatprep.subr.mxu0 0.0
    %4050 = vmatpush1.msra.mxu0 0.0
    %4051 = vmatprep.subr.mxu0 0.0
    %4052 = vmatpush1.msra.mxu0 0.0
    %4053 = vmatprep.subr.mxu0 0.0
    %4054 = vmatpush1.msra.mxu0 0.0
    %4055 = vmatprep.subr.mxu0 0.0
    %4056 = vmatpush1.msra.mxu0 0.0
    %4057 = vmatprep.subr.mxu0 0.0
    %4058 = vmatpush1.msra.mxu0 0.0
    %4059 = vmatprep.subr.mxu0 0.0
    %4060 = vmatpush1.msra.mxu0 0.0
    %4061 = vmatprep.subr.mxu0 %v3948
    %4062 = vmatpush1.msra.mxu0 %v3947
    %4063 = vmatprep.subr.mxu0 0.0
    %4064 = vmatpush2.msra.mxu0 0.0
    %4065 = vmatprep.subr.mxu0 0.0
    %4066 = vmatpush2.msra.mxu0 0.0
    %4067 = vmatprep.subr.mxu0 0.0
    %4068 = vmatpush2.msra.mxu0 0.0
    %4069 = vmatprep.subr.mxu0 0.0
    %4070 = vmatpush2.msra.mxu0 0.0
    %4071 = vmatprep.subr.mxu0 0.0
    %4072 = vmatpush2.msra.mxu0 0.0
    %4073 = vmatprep.subr.mxu0 0.0
    %4074 = vmatpush2.msra.mxu0 0.0
    %4075 = vmatprep.subr.mxu0 0.0
    %4076 = vmatpush2.msra.mxu0 0.0
    %4077 = vmatprep.subr.mxu0 0.0
    %4078 = vmatpush2.msra.mxu0 0.0
    %4079 = vmatprep.subr.mxu0 0.0
    %4080 = vmatpush2.msra.mxu0 0.0
    %4081 = vmatprep.subr.mxu0 0.0
    %4082 = vmatpush2.msra.mxu0 0.0
    %4083 = vmatprep.subr.mxu0 0.0
    %4084 = vmatpush2.msra.mxu0 0.0
    %4085 = vmatprep.subr.mxu0 0.0
    %4086 = vmatpush2.msra.mxu0 0.0
    %4087 = vmatprep.subr.mxu0 0.0
    %4088 = vmatpush2.msra.mxu0 0.0
    %4089 = vmatprep.subr.mxu0 0.0
    %4090 = vmatpush2.msra.mxu0 0.0
    %4091 = vmatprep.subr.mxu0 0.0
    %4092 = vmatpush2.msra.mxu0 0.0
    %4093 = vmatprep.subr.mxu0 0.0
    %4094 = vmatpush2.msra.mxu0 0.0
    %4095 = vmatprep.mubr.f32.mxu0 0.0
    %4096 = vmatmul.mubr.f32.gmra.mxu0 %v3958
    %v4097 = vpop.f32.mrf.mxu0
    %v4098 = vadd.f32 0.0, %v4097
    %v4099 = vpop.f32.mrf.mxu0
    %v4100 = vadd.f32 0.0, %v4099
    %4101 = vdwg.mxu0
    %4102 = vmatprep.subr.mxu0 0.0
    %4103 = vmatpush1.msra.mxu0 0.0
    %4104 = vmatprep.subr.mxu0 0.0
    %4105 = vmatpush1.msra.mxu0 0.0
    %4106 = vmatprep.subr.mxu0 0.0
    %4107 = vmatpush1.msra.mxu0 0.0
    %4108 = vmatprep.subr.mxu0 0.0
    %4109 = vmatpush1.msra.mxu0 0.0
    %4110 = vmatprep.subr.mxu0 0.0
    %4111 = vmatpush1.msra.mxu0 0.0
    %4112 = vmatprep.subr.mxu0 0.0
    %4113 = vmatpush1.msra.mxu0 0.0
    %4114 = vmatprep.subr.mxu0 0.0
    %4115 = vmatpush1.msra.mxu0 0.0
    %4116 = vmatprep.subr.mxu0 0.0
    %4117 = vmatpush1.msra.mxu0 0.0
    %4118 = vmatprep.subr.mxu0 0.0
    %4119 = vmatpush1.msra.mxu0 0.0
    %4120 = vmatprep.subr.mxu0 0.0
    %4121 = vmatpush1.msra.mxu0 0.0
    %4122 = vmatprep.subr.mxu0 0.0
    %4123 = vmatpush1.msra.mxu0 0.0
    %4124 = vmatprep.subr.mxu0 0.0
    %4125 = vmatpush1.msra.mxu0 0.0
    %4126 = vmatprep.subr.mxu0 0.0
    %4127 = vmatpush1.msra.mxu0 0.0
    %4128 = vmatprep.subr.mxu0 0.0
    %4129 = vmatpush1.msra.mxu0 0.0
    %4130 = vmatprep.subr.mxu0 0.0
    %4131 = vmatpush1.msra.mxu0 0.0
    %4132 = vmatprep.subr.mxu0 %v3950
    %4133 = vmatpush1.msra.mxu0 %v3949
    %4134 = vmatprep.subr.mxu0 0.0
    %4135 = vmatpush2.msra.mxu0 0.0
    %4136 = vmatprep.subr.mxu0 0.0
    %4137 = vmatpush2.msra.mxu0 0.0
    %4138 = vmatprep.subr.mxu0 0.0
    %4139 = vmatpush2.msra.mxu0 0.0
    %4140 = vmatprep.subr.mxu0 0.0
    %4141 = vmatpush2.msra.mxu0 0.0
    %4142 = vmatprep.subr.mxu0 0.0
    %4143 = vmatpush2.msra.mxu0 0.0
    %4144 = vmatprep.subr.mxu0 0.0
    %4145 = vmatpush2.msra.mxu0 0.0
    %4146 = vmatprep.subr.mxu0 0.0
    %4147 = vmatpush2.msra.mxu0 0.0
    %4148 = vmatprep.subr.mxu0 0.0
    %4149 = vmatpush2.msra.mxu0 0.0
    %4150 = vmatprep.subr.mxu0 0.0
    %4151 = vmatpush2.msra.mxu0 0.0
    %4152 = vmatprep.subr.mxu0 0.0
    %4153 = vmatpush2.msra.mxu0 0.0
    %4154 = vmatprep.subr.mxu0 0.0
    %4155 = vmatpush2.msra.mxu0 0.0
    %4156 = vmatprep.subr.mxu0 0.0
    %4157 = vmatpush2.msra.mxu0 0.0
    %4158 = vmatprep.subr.mxu0 0.0
    %4159 = vmatpush2.msra.mxu0 0.0
    %4160 = vmatprep.subr.mxu0 0.0
    %4161 = vmatpush2.msra.mxu0 0.0
    %4162 = vmatprep.subr.mxu0 0.0
    %4163 = vmatpush2.msra.mxu0 0.0
    %4164 = vmatprep.subr.mxu0 0.0
    %4165 = vmatpush2.msra.mxu0 0.0
    %4166 = vmatprep.mubr.f32.mxu0 0.0
    %4167 = vmatmul.mubr.f32.gmra.mxu0 %v3958
    %v4168 = vpop.f32.mrf.mxu0
    %v4169 = vadd.f32 0.0, %v4168
    %v4170 = vpop.f32.mrf.mxu0
    %v4171 = vadd.f32 0.0, %v4170
    %4172 = vdwg.mxu0
    %v4173 = vadd.f32 %v3923, %v4027
    %v4174 = vadd.f32 %v3924, %v4029
    %v4175 = vadd.f32 %v3925, %v4098
    %v4176 = vadd.f32 %v3926, %v4100
    %v4177 = vadd.f32 %v3927, %v4169
    %v4178 = vadd.f32 %v3928, %v4171
    %s4179 = scalar_lea.vmem %s5, 56
    %v4180 = vld [vmem:[%s4179] sm:$0xff]
    %4181 = vrot.lane.b32.xlu0 %v2447, 110
    %v4182 = vpop.permute.xlu0 %4181
    %4183 = vrot.lane.b32.xlu0 %v2448, 110
    %v4184 = vpop.permute.xlu0 %4183
    %4185 = vrot.lane.b32.xlu0 %v2449, 110
    %v4186 = vpop.permute.xlu0 %4185
    %4187 = vrot.lane.b32.xlu0 %v2450, 110
    %v4188 = vpop.permute.xlu0 %4187
    %4189 = vrot.lane.b32.xlu0 %v2451, 110
    %v4190 = vpop.permute.xlu0 %4189
    %4191 = vrot.lane.b32.xlu0 %v2452, 110
    %v4192 = vpop.permute.xlu0 %4191
    %4193 = vrot.lane.b32.xlu0 %v2453, 110
    %v4194 = vpop.permute.xlu0 %4193
    %v4195 = vsel %vm1832, %v4182, %v4184
    %v4196 = vsel %vm1832, %v4184, %v4186
    %v4197 = vsel %vm1832, %v4186, %v4188
    %v4198 = vsel %vm1832, %v4188, %v4190
    %v4199 = vsel %vm1832, %v4190, %v4192
    %v4200 = vsel %vm1832, %v4192, %v4194
    %v4208 = vsel %vm88, %v4180, 0
    %4210 = vmatprep.subr.mxu0 0.0
    %4211 = vmatpush1.msra.mxu0 0.0
    %4212 = vmatprep.subr.mxu0 0.0
    %4213 = vmatpush1.msra.mxu0 0.0
    %4214 = vmatprep.subr.mxu0 0.0
    %4215 = vmatpush1.msra.mxu0 0.0
    %4216 = vmatprep.subr.mxu0 0.0
    %4217 = vmatpush1.msra.mxu0 0.0
    %4218 = vmatprep.subr.mxu0 0.0
    %4219 = vmatpush1.msra.mxu0 0.0
    %4220 = vmatprep.subr.mxu0 0.0
    %4221 = vmatpush1.msra.mxu0 0.0
    %4222 = vmatprep.subr.mxu0 0.0
    %4223 = vmatpush1.msra.mxu0 0.0
    %4224 = vmatprep.subr.mxu0 0.0
    %4225 = vmatpush1.msra.mxu0 0.0
    %4226 = vmatprep.subr.mxu0 0.0
    %4227 = vmatpush1.msra.mxu0 0.0
    %4228 = vmatprep.subr.mxu0 0.0
    %4229 = vmatpush1.msra.mxu0 0.0
    %4230 = vmatprep.subr.mxu0 0.0
    %4231 = vmatpush1.msra.mxu0 0.0
    %4232 = vmatprep.subr.mxu0 0.0
    %4233 = vmatpush1.msra.mxu0 0.0
    %4234 = vmatprep.subr.mxu0 0.0
    %4235 = vmatpush1.msra.mxu0 0.0
    %4236 = vmatprep.subr.mxu0 0.0
    %4237 = vmatpush1.msra.mxu0 0.0
    %4238 = vmatprep.subr.mxu0 0.0
    %4239 = vmatpush1.msra.mxu0 0.0
    %4240 = vmatprep.subr.mxu0 %v4196
    %4241 = vmatpush1.msra.mxu0 %v4195
    %4242 = vmatprep.subr.mxu0 0.0
    %4243 = vmatpush2.msra.mxu0 0.0
    %4244 = vmatprep.subr.mxu0 0.0
    %4245 = vmatpush2.msra.mxu0 0.0
    %4246 = vmatprep.subr.mxu0 0.0
    %4247 = vmatpush2.msra.mxu0 0.0
    %4248 = vmatprep.subr.mxu0 0.0
    %4249 = vmatpush2.msra.mxu0 0.0
    %4250 = vmatprep.subr.mxu0 0.0
    %4251 = vmatpush2.msra.mxu0 0.0
    %4252 = vmatprep.subr.mxu0 0.0
    %4253 = vmatpush2.msra.mxu0 0.0
    %4254 = vmatprep.subr.mxu0 0.0
    %4255 = vmatpush2.msra.mxu0 0.0
    %4256 = vmatprep.subr.mxu0 0.0
    %4257 = vmatpush2.msra.mxu0 0.0
    %4258 = vmatprep.subr.mxu0 0.0
    %4259 = vmatpush2.msra.mxu0 0.0
    %4260 = vmatprep.subr.mxu0 0.0
    %4261 = vmatpush2.msra.mxu0 0.0
    %4262 = vmatprep.subr.mxu0 0.0
    %4263 = vmatpush2.msra.mxu0 0.0
    %4264 = vmatprep.subr.mxu0 0.0
    %4265 = vmatpush2.msra.mxu0 0.0
    %4266 = vmatprep.subr.mxu0 0.0
    %4267 = vmatpush2.msra.mxu0 0.0
    %4268 = vmatprep.subr.mxu0 0.0
    %4269 = vmatpush2.msra.mxu0 0.0
    %4270 = vmatprep.subr.mxu0 0.0
    %4271 = vmatpush2.msra.mxu0 0.0
    %4272 = vmatprep.subr.mxu0 0.0
    %4273 = vmatpush2.msra.mxu0 0.0
    %4274 = vmatprep.mubr.f32.mxu0 0.0
    %4275 = vmatmul.mubr.f32.gmra.mxu0 %v4208
    %v4276 = vpop.f32.mrf.mxu0
    %v4277 = vadd.f32 0.0, %v4276
    %v4278 = vpop.f32.mrf.mxu0
    %v4279 = vadd.f32 0.0, %v4278
    %4280 = vdwg.mxu0
    %4281 = vmatprep.subr.mxu0 0.0
    %4282 = vmatpush1.msra.mxu0 0.0
    %4283 = vmatprep.subr.mxu0 0.0
    %4284 = vmatpush1.msra.mxu0 0.0
    %4285 = vmatprep.subr.mxu0 0.0
    %4286 = vmatpush1.msra.mxu0 0.0
    %4287 = vmatprep.subr.mxu0 0.0
    %4288 = vmatpush1.msra.mxu0 0.0
    %4289 = vmatprep.subr.mxu0 0.0
    %4290 = vmatpush1.msra.mxu0 0.0
    %4291 = vmatprep.subr.mxu0 0.0
    %4292 = vmatpush1.msra.mxu0 0.0
    %4293 = vmatprep.subr.mxu0 0.0
    %4294 = vmatpush1.msra.mxu0 0.0
    %4295 = vmatprep.subr.mxu0 0.0
    %4296 = vmatpush1.msra.mxu0 0.0
    %4297 = vmatprep.subr.mxu0 0.0
    %4298 = vmatpush1.msra.mxu0 0.0
    %4299 = vmatprep.subr.mxu0 0.0
    %4300 = vmatpush1.msra.mxu0 0.0
    %4301 = vmatprep.subr.mxu0 0.0
    %4302 = vmatpush1.msra.mxu0 0.0
    %4303 = vmatprep.subr.mxu0 0.0
    %4304 = vmatpush1.msra.mxu0 0.0
    %4305 = vmatprep.subr.mxu0 0.0
    %4306 = vmatpush1.msra.mxu0 0.0
    %4307 = vmatprep.subr.mxu0 0.0
    %4308 = vmatpush1.msra.mxu0 0.0
    %4309 = vmatprep.subr.mxu0 0.0
    %4310 = vmatpush1.msra.mxu0 0.0
    %4311 = vmatprep.subr.mxu0 %v4198
    %4312 = vmatpush1.msra.mxu0 %v4197
    %4313 = vmatprep.subr.mxu0 0.0
    %4314 = vmatpush2.msra.mxu0 0.0
    %4315 = vmatprep.subr.mxu0 0.0
    %4316 = vmatpush2.msra.mxu0 0.0
    %4317 = vmatprep.subr.mxu0 0.0
    %4318 = vmatpush2.msra.mxu0 0.0
    %4319 = vmatprep.subr.mxu0 0.0
    %4320 = vmatpush2.msra.mxu0 0.0
    %4321 = vmatprep.subr.mxu0 0.0
    %4322 = vmatpush2.msra.mxu0 0.0
    %4323 = vmatprep.subr.mxu0 0.0
    %4324 = vmatpush2.msra.mxu0 0.0
    %4325 = vmatprep.subr.mxu0 0.0
    %4326 = vmatpush2.msra.mxu0 0.0
    %4327 = vmatprep.subr.mxu0 0.0
    %4328 = vmatpush2.msra.mxu0 0.0
    %4329 = vmatprep.subr.mxu0 0.0
    %4330 = vmatpush2.msra.mxu0 0.0
    %4331 = vmatprep.subr.mxu0 0.0
    %4332 = vmatpush2.msra.mxu0 0.0
    %4333 = vmatprep.subr.mxu0 0.0
    %4334 = vmatpush2.msra.mxu0 0.0
    %4335 = vmatprep.subr.mxu0 0.0
    %4336 = vmatpush2.msra.mxu0 0.0
    %4337 = vmatprep.subr.mxu0 0.0
    %4338 = vmatpush2.msra.mxu0 0.0
    %4339 = vmatprep.subr.mxu0 0.0
    %4340 = vmatpush2.msra.mxu0 0.0
    %4341 = vmatprep.subr.mxu0 0.0
    %4342 = vmatpush2.msra.mxu0 0.0
    %4343 = vmatprep.subr.mxu0 0.0
    %4344 = vmatpush2.msra.mxu0 0.0
    %4345 = vmatprep.mubr.f32.mxu0 0.0
    %4346 = vmatmul.mubr.f32.gmra.mxu0 %v4208
    %v4347 = vpop.f32.mrf.mxu0
    %v4348 = vadd.f32 0.0, %v4347
    %v4349 = vpop.f32.mrf.mxu0
    %v4350 = vadd.f32 0.0, %v4349
    %4351 = vdwg.mxu0
    %4352 = vmatprep.subr.mxu0 0.0
    %4353 = vmatpush1.msra.mxu0 0.0
    %4354 = vmatprep.subr.mxu0 0.0
    %4355 = vmatpush1.msra.mxu0 0.0
    %4356 = vmatprep.subr.mxu0 0.0
    %4357 = vmatpush1.msra.mxu0 0.0
    %4358 = vmatprep.subr.mxu0 0.0
    %4359 = vmatpush1.msra.mxu0 0.0
    %4360 = vmatprep.subr.mxu0 0.0
    %4361 = vmatpush1.msra.mxu0 0.0
    %4362 = vmatprep.subr.mxu0 0.0
    %4363 = vmatpush1.msra.mxu0 0.0
    %4364 = vmatprep.subr.mxu0 0.0
    %4365 = vmatpush1.msra.mxu0 0.0
    %4366 = vmatprep.subr.mxu0 0.0
    %4367 = vmatpush1.msra.mxu0 0.0
    %4368 = vmatprep.subr.mxu0 0.0
    %4369 = vmatpush1.msra.mxu0 0.0
    %4370 = vmatprep.subr.mxu0 0.0
    %4371 = vmatpush1.msra.mxu0 0.0
    %4372 = vmatprep.subr.mxu0 0.0
    %4373 = vmatpush1.msra.mxu0 0.0
    %4374 = vmatprep.subr.mxu0 0.0
    %4375 = vmatpush1.msra.mxu0 0.0
    %4376 = vmatprep.subr.mxu0 0.0
    %4377 = vmatpush1.msra.mxu0 0.0
    %4378 = vmatprep.subr.mxu0 0.0
    %4379 = vmatpush1.msra.mxu0 0.0
    %4380 = vmatprep.subr.mxu0 0.0
    %4381 = vmatpush1.msra.mxu0 0.0
    %4382 = vmatprep.subr.mxu0 %v4200
    %4383 = vmatpush1.msra.mxu0 %v4199
    %4384 = vmatprep.subr.mxu0 0.0
    %4385 = vmatpush2.msra.mxu0 0.0
    %4386 = vmatprep.subr.mxu0 0.0
    %4387 = vmatpush2.msra.mxu0 0.0
    %4388 = vmatprep.subr.mxu0 0.0
    %4389 = vmatpush2.msra.mxu0 0.0
    %4390 = vmatprep.subr.mxu0 0.0
    %4391 = vmatpush2.msra.mxu0 0.0
    %4392 = vmatprep.subr.mxu0 0.0
    %4393 = vmatpush2.msra.mxu0 0.0
    %4394 = vmatprep.subr.mxu0 0.0
    %4395 = vmatpush2.msra.mxu0 0.0
    %4396 = vmatprep.subr.mxu0 0.0
    %4397 = vmatpush2.msra.mxu0 0.0
    %4398 = vmatprep.subr.mxu0 0.0
    %4399 = vmatpush2.msra.mxu0 0.0
    %4400 = vmatprep.subr.mxu0 0.0
    %4401 = vmatpush2.msra.mxu0 0.0
    %4402 = vmatprep.subr.mxu0 0.0
    %4403 = vmatpush2.msra.mxu0 0.0
    %4404 = vmatprep.subr.mxu0 0.0
    %4405 = vmatpush2.msra.mxu0 0.0
    %4406 = vmatprep.subr.mxu0 0.0
    %4407 = vmatpush2.msra.mxu0 0.0
    %4408 = vmatprep.subr.mxu0 0.0
    %4409 = vmatpush2.msra.mxu0 0.0
    %4410 = vmatprep.subr.mxu0 0.0
    %4411 = vmatpush2.msra.mxu0 0.0
    %4412 = vmatprep.subr.mxu0 0.0
    %4413 = vmatpush2.msra.mxu0 0.0
    %4414 = vmatprep.subr.mxu0 0.0
    %4415 = vmatpush2.msra.mxu0 0.0
    %4416 = vmatprep.mubr.f32.mxu0 0.0
    %4417 = vmatmul.mubr.f32.gmra.mxu0 %v4208
    %v4418 = vpop.f32.mrf.mxu0
    %v4419 = vadd.f32 0.0, %v4418
    %v4420 = vpop.f32.mrf.mxu0
    %v4421 = vadd.f32 0.0, %v4420
    %4422 = vdwg.mxu0
    %v4423 = vadd.f32 %v4173, %v4277
    %v4424 = vadd.f32 %v4174, %v4279
    %v4425 = vadd.f32 %v4175, %v4348
    %v4426 = vadd.f32 %v4176, %v4350
    %v4427 = vadd.f32 %v4177, %v4419
    %v4428 = vadd.f32 %v4178, %v4421
    %s4429 = scalar_lea.vmem %s5, 64
    %v4430 = vld [vmem:[%s4429] sm:$0xff]
    %4431 = vrot.lane.b32.xlu0 %v2447, 109
    %v4432 = vpop.permute.xlu0 %4431
    %4433 = vrot.lane.b32.xlu0 %v2448, 109
    %v4434 = vpop.permute.xlu0 %4433
    %4435 = vrot.lane.b32.xlu0 %v2449, 109
    %v4436 = vpop.permute.xlu0 %4435
    %4437 = vrot.lane.b32.xlu0 %v2450, 109
    %v4438 = vpop.permute.xlu0 %4437
    %4439 = vrot.lane.b32.xlu0 %v2451, 109
    %v4440 = vpop.permute.xlu0 %4439
    %4441 = vrot.lane.b32.xlu0 %v2452, 109
    %v4442 = vpop.permute.xlu0 %4441
    %4443 = vrot.lane.b32.xlu0 %v2453, 109
    %v4444 = vpop.permute.xlu0 %4443
    %v4445 = vsel %vm2083, %v4432, %v4434
    %v4446 = vsel %vm2083, %v4434, %v4436
    %v4447 = vsel %vm2083, %v4436, %v4438
    %v4448 = vsel %vm2083, %v4438, %v4440
    %v4449 = vsel %vm2083, %v4440, %v4442
    %v4450 = vsel %vm2083, %v4442, %v4444
    %v4458 = vsel %vm88, %v4430, 0
    %4460 = vmatprep.subr.mxu0 0.0
    %4461 = vmatpush1.msra.mxu0 0.0
    %4462 = vmatprep.subr.mxu0 0.0
    %4463 = vmatpush1.msra.mxu0 0.0
    %4464 = vmatprep.subr.mxu0 0.0
    %4465 = vmatpush1.msra.mxu0 0.0
    %4466 = vmatprep.subr.mxu0 0.0
    %4467 = vmatpush1.msra.mxu0 0.0
    %4468 = vmatprep.subr.mxu0 0.0
    %4469 = vmatpush1.msra.mxu0 0.0
    %4470 = vmatprep.subr.mxu0 0.0
    %4471 = vmatpush1.msra.mxu0 0.0
    %4472 = vmatprep.subr.mxu0 0.0
    %4473 = vmatpush1.msra.mxu0 0.0
    %4474 = vmatprep.subr.mxu0 0.0
    %4475 = vmatpush1.msra.mxu0 0.0
    %4476 = vmatprep.subr.mxu0 0.0
    %4477 = vmatpush1.msra.mxu0 0.0
    %4478 = vmatprep.subr.mxu0 0.0
    %4479 = vmatpush1.msra.mxu0 0.0
    %4480 = vmatprep.subr.mxu0 0.0
    %4481 = vmatpush1.msra.mxu0 0.0
    %4482 = vmatprep.subr.mxu0 0.0
    %4483 = vmatpush1.msra.mxu0 0.0
    %4484 = vmatprep.subr.mxu0 0.0
    %4485 = vmatpush1.msra.mxu0 0.0
    %4486 = vmatprep.subr.mxu0 0.0
    %4487 = vmatpush1.msra.mxu0 0.0
    %4488 = vmatprep.subr.mxu0 0.0
    %4489 = vmatpush1.msra.mxu0 0.0
    %4490 = vmatprep.subr.mxu0 %v4446
    %4491 = vmatpush1.msra.mxu0 %v4445
    %4492 = vmatprep.subr.mxu0 0.0
    %4493 = vmatpush2.msra.mxu0 0.0
    %4494 = vmatprep.subr.mxu0 0.0
    %4495 = vmatpush2.msra.mxu0 0.0
    %4496 = vmatprep.subr.mxu0 0.0
    %4497 = vmatpush2.msra.mxu0 0.0
    %4498 = vmatprep.subr.mxu0 0.0
    %4499 = vmatpush2.msra.mxu0 0.0
    %4500 = vmatprep.subr.mxu0 0.0
    %4501 = vmatpush2.msra.mxu0 0.0
    %4502 = vmatprep.subr.mxu0 0.0
    %4503 = vmatpush2.msra.mxu0 0.0
    %4504 = vmatprep.subr.mxu0 0.0
    %4505 = vmatpush2.msra.mxu0 0.0
    %4506 = vmatprep.subr.mxu0 0.0
    %4507 = vmatpush2.msra.mxu0 0.0
    %4508 = vmatprep.subr.mxu0 0.0
    %4509 = vmatpush2.msra.mxu0 0.0
    %4510 = vmatprep.subr.mxu0 0.0
    %4511 = vmatpush2.msra.mxu0 0.0
    %4512 = vmatprep.subr.mxu0 0.0
    %4513 = vmatpush2.msra.mxu0 0.0
    %4514 = vmatprep.subr.mxu0 0.0
    %4515 = vmatpush2.msra.mxu0 0.0
    %4516 = vmatprep.subr.mxu0 0.0
    %4517 = vmatpush2.msra.mxu0 0.0
    %4518 = vmatprep.subr.mxu0 0.0
    %4519 = vmatpush2.msra.mxu0 0.0
    %4520 = vmatprep.subr.mxu0 0.0
    %4521 = vmatpush2.msra.mxu0 0.0
    %4522 = vmatprep.subr.mxu0 0.0
    %4523 = vmatpush2.msra.mxu0 0.0
    %4524 = vmatprep.mubr.f32.mxu0 0.0
    %4525 = vmatmul.mubr.f32.gmra.mxu0 %v4458
    %v4526 = vpop.f32.mrf.mxu0
    %v4527 = vadd.f32 0.0, %v4526
    %v4528 = vpop.f32.mrf.mxu0
    %v4529 = vadd.f32 0.0, %v4528
    %4530 = vdwg.mxu0
    %4531 = vmatprep.subr.mxu0 0.0
    %4532 = vmatpush1.msra.mxu0 0.0
    %4533 = vmatprep.subr.mxu0 0.0
    %4534 = vmatpush1.msra.mxu0 0.0
    %4535 = vmatprep.subr.mxu0 0.0
    %4536 = vmatpush1.msra.mxu0 0.0
    %4537 = vmatprep.subr.mxu0 0.0
    %4538 = vmatpush1.msra.mxu0 0.0
    %4539 = vmatprep.subr.mxu0 0.0
    %4540 = vmatpush1.msra.mxu0 0.0
    %4541 = vmatprep.subr.mxu0 0.0
    %4542 = vmatpush1.msra.mxu0 0.0
    %4543 = vmatprep.subr.mxu0 0.0
    %4544 = vmatpush1.msra.mxu0 0.0
    %4545 = vmatprep.subr.mxu0 0.0
    %4546 = vmatpush1.msra.mxu0 0.0
    %4547 = vmatprep.subr.mxu0 0.0
    %4548 = vmatpush1.msra.mxu0 0.0
    %4549 = vmatprep.subr.mxu0 0.0
    %4550 = vmatpush1.msra.mxu0 0.0
    %4551 = vmatprep.subr.mxu0 0.0
    %4552 = vmatpush1.msra.mxu0 0.0
    %4553 = vmatprep.subr.mxu0 0.0
    %4554 = vmatpush1.msra.mxu0 0.0
    %4555 = vmatprep.subr.mxu0 0.0
    %4556 = vmatpush1.msra.mxu0 0.0
    %4557 = vmatprep.subr.mxu0 0.0
    %4558 = vmatpush1.msra.mxu0 0.0
    %4559 = vmatprep.subr.mxu0 0.0
    %4560 = vmatpush1.msra.mxu0 0.0
    %4561 = vmatprep.subr.mxu0 %v4448
    %4562 = vmatpush1.msra.mxu0 %v4447
    %4563 = vmatprep.subr.mxu0 0.0
    %4564 = vmatpush2.msra.mxu0 0.0
    %4565 = vmatprep.subr.mxu0 0.0
    %4566 = vmatpush2.msra.mxu0 0.0
    %4567 = vmatprep.subr.mxu0 0.0
    %4568 = vmatpush2.msra.mxu0 0.0
    %4569 = vmatprep.subr.mxu0 0.0
    %4570 = vmatpush2.msra.mxu0 0.0
    %4571 = vmatprep.subr.mxu0 0.0
    %4572 = vmatpush2.msra.mxu0 0.0
    %4573 = vmatprep.subr.mxu0 0.0
    %4574 = vmatpush2.msra.mxu0 0.0
    %4575 = vmatprep.subr.mxu0 0.0
    %4576 = vmatpush2.msra.mxu0 0.0
    %4577 = vmatprep.subr.mxu0 0.0
    %4578 = vmatpush2.msra.mxu0 0.0
    %4579 = vmatprep.subr.mxu0 0.0
    %4580 = vmatpush2.msra.mxu0 0.0
    %4581 = vmatprep.subr.mxu0 0.0
    %4582 = vmatpush2.msra.mxu0 0.0
    %4583 = vmatprep.subr.mxu0 0.0
    %4584 = vmatpush2.msra.mxu0 0.0
    %4585 = vmatprep.subr.mxu0 0.0
    %4586 = vmatpush2.msra.mxu0 0.0
    %4587 = vmatprep.subr.mxu0 0.0
    %4588 = vmatpush2.msra.mxu0 0.0
    %4589 = vmatprep.subr.mxu0 0.0
    %4590 = vmatpush2.msra.mxu0 0.0
    %4591 = vmatprep.subr.mxu0 0.0
    %4592 = vmatpush2.msra.mxu0 0.0
    %4593 = vmatprep.subr.mxu0 0.0
    %4594 = vmatpush2.msra.mxu0 0.0
    %4595 = vmatprep.mubr.f32.mxu0 0.0
    %4596 = vmatmul.mubr.f32.gmra.mxu0 %v4458
    %v4597 = vpop.f32.mrf.mxu0
    %v4598 = vadd.f32 0.0, %v4597
    %v4599 = vpop.f32.mrf.mxu0
    %v4600 = vadd.f32 0.0, %v4599
    %4601 = vdwg.mxu0
    %4602 = vmatprep.subr.mxu0 0.0
    %4603 = vmatpush1.msra.mxu0 0.0
    %4604 = vmatprep.subr.mxu0 0.0
    %4605 = vmatpush1.msra.mxu0 0.0
    %4606 = vmatprep.subr.mxu0 0.0
    %4607 = vmatpush1.msra.mxu0 0.0
    %4608 = vmatprep.subr.mxu0 0.0
    %4609 = vmatpush1.msra.mxu0 0.0
    %4610 = vmatprep.subr.mxu0 0.0
    %4611 = vmatpush1.msra.mxu0 0.0
    %4612 = vmatprep.subr.mxu0 0.0
    %4613 = vmatpush1.msra.mxu0 0.0
    %4614 = vmatprep.subr.mxu0 0.0
    %4615 = vmatpush1.msra.mxu0 0.0
    %4616 = vmatprep.subr.mxu0 0.0
    %4617 = vmatpush1.msra.mxu0 0.0
    %4618 = vmatprep.subr.mxu0 0.0
    %4619 = vmatpush1.msra.mxu0 0.0
    %4620 = vmatprep.subr.mxu0 0.0
    %4621 = vmatpush1.msra.mxu0 0.0
    %4622 = vmatprep.subr.mxu0 0.0
    %4623 = vmatpush1.msra.mxu0 0.0
    %4624 = vmatprep.subr.mxu0 0.0
    %4625 = vmatpush1.msra.mxu0 0.0
    %4626 = vmatprep.subr.mxu0 0.0
    %4627 = vmatpush1.msra.mxu0 0.0
    %4628 = vmatprep.subr.mxu0 0.0
    %4629 = vmatpush1.msra.mxu0 0.0
    %4630 = vmatprep.subr.mxu0 0.0
    %4631 = vmatpush1.msra.mxu0 0.0
    %4632 = vmatprep.subr.mxu0 %v4450
    %4633 = vmatpush1.msra.mxu0 %v4449
    %4634 = vmatprep.subr.mxu0 0.0
    %4635 = vmatpush2.msra.mxu0 0.0
    %4636 = vmatprep.subr.mxu0 0.0
    %4637 = vmatpush2.msra.mxu0 0.0
    %4638 = vmatprep.subr.mxu0 0.0
    %4639 = vmatpush2.msra.mxu0 0.0
    %4640 = vmatprep.subr.mxu0 0.0
    %4641 = vmatpush2.msra.mxu0 0.0
    %4642 = vmatprep.subr.mxu0 0.0
    %4643 = vmatpush2.msra.mxu0 0.0
    %4644 = vmatprep.subr.mxu0 0.0
    %4645 = vmatpush2.msra.mxu0 0.0
    %4646 = vmatprep.subr.mxu0 0.0
    %4647 = vmatpush2.msra.mxu0 0.0
    %4648 = vmatprep.subr.mxu0 0.0
    %4649 = vmatpush2.msra.mxu0 0.0
    %4650 = vmatprep.subr.mxu0 0.0
    %4651 = vmatpush2.msra.mxu0 0.0
    %4652 = vmatprep.subr.mxu0 0.0
    %4653 = vmatpush2.msra.mxu0 0.0
    %4654 = vmatprep.subr.mxu0 0.0
    %4655 = vmatpush2.msra.mxu0 0.0
    %4656 = vmatprep.subr.mxu0 0.0
    %4657 = vmatpush2.msra.mxu0 0.0
    %4658 = vmatprep.subr.mxu0 0.0
    %4659 = vmatpush2.msra.mxu0 0.0
    %4660 = vmatprep.subr.mxu0 0.0
    %4661 = vmatpush2.msra.mxu0 0.0
    %4662 = vmatprep.subr.mxu0 0.0
    %4663 = vmatpush2.msra.mxu0 0.0
    %4664 = vmatprep.subr.mxu0 0.0
    %4665 = vmatpush2.msra.mxu0 0.0
    %4666 = vmatprep.mubr.f32.mxu0 0.0
    %4667 = vmatmul.mubr.f32.gmra.mxu0 %v4458
    %v4668 = vpop.f32.mrf.mxu0
    %v4669 = vadd.f32 0.0, %v4668
    %v4670 = vpop.f32.mrf.mxu0
    %v4671 = vadd.f32 0.0, %v4670
    %4672 = vdwg.mxu0
    %v4673 = vadd.f32 %v4423, %v4527
    %v4674 = vadd.f32 %v4424, %v4529
    %v4675 = vadd.f32 %v4425, %v4598
    %v4676 = vadd.f32 %v4426, %v4600
    %v4677 = vadd.f32 %v4427, %v4669
    %v4678 = vadd.f32 %v4428, %v4671
    %v4679 = vld [vmem:[%s6] sm:$0xff]
    %v4680 = vld [vmem:[%s7] sm:$0xff]
    %4682 = vset.pattern.permute.xlu0 19
    %4683 = vperm.xlu0 %4682, %v4673
    %v4684 = vpop.permute.xlu0 %4683
    %v4686 = vsub.f32 %v4673, %v4684
    %v4687 = vsub.f32 %v4674, %v4684
    %v4688 = vsub.f32 %v4675, %v4684
    %v4689 = vsub.f32 %v4676, %v4684
    %v4690 = vsub.f32 %v4677, %v4684
    %v4691 = vsub.f32 %v4678, %v4684
    %v4692 = vmul.f32 %v4686, %v2335
    %v4693 = vmul.f32 %v4687, %v2339
    %v4694 = vmul.f32 %v4688, %v2343
    %v4695 = vmul.f32 %v4689, %v2347
    %v4696 = vmul.f32 %v4690, %v2351
    %v4697 = vmul.f32 %v4691, %v2355
    %v4698 = vadd.f32 %v4692, %v4693
    %v4699 = vadd.f32 %v4698, %v4694
    %v4700 = vadd.f32 %v4699, %v4695
    %v4701 = vadd.f32 %v4700, %v4696
    %v4702 = vadd.f32 %v4701, %v4697
    %4703 = vadd.xlane.f32.xlu0 %v4702
    %v4704 = vpop.xlane.xlu0 %4703
    %v4705 = vmul.f32 %v4692, %v4692
    %v4706 = vmul.f32 %v4693, %v4693
    %v4707 = vmul.f32 %v4694, %v4694
    %v4708 = vmul.f32 %v4695, %v4695
    %v4709 = vmul.f32 %v4696, %v4696
    %v4710 = vmul.f32 %v4697, %v4697
    %v4711 = vadd.f32 %v4705, %v4706
    %v4712 = vadd.f32 %v4711, %v4707
    %v4713 = vadd.f32 %v4712, %v4708
    %v4714 = vadd.f32 %v4713, %v4709
    %v4715 = vadd.f32 %v4714, %v4710
    %4716 = vadd.xlane.f32.xlu0 %v4715
    %v4717 = vpop.xlane.xlu0 %4716
    %v4718 = vmul.f32 %v4704, 0.001953125
    %v4719 = vmul.f32 %v4717, 0.001953125
    %v4720 = vmul.f32 %v4718, %v4718
    %v4721 = vsub.f32 %v4719, %v4720
    %v4722 = vmax.f32 %v4721, 0.0
    %v4723 = vadd.f32 %v4722, 1e-05
    %v4724 = vrsqrt.pop %v4723
    %v4725 = vmul.f32 %v4679, %v4724
    %v4726 = vmul.f32 %v4718, %v4725
    %v4727 = vsub.f32 %v4680, %v4726
    %4729 = vset.pattern.permute.xlu0 0
    %4730 = vperm.xlu0 %4729, %v4725
    %v4731 = vpop.permute.xlu0 %4730
    %v4733 = vmul.f32 %v4686, %v4731
    %v4734 = vmul.f32 %v4687, %v4731
    %v4735 = vmul.f32 %v4688, %v4731
    %v4736 = vmul.f32 %v4689, %v4731
    %v4737 = vmul.f32 %v4690, %v4731
    %v4738 = vmul.f32 %v4691, %v4731
    %4740 = vset.pattern.permute.xlu0 0
    %4741 = vperm.xlu0 %4740, %v4727
    %v4742 = vpop.permute.xlu0 %4741
    %v4744 = vadd.f32 %v4733, %v4742
    %v4745 = vadd.f32 %v4734, %v4742
    %v4746 = vadd.f32 %v4735, %v4742
    %v4747 = vadd.f32 %v4736, %v4742
    %v4748 = vadd.f32 %v4737, %v4742
    %v4749 = vadd.f32 %v4738, %v4742
    %v4750 = vadd.f32 %v4744, %v1295
    %v4751 = vadd.f32 %v4745, %v1296
    %v4752 = vadd.f32 %v4746, %v1297
    %v4753 = vadd.f32 %v4747, %v1298
    %v4754 = vadd.f32 %v4748, %v1299
    %v4755 = vadd.f32 %v4749, %v1300
    %v4756 = vmax.f32 %v4750, 0.0
    %v4757 = vmax.f32 %v4751, 0.0
    %v4758 = vmax.f32 %v4752, 0.0
    %v4759 = vmax.f32 %v4753, 0.0
    %v4760 = vmax.f32 %v4754, 0.0
    %v4761 = vmax.f32 %v4755, 0.0
    %4762 = vst [vmem:[#allocation3] sm:$0xff] %v4756
    %4763 = vst [vmem:[#allocation3 + $0x8] sm:$0xff] %v4757
    %4764 = vst [vmem:[#allocation3 + $0x10] sm:$0xff] %v4758
    %4765 = vst [vmem:[#allocation3 + $0x18] sm:$0xff] %v4759
    %4766 = vst [vmem:[#allocation3 + $0x20] sm:$0xff] %v4760
    %4767 = vst [vmem:[#allocation3 + $0x28] sm:$0xff] %v4761
    // Predicated region
    $region42: #{tpu_custom_call.1} parent=1 // pred_check
      _
    $region43: #{tpu_custom_call.1} parent=1 // pred_check_branch
      %4769 = sbr.rel (0) target = $region45
    $region44: #{tpu_custom_call.1} parent=1 // pred_region
      %s4771 = ssub.s32 768, 768
      %4772 = vsyncadd [#allocation4], %s4771
      %s4774 = sshll.u32 [#allocation3], 4
      %s4775 = int_to_ptr.vmem [resolvable:$true] %s4774
      %4777 = dma.vmem_to_hbm [thread:$0]  %s4775, 768, %s10, [#allocation4]
    $region45: #{tpu_custom_call.1} parent=1 // pred_fallthru
      _
    // Predicated region
    $region46: #{tpu_custom_call.1} parent=1 // pred_check
      _
    $region47: #{tpu_custom_call.1} parent=1 // pred_check_branch
      %4779 = sbr.rel (0) target = $region49
    $region48: #{tpu_custom_call.1} parent=1 // pred_region
      %4780 = dma.done [#allocation4], 768
    $region49: #{tpu_custom_call.1} parent=1 // pred_fallthru
      _
    %4781 = vsyncpa [#allocation4], 1

</llo_original>
